<compile_context>
chip_gen: v7x
topology: tpu7x:2x2x1
jax: 0.10.0
libtpu: 0.0.40
codegen_flags: <defaults>
</compile_context>

<pallas_src>
import functools

import jax
import jax.numpy as jnp
from jax.experimental import pallas as pl
from jax.experimental.pallas import tpu as pltpu


# -----------------------------------------------------------------------------
# Fused kernel: 3 LSTM encoders (block-structured) + MLP head, one invocation.
# -----------------------------------------------------------------------------
def _text_model_kernel(x_ref, wih_ref, whh_ref, b_ref, len_ref,
                       w1_ref, b1_ref, w2_ref, b2_ref, o_ref,
                       *, T, B, enc_offsets):
    NH = whh_ref.shape[-1]                                   # sum of hidden sizes

    # ---- Hoisted input projection (bias folded in), all timesteps & encoders.
    x_all = x_ref[...]                                       # (T*B, N*E)
    xproj = [
        jnp.dot(x_all, wih_ref[g], preferred_element_type=jnp.float32) + b_ref[g]
        for g in range(4)                                    # gate order: i, f, g, o
    ]                                                        # each (T*B, NH)
    whh = [whh_ref[g] for g in range(4)]                     # each (NH, NH), block-diag

    # ---- pack_padded_sequence mask: per-row / per-encoder-column-block lengths,
    #      built once from SMEM scalar reads (hoisted out of the time loop).
    row_ids = jax.lax.broadcasted_iota(jnp.int32, (B, NH), 0)
    col_ids = jax.lax.broadcasted_iota(jnp.int32, (B, NH), 1)
    lens_b = jnp.zeros((B, NH), jnp.int32)
    for e, (c0, c1) in enumerate(enc_offsets):
        in_cols = (col_ids >= c0) & (col_ids < c1)
        for b in range(B):
            lens_b = jnp.where(in_cols & (row_ids == b), len_ref[e * B + b], lens_b)

    # ---- Recurrence: fully unrolled; one (B, NH)@(NH, NH) matmul per gate per step.
    h = jnp.zeros((B, NH), jnp.float32)
    c = jnp.zeros((B, NH), jnp.float32)
    for t in range(T):
        r0, r1 = t * B, (t + 1) * B
        pre = [xproj[g][r0:r1, :]
               + jnp.dot(h, whh[g], preferred_element_type=jnp.float32)
               for g in range(4)]
        i_g = jax.nn.sigmoid(pre[0])
        f_g = jax.nn.sigmoid(pre[1])
        g_g = jnp.tanh(pre[2])
        o_g = jax.nn.sigmoid(pre[3])
        c_new = f_g * c + i_g * g_g
        h_new = o_g * jnp.tanh(c_new)
        valid = t < lens_b                                   # freeze state past length
        c = jnp.where(valid, c_new, c)
        h = jnp.where(valid, h_new, h)

    # ---- Fused MLP head on the (B, sum(H)) concatenated hidden (stays in VMEM).
    z = jnp.dot(h, w1_ref[...], preferred_element_type=jnp.float32) + b1_ref[...]
    z = jnp.maximum(z, 0.0)
    o_ref[...] = (jnp.dot(z, w2_ref[...], preferred_element_type=jnp.float32)
                  + b2_ref[...]).astype(o_ref.dtype)


def fused_text_model(x_bd, wih4, whh4, b4, lens, w1, b1, w2, b2, *, T, B, enc_offsets):
    """x_bd: (T*B, N*E) time-major concatenated embeddings; wih4: (4, N*E, sumH);
    whh4: (4, sumH, sumH) block-diag; b4: (4, 1, sumH); lens: (N*B,) int32 (SMEM);
    w1/b1/w2/b2: MLP head.  Returns (B, n_out) f32."""
    n_out = w2.shape[1]
    kernel = functools.partial(_text_model_kernel, T=T, B=B, enc_offsets=enc_offsets)
    full = lambda a: pl.BlockSpec(a.shape, lambda: (0,) * a.ndim)
    return pl.pallas_call(
        kernel,
        out_shape=jax.ShapeDtypeStruct((B, n_out), jnp.float32),
        grid=(),
        in_specs=[
            full(x_bd), full(wih4), full(whh4), full(b4),
            pl.BlockSpec(memory_space=pltpu.MemorySpace.SMEM),   # lengths -> SMEM
            full(w1), full(b1), full(w2), full(b2),
        ],
        out_specs=pl.BlockSpec((B, n_out), lambda: (0, 0)),
    )(x_bd, wih4, whh4, b4, lens, w1, b1, w2, b2)


# -----------------------------------------------------------------------------
# Parameter construction (random init, PyTorch-style layout folded into fused form).
# -----------------------------------------------------------------------------
def init_params(key, vocab_size, emb_dim, rnn_sizes, fc_hidden, n_out):
    params = {}
    k_emb, key = jax.random.split(key)
    emb = 0.1 * jax.random.normal(k_emb, (vocab_size, emb_dim), jnp.float32)
    emb = emb.at[0].set(0.0)                                  # padding_idx=0
    params["embedding"] = emb

    names = list(rnn_sizes.keys())
    Hs = [rnn_sizes[n] for n in names]
    N, sumH = len(names), sum(Hs)

    # Per-gate fused weights (gate order i, f, g, o as in PyTorch):
    #   w_ih4[g]: (N*E, sumH) — encoder e's (E, H_e) block at rows [e*E,(e+1)*E),
    #             cols [off_e, off_e+H_e).
    #   w_hh4[g]: (sumH, sumH) block-diagonal.
    #   b4[g]   : (1, sumH)  (b_ih + b_hh folded).
    wih4 = jnp.zeros((4, N * emb_dim, sumH), jnp.float32)
    whh4 = jnp.zeros((4, sumH, sumH), jnp.float32)
    b4 = jnp.zeros((4, 1, sumH), jnp.float32)
    offsets, off = [], 0
    for e, name in enumerate(names):
        H = Hs[e]
        k1, k2, k3, k4, key = jax.random.split(key, 5)
        scale = 1.0 / jnp.sqrt(H)
        w_ih = scale * jax.random.normal(k1, (4, emb_dim, H), jnp.float32)
        w_hh = scale * jax.random.normal(k2, (4, H, H), jnp.float32)
        bias = scale * (jax.random.normal(k3, (4, 1, H), jnp.float32)
                        + jax.random.normal(k4, (4, 1, H), jnp.float32))
        wih4 = wih4.at[:, e * emb_dim:(e + 1) * emb_dim, off:off + H].set(w_ih)
        whh4 = whh4.at[:, off:off + H, off:off + H].set(w_hh)
        b4 = b4.at[:, :, off:off + H].set(bias)
        offsets.append((off, off + H))
        off += H
    params["fused"] = {"names": tuple(names), "w_ih4": wih4, "w_hh4": whh4,
                       "b4": b4, "offsets": tuple(offsets)}

    in_fc = sumH
    k1, k2, k3, k4, key = jax.random.split(key, 5)
    params["fc_hidden"] = {
        "w": (1.0 / jnp.sqrt(in_fc)) * jax.random.normal(k1, (in_fc, fc_hidden), jnp.float32),
        "b": (1.0 / jnp.sqrt(in_fc)) * jax.random.normal(k2, (1, fc_hidden), jnp.float32),
    }
    params["fc_output"] = {
        "w": (1.0 / jnp.sqrt(fc_hidden)) * jax.random.normal(k3, (fc_hidden, n_out), jnp.float32),
        "b": (1.0 / jnp.sqrt(fc_hidden)) * jax.random.normal(k4, (1, n_out), jnp.float32),
    }
    return params


# -----------------------------------------------------------------------------
# TextModel forward (glue: embedding gather, transpose, concat along feature axis).
# -----------------------------------------------------------------------------
def text_model_forward(params, x):
    """x: dict key -> {'seq': (B, T) int32 token ids, 'lengths': (B,) int32}."""
    fused = params["fused"]
    names = fused["names"]
    assert tuple(x.keys()) == names, "encoder key order must match init order"
    emb_tab = params["embedding"]
    E = emb_tab.shape[1]

    embs, lens = [], []
    for name in names:
        seq = x[name]["seq"]                                  # (B, T)
        B, T = seq.shape
        e = jnp.take(emb_tab, seq, axis=0)                    # (B, T, E) gather (glue)
        embs.append(jnp.transpose(e, (1, 0, 2)))              # (T, B, E) time-major
        lens.append(x[name]["lengths"].astype(jnp.int32))     # (B,)
    x_bd = jnp.concatenate(embs, axis=-1).reshape(T * B, len(names) * E)
    lens_flat = jnp.concatenate(lens, axis=0)                 # (N*B,) encoder-major

    return fused_text_model(
        x_bd, fused["w_ih4"], fused["w_hh4"], fused["b4"], lens_flat,
        params["fc_hidden"]["w"], params["fc_hidden"]["b"],
        params["fc_output"]["w"], params["fc_output"]["b"],
        T=T, B=B, enc_offsets=fused["offsets"])


if __name__ == "__main__":
    # Small config consistent with the module's __init__:
    # config['rnn_type']='lstm', config['bidir']=False.
    B, T = 2, 8
    vocab_size = 50
    emb_dim = 32                       # config['word_embedding_size']
    rnn_sizes = {"obs": 32, "description": 32, "inventory": 32}
    fc_hidden = 32                     # config['fc_hidden']
    n_out = 5                          # action_space.n

    key = jax.random.PRNGKey(0)
    k_params, k_tok, k_len = jax.random.split(key, 3)
    params = init_params(k_params, vocab_size, emb_dim, rnn_sizes, fc_hidden, n_out)

    # Deterministic example inputs: padded token-id sequences + lengths per key.
    x = {}
    tok_keys = jax.random.split(k_tok, len(rnn_sizes))
    len_keys = jax.random.split(k_len, len(rnn_sizes))
    for i, name in enumerate(rnn_sizes.keys()):
        ids = jax.random.randint(tok_keys[i], (B, T), 1, vocab_size, dtype=jnp.int32)
        lengths = jax.random.randint(len_keys[i], (B,), 3, T + 1, dtype=jnp.int32)
        pos = jnp.arange(T)[None, :]
        ids = jnp.where(pos < lengths[:, None], ids, 0)       # pad with padding_idx=0
        x[name] = {"seq": ids, "lengths": lengths}

    out = text_model_forward(params, x)
    out = jax.block_until_ready(out)
    assert out.shape == (B, n_out), out.shape
    print("KERNEL_OK")
</pallas_src>

<mosaic_0001>
module attributes {stable_mosaic.version = 11 : i64} {
  func.func @_text_model_kernel(%arg0: memref<16x96xf32, #tpu.memory_space<vmem>>, %arg1: memref<4x96x96xf32, #tpu.memory_space<vmem>>, %arg2: memref<4x96x96xf32, #tpu.memory_space<vmem>>, %arg3: memref<4x1x96xf32, #tpu.memory_space<vmem>>, %arg4: memref<6xi32, #tpu.memory_space<smem>>, %arg5: memref<96x32xf32, #tpu.memory_space<vmem>>, %arg6: memref<1x32xf32, #tpu.memory_space<vmem>>, %arg7: memref<32x5xf32, #tpu.memory_space<vmem>>, %arg8: memref<1x5xf32, #tpu.memory_space<vmem>>, %arg9: memref<2x5xf32, #tpu.memory_space<vmem>>) attributes {dimension_semantics = [], scalar_prefetch = 0 : i64, scratch_operands = 0 : i64, tpu.core_type = #tpu.core_type<tc>} {
    %c0 = arith.constant 0 : index
    %c0_0 = arith.constant 0 : index
    %0 = vector.load %arg0[%c0, %c0_0] : memref<16x96xf32, #tpu.memory_space<vmem>>, vector<16x96xf32>
    %c0_1 = arith.constant 0 : index
    %c0_2 = arith.constant 0 : index
    %c0_3 = arith.constant 0 : index
    %1 = vector.load %arg1[%c0_1, %c0_2, %c0_3] : memref<4x96x96xf32, #tpu.memory_space<vmem>>, vector<1x96x96xf32>
    %2 = vector.shape_cast %1 : vector<1x96x96xf32> to vector<96x96xf32>
    %cst = arith.constant dense<0.000000e+00> : vector<16x96xf32>
    %3 = tpu.matmul %0, %2, %cst {dimension_numbers = #tpu.dot_dimension_numbers<[1], [0], [0], [1], [0, 0, 1, 1], [], []>} : vector<16x96xf32>, vector<96x96xf32>, vector<16x96xf32> -> vector<16x96xf32>
    %c0_4 = arith.constant 0 : index
    %c0_5 = arith.constant 0 : index
    %c0_6 = arith.constant 0 : index
    %4 = vector.load %arg3[%c0_4, %c0_5, %c0_6] : memref<4x1x96xf32, #tpu.memory_space<vmem>>, vector<1x1x96xf32>
    %5 = vector.shape_cast %4 : vector<1x1x96xf32> to vector<1x96xf32>
    %6 = vector.broadcast %5 : vector<1x96xf32> to vector<16x96xf32>
    %7 = arith.addf %3, %6 : vector<16x96xf32>
    %c1 = arith.constant 1 : index
    %c0_7 = arith.constant 0 : index
    %c0_8 = arith.constant 0 : index
    %8 = vector.load %arg1[%c1, %c0_7, %c0_8] : memref<4x96x96xf32, #tpu.memory_space<vmem>>, vector<1x96x96xf32>
    %9 = vector.shape_cast %8 : vector<1x96x96xf32> to vector<96x96xf32>
    %cst_9 = arith.constant dense<0.000000e+00> : vector<16x96xf32>
    %10 = tpu.matmul %0, %9, %cst_9 {dimension_numbers = #tpu.dot_dimension_numbers<[1], [0], [0], [1], [0, 0, 1, 1], [], []>} : vector<16x96xf32>, vector<96x96xf32>, vector<16x96xf32> -> vector<16x96xf32>
    %c1_10 = arith.constant 1 : index
    %c0_11 = arith.constant 0 : index
    %c0_12 = arith.constant 0 : index
    %11 = vector.load %arg3[%c1_10, %c0_11, %c0_12] : memref<4x1x96xf32, #tpu.memory_space<vmem>>, vector<1x1x96xf32>
    %12 = vector.shape_cast %11 : vector<1x1x96xf32> to vector<1x96xf32>
    %13 = vector.broadcast %12 : vector<1x96xf32> to vector<16x96xf32>
    %14 = arith.addf %10, %13 : vector<16x96xf32>
    %c2 = arith.constant 2 : index
    %c0_13 = arith.constant 0 : index
    %c0_14 = arith.constant 0 : index
    %15 = vector.load %arg1[%c2, %c0_13, %c0_14] : memref<4x96x96xf32, #tpu.memory_space<vmem>>, vector<1x96x96xf32>
    %16 = vector.shape_cast %15 : vector<1x96x96xf32> to vector<96x96xf32>
    %cst_15 = arith.constant dense<0.000000e+00> : vector<16x96xf32>
    %17 = tpu.matmul %0, %16, %cst_15 {dimension_numbers = #tpu.dot_dimension_numbers<[1], [0], [0], [1], [0, 0, 1, 1], [], []>} : vector<16x96xf32>, vector<96x96xf32>, vector<16x96xf32> -> vector<16x96xf32>
    %c2_16 = arith.constant 2 : index
    %c0_17 = arith.constant 0 : index
    %c0_18 = arith.constant 0 : index
    %18 = vector.load %arg3[%c2_16, %c0_17, %c0_18] : memref<4x1x96xf32, #tpu.memory_space<vmem>>, vector<1x1x96xf32>
    %19 = vector.shape_cast %18 : vector<1x1x96xf32> to vector<1x96xf32>
    %20 = vector.broadcast %19 : vector<1x96xf32> to vector<16x96xf32>
    %21 = arith.addf %17, %20 : vector<16x96xf32>
    %c3 = arith.constant 3 : index
    %c0_19 = arith.constant 0 : index
    %c0_20 = arith.constant 0 : index
    %22 = vector.load %arg1[%c3, %c0_19, %c0_20] : memref<4x96x96xf32, #tpu.memory_space<vmem>>, vector<1x96x96xf32>
    %23 = vector.shape_cast %22 : vector<1x96x96xf32> to vector<96x96xf32>
    %cst_21 = arith.constant dense<0.000000e+00> : vector<16x96xf32>
    %24 = tpu.matmul %0, %23, %cst_21 {dimension_numbers = #tpu.dot_dimension_numbers<[1], [0], [0], [1], [0, 0, 1, 1], [], []>} : vector<16x96xf32>, vector<96x96xf32>, vector<16x96xf32> -> vector<16x96xf32>
    %c3_22 = arith.constant 3 : index
    %c0_23 = arith.constant 0 : index
    %c0_24 = arith.constant 0 : index
    %25 = vector.load %arg3[%c3_22, %c0_23, %c0_24] : memref<4x1x96xf32, #tpu.memory_space<vmem>>, vector<1x1x96xf32>
    %26 = vector.shape_cast %25 : vector<1x1x96xf32> to vector<1x96xf32>
    %27 = vector.broadcast %26 : vector<1x96xf32> to vector<16x96xf32>
    %28 = arith.addf %24, %27 : vector<16x96xf32>
    %c0_25 = arith.constant 0 : index
    %c0_26 = arith.constant 0 : index
    %c0_27 = arith.constant 0 : index
    %29 = vector.load %arg2[%c0_25, %c0_26, %c0_27] : memref<4x96x96xf32, #tpu.memory_space<vmem>>, vector<1x96x96xf32>
    %30 = vector.shape_cast %29 : vector<1x96x96xf32> to vector<96x96xf32>
    %c1_28 = arith.constant 1 : index
    %c0_29 = arith.constant 0 : index
    %c0_30 = arith.constant 0 : index
    %31 = vector.load %arg2[%c1_28, %c0_29, %c0_30] : memref<4x96x96xf32, #tpu.memory_space<vmem>>, vector<1x96x96xf32>
    %32 = vector.shape_cast %31 : vector<1x96x96xf32> to vector<96x96xf32>
    %c2_31 = arith.constant 2 : index
    %c0_32 = arith.constant 0 : index
    %c0_33 = arith.constant 0 : index
    %33 = vector.load %arg2[%c2_31, %c0_32, %c0_33] : memref<4x96x96xf32, #tpu.memory_space<vmem>>, vector<1x96x96xf32>
    %34 = vector.shape_cast %33 : vector<1x96x96xf32> to vector<96x96xf32>
    %c3_34 = arith.constant 3 : index
    %c0_35 = arith.constant 0 : index
    %c0_36 = arith.constant 0 : index
    %35 = vector.load %arg2[%c3_34, %c0_35, %c0_36] : memref<4x96x96xf32, #tpu.memory_space<vmem>>, vector<1x96x96xf32>
    %36 = vector.shape_cast %35 : vector<1x96x96xf32> to vector<96x96xf32>
    %37 = tpu.iota {dimensions = array<i32: 0>} : vector<2x96xi32>
    %38 = tpu.iota {dimensions = array<i32: 1>} : vector<2x96xi32>
    %c0_i32 = arith.constant 0 : i32
    %39 = vector.broadcast %c0_i32 : i32 to vector<2x96xi32>
    %c0_i32_37 = arith.constant 0 : i32
    %40 = vector.broadcast %c0_i32_37 : i32 to vector<2x96xi32>
    %41 = arith.cmpi sge, %38, %40 : vector<2x96xi32>
    %c32_i32 = arith.constant 32 : i32
    %42 = vector.broadcast %c32_i32 : i32 to vector<2x96xi32>
    %43 = arith.cmpi slt, %38, %42 : vector<2x96xi32>
    %44 = arith.andi %41, %43 : vector<2x96xi1>
    %c0_i32_38 = arith.constant 0 : i32
    %45 = vector.broadcast %c0_i32_38 : i32 to vector<2x96xi32>
    %46 = arith.cmpi eq, %37, %45 : vector<2x96xi32>
    %47 = arith.andi %44, %46 : vector<2x96xi1>
    %c0_39 = arith.constant 0 : index
    %48 = memref.load %arg4[%c0_39] : memref<6xi32, #tpu.memory_space<smem>>
    %49 = vector.broadcast %48 : i32 to vector<2x96xi32>
    %50 = arith.select %47, %49, %39 : vector<2x96xi1>, vector<2x96xi32>
    %c1_i32 = arith.constant 1 : i32
    %51 = vector.broadcast %c1_i32 : i32 to vector<2x96xi32>
    %52 = arith.cmpi eq, %37, %51 : vector<2x96xi32>
    %53 = arith.andi %44, %52 : vector<2x96xi1>
    %c1_40 = arith.constant 1 : index
    %54 = memref.load %arg4[%c1_40] : memref<6xi32, #tpu.memory_space<smem>>
    %55 = vector.broadcast %54 : i32 to vector<2x96xi32>
    %56 = arith.select %53, %55, %50 : vector<2x96xi1>, vector<2x96xi32>
    %c32_i32_41 = arith.constant 32 : i32
    %57 = vector.broadcast %c32_i32_41 : i32 to vector<2x96xi32>
    %58 = arith.cmpi sge, %38, %57 : vector<2x96xi32>
    %c64_i32 = arith.constant 64 : i32
    %59 = vector.broadcast %c64_i32 : i32 to vector<2x96xi32>
    %60 = arith.cmpi slt, %38, %59 : vector<2x96xi32>
    %61 = arith.andi %58, %60 : vector<2x96xi1>
    %c0_i32_42 = arith.constant 0 : i32
    %62 = vector.broadcast %c0_i32_42 : i32 to vector<2x96xi32>
    %63 = arith.cmpi eq, %37, %62 : vector<2x96xi32>
    %64 = arith.andi %61, %63 : vector<2x96xi1>
    %c2_43 = arith.constant 2 : index
    %65 = memref.load %arg4[%c2_43] : memref<6xi32, #tpu.memory_space<smem>>
    %66 = vector.broadcast %65 : i32 to vector<2x96xi32>
    %67 = arith.select %64, %66, %56 : vector<2x96xi1>, vector<2x96xi32>
    %c1_i32_44 = arith.constant 1 : i32
    %68 = vector.broadcast %c1_i32_44 : i32 to vector<2x96xi32>
    %69 = arith.cmpi eq, %37, %68 : vector<2x96xi32>
    %70 = arith.andi %61, %69 : vector<2x96xi1>
    %c3_45 = arith.constant 3 : index
    %71 = memref.load %arg4[%c3_45] : memref<6xi32, #tpu.memory_space<smem>>
    %72 = vector.broadcast %71 : i32 to vector<2x96xi32>
    %73 = arith.select %70, %72, %67 : vector<2x96xi1>, vector<2x96xi32>
    %c64_i32_46 = arith.constant 64 : i32
    %74 = vector.broadcast %c64_i32_46 : i32 to vector<2x96xi32>
    %75 = arith.cmpi sge, %38, %74 : vector<2x96xi32>
    %c96_i32 = arith.constant 96 : i32
    %76 = vector.broadcast %c96_i32 : i32 to vector<2x96xi32>
    %77 = arith.cmpi slt, %38, %76 : vector<2x96xi32>
    %78 = arith.andi %75, %77 : vector<2x96xi1>
    %c0_i32_47 = arith.constant 0 : i32
    %79 = vector.broadcast %c0_i32_47 : i32 to vector<2x96xi32>
    %80 = arith.cmpi eq, %37, %79 : vector<2x96xi32>
    %81 = arith.andi %78, %80 : vector<2x96xi1>
    %c4 = arith.constant 4 : index
    %82 = memref.load %arg4[%c4] : memref<6xi32, #tpu.memory_space<smem>>
    %83 = vector.broadcast %82 : i32 to vector<2x96xi32>
    %84 = arith.select %81, %83, %73 : vector<2x96xi1>, vector<2x96xi32>
    %c1_i32_48 = arith.constant 1 : i32
    %85 = vector.broadcast %c1_i32_48 : i32 to vector<2x96xi32>
    %86 = arith.cmpi eq, %37, %85 : vector<2x96xi32>
    %87 = arith.andi %78, %86 : vector<2x96xi1>
    %c5 = arith.constant 5 : index
    %88 = memref.load %arg4[%c5] : memref<6xi32, #tpu.memory_space<smem>>
    %89 = vector.broadcast %88 : i32 to vector<2x96xi32>
    %90 = arith.select %87, %89, %84 : vector<2x96xi1>, vector<2x96xi32>
    %cst_49 = arith.constant 0.000000e+00 : f32
    %91 = vector.broadcast %cst_49 : f32 to vector<2x96xf32>
    %cst_50 = arith.constant 0.000000e+00 : f32
    %92 = vector.broadcast %cst_50 : f32 to vector<2x96xf32>
    %93 = vector.extract_strided_slice %7 {offsets = [0, 0], sizes = [2, 96], strides = [1, 1]} : vector<16x96xf32> to vector<2x96xf32>
    %cst_51 = arith.constant dense<0.000000e+00> : vector<2x96xf32>
    %94 = tpu.matmul %91, %30, %cst_51 {dimension_numbers = #tpu.dot_dimension_numbers<[1], [0], [0], [1], [0, 0, 1, 1], [], []>} : vector<2x96xf32>, vector<96x96xf32>, vector<2x96xf32> -> vector<2x96xf32>
    %95 = arith.addf %93, %94 : vector<2x96xf32>
    %96 = vector.extract_strided_slice %14 {offsets = [0, 0], sizes = [2, 96], strides = [1, 1]} : vector<16x96xf32> to vector<2x96xf32>
    %cst_52 = arith.constant dense<0.000000e+00> : vector<2x96xf32>
    %97 = tpu.matmul %91, %32, %cst_52 {dimension_numbers = #tpu.dot_dimension_numbers<[1], [0], [0], [1], [0, 0, 1, 1], [], []>} : vector<2x96xf32>, vector<96x96xf32>, vector<2x96xf32> -> vector<2x96xf32>
    %98 = arith.addf %96, %97 : vector<2x96xf32>
    %99 = vector.extract_strided_slice %21 {offsets = [0, 0], sizes = [2, 96], strides = [1, 1]} : vector<16x96xf32> to vector<2x96xf32>
    %cst_53 = arith.constant dense<0.000000e+00> : vector<2x96xf32>
    %100 = tpu.matmul %91, %34, %cst_53 {dimension_numbers = #tpu.dot_dimension_numbers<[1], [0], [0], [1], [0, 0, 1, 1], [], []>} : vector<2x96xf32>, vector<96x96xf32>, vector<2x96xf32> -> vector<2x96xf32>
    %101 = arith.addf %99, %100 : vector<2x96xf32>
    %102 = vector.extract_strided_slice %28 {offsets = [0, 0], sizes = [2, 96], strides = [1, 1]} : vector<16x96xf32> to vector<2x96xf32>
    %cst_54 = arith.constant dense<0.000000e+00> : vector<2x96xf32>
    %103 = tpu.matmul %91, %36, %cst_54 {dimension_numbers = #tpu.dot_dimension_numbers<[1], [0], [0], [1], [0, 0, 1, 1], [], []>} : vector<2x96xf32>, vector<96x96xf32>, vector<2x96xf32> -> vector<2x96xf32>
    %104 = arith.addf %102, %103 : vector<2x96xf32>
    %105 = arith.negf %95 : vector<2x96xf32>
    %106 = math.exp %105 : vector<2x96xf32>
    %cst_55 = arith.constant 1.000000e+00 : f32
    %107 = vector.broadcast %cst_55 : f32 to vector<2x96xf32>
    %108 = arith.addf %107, %106 : vector<2x96xf32>
    %109 = arith.divf %107, %108 : vector<2x96xf32>
    %110 = arith.negf %98 : vector<2x96xf32>
    %111 = math.exp %110 : vector<2x96xf32>
    %cst_56 = arith.constant 1.000000e+00 : f32
    %112 = vector.broadcast %cst_56 : f32 to vector<2x96xf32>
    %113 = arith.addf %112, %111 : vector<2x96xf32>
    %114 = arith.divf %112, %113 : vector<2x96xf32>
    %115 = math.tanh %101 : vector<2x96xf32>
    %116 = arith.negf %104 : vector<2x96xf32>
    %117 = math.exp %116 : vector<2x96xf32>
    %cst_57 = arith.constant 1.000000e+00 : f32
    %118 = vector.broadcast %cst_57 : f32 to vector<2x96xf32>
    %119 = arith.addf %118, %117 : vector<2x96xf32>
    %120 = arith.divf %118, %119 : vector<2x96xf32>
    %121 = arith.mulf %114, %92 : vector<2x96xf32>
    %122 = arith.mulf %109, %115 : vector<2x96xf32>
    %123 = arith.addf %121, %122 : vector<2x96xf32>
    %124 = math.tanh %123 : vector<2x96xf32>
    %125 = arith.mulf %120, %124 : vector<2x96xf32>
    %c0_i32_58 = arith.constant 0 : i32
    %126 = vector.broadcast %c0_i32_58 : i32 to vector<2x96xi32>
    %127 = arith.cmpi sgt, %90, %126 : vector<2x96xi32>
    %128 = arith.select %127, %123, %92 : vector<2x96xi1>, vector<2x96xf32>
    %129 = arith.select %127, %125, %91 : vector<2x96xi1>, vector<2x96xf32>
    %130 = vector.extract_strided_slice %7 {offsets = [2, 0], sizes = [2, 96], strides = [1, 1]} : vector<16x96xf32> to vector<2x96xf32>
    %cst_59 = arith.constant dense<0.000000e+00> : vector<2x96xf32>
    %131 = tpu.matmul %129, %30, %cst_59 {dimension_numbers = #tpu.dot_dimension_numbers<[1], [0], [0], [1], [0, 0, 1, 1], [], []>} : vector<2x96xf32>, vector<96x96xf32>, vector<2x96xf32> -> vector<2x96xf32>
    %132 = arith.addf %130, %131 : vector<2x96xf32>
    %133 = vector.extract_strided_slice %14 {offsets = [2, 0], sizes = [2, 96], strides = [1, 1]} : vector<16x96xf32> to vector<2x96xf32>
    %cst_60 = arith.constant dense<0.000000e+00> : vector<2x96xf32>
    %134 = tpu.matmul %129, %32, %cst_60 {dimension_numbers = #tpu.dot_dimension_numbers<[1], [0], [0], [1], [0, 0, 1, 1], [], []>} : vector<2x96xf32>, vector<96x96xf32>, vector<2x96xf32> -> vector<2x96xf32>
    %135 = arith.addf %133, %134 : vector<2x96xf32>
    %136 = vector.extract_strided_slice %21 {offsets = [2, 0], sizes = [2, 96], strides = [1, 1]} : vector<16x96xf32> to vector<2x96xf32>
    %cst_61 = arith.constant dense<0.000000e+00> : vector<2x96xf32>
    %137 = tpu.matmul %129, %34, %cst_61 {dimension_numbers = #tpu.dot_dimension_numbers<[1], [0], [0], [1], [0, 0, 1, 1], [], []>} : vector<2x96xf32>, vector<96x96xf32>, vector<2x96xf32> -> vector<2x96xf32>
    %138 = arith.addf %136, %137 : vector<2x96xf32>
    %139 = vector.extract_strided_slice %28 {offsets = [2, 0], sizes = [2, 96], strides = [1, 1]} : vector<16x96xf32> to vector<2x96xf32>
    %cst_62 = arith.constant dense<0.000000e+00> : vector<2x96xf32>
    %140 = tpu.matmul %129, %36, %cst_62 {dimension_numbers = #tpu.dot_dimension_numbers<[1], [0], [0], [1], [0, 0, 1, 1], [], []>} : vector<2x96xf32>, vector<96x96xf32>, vector<2x96xf32> -> vector<2x96xf32>
    %141 = arith.addf %139, %140 : vector<2x96xf32>
    %142 = arith.negf %132 : vector<2x96xf32>
    %143 = math.exp %142 : vector<2x96xf32>
    %cst_63 = arith.constant 1.000000e+00 : f32
    %144 = vector.broadcast %cst_63 : f32 to vector<2x96xf32>
    %145 = arith.addf %144, %143 : vector<2x96xf32>
    %146 = arith.divf %144, %145 : vector<2x96xf32>
    %147 = arith.negf %135 : vector<2x96xf32>
    %148 = math.exp %147 : vector<2x96xf32>
    %cst_64 = arith.constant 1.000000e+00 : f32
    %149 = vector.broadcast %cst_64 : f32 to vector<2x96xf32>
    %150 = arith.addf %149, %148 : vector<2x96xf32>
    %151 = arith.divf %149, %150 : vector<2x96xf32>
    %152 = math.tanh %138 : vector<2x96xf32>
    %153 = arith.negf %141 : vector<2x96xf32>
    %154 = math.exp %153 : vector<2x96xf32>
    %cst_65 = arith.constant 1.000000e+00 : f32
    %155 = vector.broadcast %cst_65 : f32 to vector<2x96xf32>
    %156 = arith.addf %155, %154 : vector<2x96xf32>
    %157 = arith.divf %155, %156 : vector<2x96xf32>
    %158 = arith.mulf %151, %128 : vector<2x96xf32>
    %159 = arith.mulf %146, %152 : vector<2x96xf32>
    %160 = arith.addf %158, %159 : vector<2x96xf32>
    %161 = math.tanh %160 : vector<2x96xf32>
    %162 = arith.mulf %157, %161 : vector<2x96xf32>
    %c1_i32_66 = arith.constant 1 : i32
    %163 = vector.broadcast %c1_i32_66 : i32 to vector<2x96xi32>
    %164 = arith.cmpi sgt, %90, %163 : vector<2x96xi32>
    %165 = arith.select %164, %160, %128 : vector<2x96xi1>, vector<2x96xf32>
    %166 = arith.select %164, %162, %129 : vector<2x96xi1>, vector<2x96xf32>
    %167 = vector.extract_strided_slice %7 {offsets = [4, 0], sizes = [2, 96], strides = [1, 1]} : vector<16x96xf32> to vector<2x96xf32>
    %cst_67 = arith.constant dense<0.000000e+00> : vector<2x96xf32>
    %168 = tpu.matmul %166, %30, %cst_67 {dimension_numbers = #tpu.dot_dimension_numbers<[1], [0], [0], [1], [0, 0, 1, 1], [], []>} : vector<2x96xf32>, vector<96x96xf32>, vector<2x96xf32> -> vector<2x96xf32>
    %169 = arith.addf %167, %168 : vector<2x96xf32>
    %170 = vector.extract_strided_slice %14 {offsets = [4, 0], sizes = [2, 96], strides = [1, 1]} : vector<16x96xf32> to vector<2x96xf32>
    %cst_68 = arith.constant dense<0.000000e+00> : vector<2x96xf32>
    %171 = tpu.matmul %166, %32, %cst_68 {dimension_numbers = #tpu.dot_dimension_numbers<[1], [0], [0], [1], [0, 0, 1, 1], [], []>} : vector<2x96xf32>, vector<96x96xf32>, vector<2x96xf32> -> vector<2x96xf32>
    %172 = arith.addf %170, %171 : vector<2x96xf32>
    %173 = vector.extract_strided_slice %21 {offsets = [4, 0], sizes = [2, 96], strides = [1, 1]} : vector<16x96xf32> to vector<2x96xf32>
    %cst_69 = arith.constant dense<0.000000e+00> : vector<2x96xf32>
    %174 = tpu.matmul %166, %34, %cst_69 {dimension_numbers = #tpu.dot_dimension_numbers<[1], [0], [0], [1], [0, 0, 1, 1], [], []>} : vector<2x96xf32>, vector<96x96xf32>, vector<2x96xf32> -> vector<2x96xf32>
    %175 = arith.addf %173, %174 : vector<2x96xf32>
    %176 = vector.extract_strided_slice %28 {offsets = [4, 0], sizes = [2, 96], strides = [1, 1]} : vector<16x96xf32> to vector<2x96xf32>
    %cst_70 = arith.constant dense<0.000000e+00> : vector<2x96xf32>
    %177 = tpu.matmul %166, %36, %cst_70 {dimension_numbers = #tpu.dot_dimension_numbers<[1], [0], [0], [1], [0, 0, 1, 1], [], []>} : vector<2x96xf32>, vector<96x96xf32>, vector<2x96xf32> -> vector<2x96xf32>
    %178 = arith.addf %176, %177 : vector<2x96xf32>
    %179 = arith.negf %169 : vector<2x96xf32>
    %180 = math.exp %179 : vector<2x96xf32>
    %cst_71 = arith.constant 1.000000e+00 : f32
    %181 = vector.broadcast %cst_71 : f32 to vector<2x96xf32>
    %182 = arith.addf %181, %180 : vector<2x96xf32>
    %183 = arith.divf %181, %182 : vector<2x96xf32>
    %184 = arith.negf %172 : vector<2x96xf32>
    %185 = math.exp %184 : vector<2x96xf32>
    %cst_72 = arith.constant 1.000000e+00 : f32
    %186 = vector.broadcast %cst_72 : f32 to vector<2x96xf32>
    %187 = arith.addf %186, %185 : vector<2x96xf32>
    %188 = arith.divf %186, %187 : vector<2x96xf32>
    %189 = math.tanh %175 : vector<2x96xf32>
    %190 = arith.negf %178 : vector<2x96xf32>
    %191 = math.exp %190 : vector<2x96xf32>
    %cst_73 = arith.constant 1.000000e+00 : f32
    %192 = vector.broadcast %cst_73 : f32 to vector<2x96xf32>
    %193 = arith.addf %192, %191 : vector<2x96xf32>
    %194 = arith.divf %192, %193 : vector<2x96xf32>
    %195 = arith.mulf %188, %165 : vector<2x96xf32>
    %196 = arith.mulf %183, %189 : vector<2x96xf32>
    %197 = arith.addf %195, %196 : vector<2x96xf32>
    %198 = math.tanh %197 : vector<2x96xf32>
    %199 = arith.mulf %194, %198 : vector<2x96xf32>
    %c2_i32 = arith.constant 2 : i32
    %200 = vector.broadcast %c2_i32 : i32 to vector<2x96xi32>
    %201 = arith.cmpi sgt, %90, %200 : vector<2x96xi32>
    %202 = arith.select %201, %197, %165 : vector<2x96xi1>, vector<2x96xf32>
    %203 = arith.select %201, %199, %166 : vector<2x96xi1>, vector<2x96xf32>
    %204 = vector.extract_strided_slice %7 {offsets = [6, 0], sizes = [2, 96], strides = [1, 1]} : vector<16x96xf32> to vector<2x96xf32>
    %cst_74 = arith.constant dense<0.000000e+00> : vector<2x96xf32>
    %205 = tpu.matmul %203, %30, %cst_74 {dimension_numbers = #tpu.dot_dimension_numbers<[1], [0], [0], [1], [0, 0, 1, 1], [], []>} : vector<2x96xf32>, vector<96x96xf32>, vector<2x96xf32> -> vector<2x96xf32>
    %206 = arith.addf %204, %205 : vector<2x96xf32>
    %207 = vector.extract_strided_slice %14 {offsets = [6, 0], sizes = [2, 96], strides = [1, 1]} : vector<16x96xf32> to vector<2x96xf32>
    %cst_75 = arith.constant dense<0.000000e+00> : vector<2x96xf32>
    %208 = tpu.matmul %203, %32, %cst_75 {dimension_numbers = #tpu.dot_dimension_numbers<[1], [0], [0], [1], [0, 0, 1, 1], [], []>} : vector<2x96xf32>, vector<96x96xf32>, vector<2x96xf32> -> vector<2x96xf32>
    %209 = arith.addf %207, %208 : vector<2x96xf32>
    %210 = vector.extract_strided_slice %21 {offsets = [6, 0], sizes = [2, 96], strides = [1, 1]} : vector<16x96xf32> to vector<2x96xf32>
    %cst_76 = arith.constant dense<0.000000e+00> : vector<2x96xf32>
    %211 = tpu.matmul %203, %34, %cst_76 {dimension_numbers = #tpu.dot_dimension_numbers<[1], [0], [0], [1], [0, 0, 1, 1], [], []>} : vector<2x96xf32>, vector<96x96xf32>, vector<2x96xf32> -> vector<2x96xf32>
    %212 = arith.addf %210, %211 : vector<2x96xf32>
    %213 = vector.extract_strided_slice %28 {offsets = [6, 0], sizes = [2, 96], strides = [1, 1]} : vector<16x96xf32> to vector<2x96xf32>
    %cst_77 = arith.constant dense<0.000000e+00> : vector<2x96xf32>
    %214 = tpu.matmul %203, %36, %cst_77 {dimension_numbers = #tpu.dot_dimension_numbers<[1], [0], [0], [1], [0, 0, 1, 1], [], []>} : vector<2x96xf32>, vector<96x96xf32>, vector<2x96xf32> -> vector<2x96xf32>
    %215 = arith.addf %213, %214 : vector<2x96xf32>
    %216 = arith.negf %206 : vector<2x96xf32>
    %217 = math.exp %216 : vector<2x96xf32>
    %cst_78 = arith.constant 1.000000e+00 : f32
    %218 = vector.broadcast %cst_78 : f32 to vector<2x96xf32>
    %219 = arith.addf %218, %217 : vector<2x96xf32>
    %220 = arith.divf %218, %219 : vector<2x96xf32>
    %221 = arith.negf %209 : vector<2x96xf32>
    %222 = math.exp %221 : vector<2x96xf32>
    %cst_79 = arith.constant 1.000000e+00 : f32
    %223 = vector.broadcast %cst_79 : f32 to vector<2x96xf32>
    %224 = arith.addf %223, %222 : vector<2x96xf32>
    %225 = arith.divf %223, %224 : vector<2x96xf32>
    %226 = math.tanh %212 : vector<2x96xf32>
    %227 = arith.negf %215 : vector<2x96xf32>
    %228 = math.exp %227 : vector<2x96xf32>
    %cst_80 = arith.constant 1.000000e+00 : f32
    %229 = vector.broadcast %cst_80 : f32 to vector<2x96xf32>
    %230 = arith.addf %229, %228 : vector<2x96xf32>
    %231 = arith.divf %229, %230 : vector<2x96xf32>
    %232 = arith.mulf %225, %202 : vector<2x96xf32>
    %233 = arith.mulf %220, %226 : vector<2x96xf32>
    %234 = arith.addf %232, %233 : vector<2x96xf32>
    %235 = math.tanh %234 : vector<2x96xf32>
    %236 = arith.mulf %231, %235 : vector<2x96xf32>
    %c3_i32 = arith.constant 3 : i32
    %237 = vector.broadcast %c3_i32 : i32 to vector<2x96xi32>
    %238 = arith.cmpi sgt, %90, %237 : vector<2x96xi32>
    %239 = arith.select %238, %234, %202 : vector<2x96xi1>, vector<2x96xf32>
    %240 = arith.select %238, %236, %203 : vector<2x96xi1>, vector<2x96xf32>
    %241 = vector.extract_strided_slice %7 {offsets = [8, 0], sizes = [2, 96], strides = [1, 1]} : vector<16x96xf32> to vector<2x96xf32>
    %cst_81 = arith.constant dense<0.000000e+00> : vector<2x96xf32>
    %242 = tpu.matmul %240, %30, %cst_81 {dimension_numbers = #tpu.dot_dimension_numbers<[1], [0], [0], [1], [0, 0, 1, 1], [], []>} : vector<2x96xf32>, vector<96x96xf32>, vector<2x96xf32> -> vector<2x96xf32>
    %243 = arith.addf %241, %242 : vector<2x96xf32>
    %244 = vector.extract_strided_slice %14 {offsets = [8, 0], sizes = [2, 96], strides = [1, 1]} : vector<16x96xf32> to vector<2x96xf32>
    %cst_82 = arith.constant dense<0.000000e+00> : vector<2x96xf32>
    %245 = tpu.matmul %240, %32, %cst_82 {dimension_numbers = #tpu.dot_dimension_numbers<[1], [0], [0], [1], [0, 0, 1, 1], [], []>} : vector<2x96xf32>, vector<96x96xf32>, vector<2x96xf32> -> vector<2x96xf32>
    %246 = arith.addf %244, %245 : vector<2x96xf32>
    %247 = vector.extract_strided_slice %21 {offsets = [8, 0], sizes = [2, 96], strides = [1, 1]} : vector<16x96xf32> to vector<2x96xf32>
    %cst_83 = arith.constant dense<0.000000e+00> : vector<2x96xf32>
    %248 = tpu.matmul %240, %34, %cst_83 {dimension_numbers = #tpu.dot_dimension_numbers<[1], [0], [0], [1], [0, 0, 1, 1], [], []>} : vector<2x96xf32>, vector<96x96xf32>, vector<2x96xf32> -> vector<2x96xf32>
    %249 = arith.addf %247, %248 : vector<2x96xf32>
    %250 = vector.extract_strided_slice %28 {offsets = [8, 0], sizes = [2, 96], strides = [1, 1]} : vector<16x96xf32> to vector<2x96xf32>
    %cst_84 = arith.constant dense<0.000000e+00> : vector<2x96xf32>
    %251 = tpu.matmul %240, %36, %cst_84 {dimension_numbers = #tpu.dot_dimension_numbers<[1], [0], [0], [1], [0, 0, 1, 1], [], []>} : vector<2x96xf32>, vector<96x96xf32>, vector<2x96xf32> -> vector<2x96xf32>
    %252 = arith.addf %250, %251 : vector<2x96xf32>
    %253 = arith.negf %243 : vector<2x96xf32>
    %254 = math.exp %253 : vector<2x96xf32>
    %cst_85 = arith.constant 1.000000e+00 : f32
    %255 = vector.broadcast %cst_85 : f32 to vector<2x96xf32>
    %256 = arith.addf %255, %254 : vector<2x96xf32>
    %257 = arith.divf %255, %256 : vector<2x96xf32>
    %258 = arith.negf %246 : vector<2x96xf32>
    %259 = math.exp %258 : vector<2x96xf32>
    %cst_86 = arith.constant 1.000000e+00 : f32
    %260 = vector.broadcast %cst_86 : f32 to vector<2x96xf32>
    %261 = arith.addf %260, %259 : vector<2x96xf32>
    %262 = arith.divf %260, %261 : vector<2x96xf32>
    %263 = math.tanh %249 : vector<2x96xf32>
    %264 = arith.negf %252 : vector<2x96xf32>
    %265 = math.exp %264 : vector<2x96xf32>
    %cst_87 = arith.constant 1.000000e+00 : f32
    %266 = vector.broadcast %cst_87 : f32 to vector<2x96xf32>
    %267 = arith.addf %266, %265 : vector<2x96xf32>
    %268 = arith.divf %266, %267 : vector<2x96xf32>
    %269 = arith.mulf %262, %239 : vector<2x96xf32>
    %270 = arith.mulf %257, %263 : vector<2x96xf32>
    %271 = arith.addf %269, %270 : vector<2x96xf32>
    %272 = math.tanh %271 : vector<2x96xf32>
    %273 = arith.mulf %268, %272 : vector<2x96xf32>
    %c4_i32 = arith.constant 4 : i32
    %274 = vector.broadcast %c4_i32 : i32 to vector<2x96xi32>
    %275 = arith.cmpi sgt, %90, %274 : vector<2x96xi32>
    %276 = arith.select %275, %271, %239 : vector<2x96xi1>, vector<2x96xf32>
    %277 = arith.select %275, %273, %240 : vector<2x96xi1>, vector<2x96xf32>
    %278 = vector.extract_strided_slice %7 {offsets = [10, 0], sizes = [2, 96], strides = [1, 1]} : vector<16x96xf32> to vector<2x96xf32>
    %cst_88 = arith.constant dense<0.000000e+00> : vector<2x96xf32>
    %279 = tpu.matmul %277, %30, %cst_88 {dimension_numbers = #tpu.dot_dimension_numbers<[1], [0], [0], [1], [0, 0, 1, 1], [], []>} : vector<2x96xf32>, vector<96x96xf32>, vector<2x96xf32> -> vector<2x96xf32>
    %280 = arith.addf %278, %279 : vector<2x96xf32>
    %281 = vector.extract_strided_slice %14 {offsets = [10, 0], sizes = [2, 96], strides = [1, 1]} : vector<16x96xf32> to vector<2x96xf32>
    %cst_89 = arith.constant dense<0.000000e+00> : vector<2x96xf32>
    %282 = tpu.matmul %277, %32, %cst_89 {dimension_numbers = #tpu.dot_dimension_numbers<[1], [0], [0], [1], [0, 0, 1, 1], [], []>} : vector<2x96xf32>, vector<96x96xf32>, vector<2x96xf32> -> vector<2x96xf32>
    %283 = arith.addf %281, %282 : vector<2x96xf32>
    %284 = vector.extract_strided_slice %21 {offsets = [10, 0], sizes = [2, 96], strides = [1, 1]} : vector<16x96xf32> to vector<2x96xf32>
    %cst_90 = arith.constant dense<0.000000e+00> : vector<2x96xf32>
    %285 = tpu.matmul %277, %34, %cst_90 {dimension_numbers = #tpu.dot_dimension_numbers<[1], [0], [0], [1], [0, 0, 1, 1], [], []>} : vector<2x96xf32>, vector<96x96xf32>, vector<2x96xf32> -> vector<2x96xf32>
    %286 = arith.addf %284, %285 : vector<2x96xf32>
    %287 = vector.extract_strided_slice %28 {offsets = [10, 0], sizes = [2, 96], strides = [1, 1]} : vector<16x96xf32> to vector<2x96xf32>
    %cst_91 = arith.constant dense<0.000000e+00> : vector<2x96xf32>
    %288 = tpu.matmul %277, %36, %cst_91 {dimension_numbers = #tpu.dot_dimension_numbers<[1], [0], [0], [1], [0, 0, 1, 1], [], []>} : vector<2x96xf32>, vector<96x96xf32>, vector<2x96xf32> -> vector<2x96xf32>
    %289 = arith.addf %287, %288 : vector<2x96xf32>
    %290 = arith.negf %280 : vector<2x96xf32>
    %291 = math.exp %290 : vector<2x96xf32>
    %cst_92 = arith.constant 1.000000e+00 : f32
    %292 = vector.broadcast %cst_92 : f32 to vector<2x96xf32>
    %293 = arith.addf %292, %291 : vector<2x96xf32>
    %294 = arith.divf %292, %293 : vector<2x96xf32>
    %295 = arith.negf %283 : vector<2x96xf32>
    %296 = math.exp %295 : vector<2x96xf32>
    %cst_93 = arith.constant 1.000000e+00 : f32
    %297 = vector.broadcast %cst_93 : f32 to vector<2x96xf32>
    %298 = arith.addf %297, %296 : vector<2x96xf32>
    %299 = arith.divf %297, %298 : vector<2x96xf32>
    %300 = math.tanh %286 : vector<2x96xf32>
    %301 = arith.negf %289 : vector<2x96xf32>
    %302 = math.exp %301 : vector<2x96xf32>
    %cst_94 = arith.constant 1.000000e+00 : f32
    %303 = vector.broadcast %cst_94 : f32 to vector<2x96xf32>
    %304 = arith.addf %303, %302 : vector<2x96xf32>
    %305 = arith.divf %303, %304 : vector<2x96xf32>
    %306 = arith.mulf %299, %276 : vector<2x96xf32>
    %307 = arith.mulf %294, %300 : vector<2x96xf32>
    %308 = arith.addf %306, %307 : vector<2x96xf32>
    %309 = math.tanh %308 : vector<2x96xf32>
    %310 = arith.mulf %305, %309 : vector<2x96xf32>
    %c5_i32 = arith.constant 5 : i32
    %311 = vector.broadcast %c5_i32 : i32 to vector<2x96xi32>
    %312 = arith.cmpi sgt, %90, %311 : vector<2x96xi32>
    %313 = arith.select %312, %308, %276 : vector<2x96xi1>, vector<2x96xf32>
    %314 = arith.select %312, %310, %277 : vector<2x96xi1>, vector<2x96xf32>
    %315 = vector.extract_strided_slice %7 {offsets = [12, 0], sizes = [2, 96], strides = [1, 1]} : vector<16x96xf32> to vector<2x96xf32>
    %cst_95 = arith.constant dense<0.000000e+00> : vector<2x96xf32>
    %316 = tpu.matmul %314, %30, %cst_95 {dimension_numbers = #tpu.dot_dimension_numbers<[1], [0], [0], [1], [0, 0, 1, 1], [], []>} : vector<2x96xf32>, vector<96x96xf32>, vector<2x96xf32> -> vector<2x96xf32>
    %317 = arith.addf %315, %316 : vector<2x96xf32>
    %318 = vector.extract_strided_slice %14 {offsets = [12, 0], sizes = [2, 96], strides = [1, 1]} : vector<16x96xf32> to vector<2x96xf32>
    %cst_96 = arith.constant dense<0.000000e+00> : vector<2x96xf32>
    %319 = tpu.matmul %314, %32, %cst_96 {dimension_numbers = #tpu.dot_dimension_numbers<[1], [0], [0], [1], [0, 0, 1, 1], [], []>} : vector<2x96xf32>, vector<96x96xf32>, vector<2x96xf32> -> vector<2x96xf32>
    %320 = arith.addf %318, %319 : vector<2x96xf32>
    %321 = vector.extract_strided_slice %21 {offsets = [12, 0], sizes = [2, 96], strides = [1, 1]} : vector<16x96xf32> to vector<2x96xf32>
    %cst_97 = arith.constant dense<0.000000e+00> : vector<2x96xf32>
    %322 = tpu.matmul %314, %34, %cst_97 {dimension_numbers = #tpu.dot_dimension_numbers<[1], [0], [0], [1], [0, 0, 1, 1], [], []>} : vector<2x96xf32>, vector<96x96xf32>, vector<2x96xf32> -> vector<2x96xf32>
    %323 = arith.addf %321, %322 : vector<2x96xf32>
    %324 = vector.extract_strided_slice %28 {offsets = [12, 0], sizes = [2, 96], strides = [1, 1]} : vector<16x96xf32> to vector<2x96xf32>
    %cst_98 = arith.constant dense<0.000000e+00> : vector<2x96xf32>
    %325 = tpu.matmul %314, %36, %cst_98 {dimension_numbers = #tpu.dot_dimension_numbers<[1], [0], [0], [1], [0, 0, 1, 1], [], []>} : vector<2x96xf32>, vector<96x96xf32>, vector<2x96xf32> -> vector<2x96xf32>
    %326 = arith.addf %324, %325 : vector<2x96xf32>
    %327 = arith.negf %317 : vector<2x96xf32>
    %328 = math.exp %327 : vector<2x96xf32>
    %cst_99 = arith.constant 1.000000e+00 : f32
    %329 = vector.broadcast %cst_99 : f32 to vector<2x96xf32>
    %330 = arith.addf %329, %328 : vector<2x96xf32>
    %331 = arith.divf %329, %330 : vector<2x96xf32>
    %332 = arith.negf %320 : vector<2x96xf32>
    %333 = math.exp %332 : vector<2x96xf32>
    %cst_100 = arith.constant 1.000000e+00 : f32
    %334 = vector.broadcast %cst_100 : f32 to vector<2x96xf32>
    %335 = arith.addf %334, %333 : vector<2x96xf32>
    %336 = arith.divf %334, %335 : vector<2x96xf32>
    %337 = math.tanh %323 : vector<2x96xf32>
    %338 = arith.negf %326 : vector<2x96xf32>
    %339 = math.exp %338 : vector<2x96xf32>
    %cst_101 = arith.constant 1.000000e+00 : f32
    %340 = vector.broadcast %cst_101 : f32 to vector<2x96xf32>
    %341 = arith.addf %340, %339 : vector<2x96xf32>
    %342 = arith.divf %340, %341 : vector<2x96xf32>
    %343 = arith.mulf %336, %313 : vector<2x96xf32>
    %344 = arith.mulf %331, %337 : vector<2x96xf32>
    %345 = arith.addf %343, %344 : vector<2x96xf32>
    %346 = math.tanh %345 : vector<2x96xf32>
    %347 = arith.mulf %342, %346 : vector<2x96xf32>
    %c6_i32 = arith.constant 6 : i32
    %348 = vector.broadcast %c6_i32 : i32 to vector<2x96xi32>
    %349 = arith.cmpi sgt, %90, %348 : vector<2x96xi32>
    %350 = arith.select %349, %345, %313 : vector<2x96xi1>, vector<2x96xf32>
    %351 = arith.select %349, %347, %314 : vector<2x96xi1>, vector<2x96xf32>
    %352 = vector.extract_strided_slice %7 {offsets = [14, 0], sizes = [2, 96], strides = [1, 1]} : vector<16x96xf32> to vector<2x96xf32>
    %cst_102 = arith.constant dense<0.000000e+00> : vector<2x96xf32>
    %353 = tpu.matmul %351, %30, %cst_102 {dimension_numbers = #tpu.dot_dimension_numbers<[1], [0], [0], [1], [0, 0, 1, 1], [], []>} : vector<2x96xf32>, vector<96x96xf32>, vector<2x96xf32> -> vector<2x96xf32>
    %354 = arith.addf %352, %353 : vector<2x96xf32>
    %355 = vector.extract_strided_slice %14 {offsets = [14, 0], sizes = [2, 96], strides = [1, 1]} : vector<16x96xf32> to vector<2x96xf32>
    %cst_103 = arith.constant dense<0.000000e+00> : vector<2x96xf32>
    %356 = tpu.matmul %351, %32, %cst_103 {dimension_numbers = #tpu.dot_dimension_numbers<[1], [0], [0], [1], [0, 0, 1, 1], [], []>} : vector<2x96xf32>, vector<96x96xf32>, vector<2x96xf32> -> vector<2x96xf32>
    %357 = arith.addf %355, %356 : vector<2x96xf32>
    %358 = vector.extract_strided_slice %21 {offsets = [14, 0], sizes = [2, 96], strides = [1, 1]} : vector<16x96xf32> to vector<2x96xf32>
    %cst_104 = arith.constant dense<0.000000e+00> : vector<2x96xf32>
    %359 = tpu.matmul %351, %34, %cst_104 {dimension_numbers = #tpu.dot_dimension_numbers<[1], [0], [0], [1], [0, 0, 1, 1], [], []>} : vector<2x96xf32>, vector<96x96xf32>, vector<2x96xf32> -> vector<2x96xf32>
    %360 = arith.addf %358, %359 : vector<2x96xf32>
    %361 = vector.extract_strided_slice %28 {offsets = [14, 0], sizes = [2, 96], strides = [1, 1]} : vector<16x96xf32> to vector<2x96xf32>
    %cst_105 = arith.constant dense<0.000000e+00> : vector<2x96xf32>
    %362 = tpu.matmul %351, %36, %cst_105 {dimension_numbers = #tpu.dot_dimension_numbers<[1], [0], [0], [1], [0, 0, 1, 1], [], []>} : vector<2x96xf32>, vector<96x96xf32>, vector<2x96xf32> -> vector<2x96xf32>
    %363 = arith.addf %361, %362 : vector<2x96xf32>
    %364 = arith.negf %354 : vector<2x96xf32>
    %365 = math.exp %364 : vector<2x96xf32>
    %cst_106 = arith.constant 1.000000e+00 : f32
    %366 = vector.broadcast %cst_106 : f32 to vector<2x96xf32>
    %367 = arith.addf %366, %365 : vector<2x96xf32>
    %368 = arith.divf %366, %367 : vector<2x96xf32>
    %369 = arith.negf %357 : vector<2x96xf32>
    %370 = math.exp %369 : vector<2x96xf32>
    %cst_107 = arith.constant 1.000000e+00 : f32
    %371 = vector.broadcast %cst_107 : f32 to vector<2x96xf32>
    %372 = arith.addf %371, %370 : vector<2x96xf32>
    %373 = arith.divf %371, %372 : vector<2x96xf32>
    %374 = math.tanh %360 : vector<2x96xf32>
    %375 = arith.negf %363 : vector<2x96xf32>
    %376 = math.exp %375 : vector<2x96xf32>
    %cst_108 = arith.constant 1.000000e+00 : f32
    %377 = vector.broadcast %cst_108 : f32 to vector<2x96xf32>
    %378 = arith.addf %377, %376 : vector<2x96xf32>
    %379 = arith.divf %377, %378 : vector<2x96xf32>
    %380 = arith.mulf %373, %350 : vector<2x96xf32>
    %381 = arith.mulf %368, %374 : vector<2x96xf32>
    %382 = arith.addf %380, %381 : vector<2x96xf32>
    %383 = math.tanh %382 : vector<2x96xf32>
    %384 = arith.mulf %379, %383 : vector<2x96xf32>
    %c7_i32 = arith.constant 7 : i32
    %385 = vector.broadcast %c7_i32 : i32 to vector<2x96xi32>
    %386 = arith.cmpi sgt, %90, %385 : vector<2x96xi32>
    %387 = arith.select %386, %384, %351 : vector<2x96xi1>, vector<2x96xf32>
    %c0_109 = arith.constant 0 : index
    %c0_110 = arith.constant 0 : index
    %388 = vector.load %arg5[%c0_109, %c0_110] : memref<96x32xf32, #tpu.memory_space<vmem>>, vector<96x32xf32>
    %cst_111 = arith.constant dense<0.000000e+00> : vector<2x32xf32>
    %389 = tpu.matmul %387, %388, %cst_111 {dimension_numbers = #tpu.dot_dimension_numbers<[1], [0], [0], [1], [0, 0, 1, 1], [], []>} : vector<2x96xf32>, vector<96x32xf32>, vector<2x32xf32> -> vector<2x32xf32>
    %c0_112 = arith.constant 0 : index
    %c0_113 = arith.constant 0 : index
    %390 = vector.load %arg6[%c0_112, %c0_113] : memref<1x32xf32, #tpu.memory_space<vmem>>, vector<1x32xf32>
    %391 = vector.broadcast %390 : vector<1x32xf32> to vector<2x32xf32>
    %392 = arith.addf %389, %391 : vector<2x32xf32>
    %cst_114 = arith.constant 0.000000e+00 : f32
    %393 = vector.broadcast %cst_114 : f32 to vector<2x32xf32>
    %394 = arith.maximumf %392, %393 : vector<2x32xf32>
    %c0_115 = arith.constant 0 : index
    %c0_116 = arith.constant 0 : index
    %395 = vector.load %arg7[%c0_115, %c0_116] : memref<32x5xf32, #tpu.memory_space<vmem>>, vector<32x5xf32>
    %cst_117 = arith.constant dense<0.000000e+00> : vector<2x5xf32>
    %396 = tpu.matmul %394, %395, %cst_117 {dimension_numbers = #tpu.dot_dimension_numbers<[1], [0], [0], [1], [0, 0, 1, 1], [], []>} : vector<2x32xf32>, vector<32x5xf32>, vector<2x5xf32> -> vector<2x5xf32>
    %c0_118 = arith.constant 0 : index
    %c0_119 = arith.constant 0 : index
    %397 = vector.load %arg8[%c0_118, %c0_119] : memref<1x5xf32, #tpu.memory_space<vmem>>, vector<1x5xf32>
    %398 = vector.broadcast %397 : vector<1x5xf32> to vector<2x5xf32>
    %399 = arith.addf %396, %398 : vector<2x5xf32>
    %c0_120 = arith.constant 0 : index
    %c0_121 = arith.constant 0 : index
    %400 = vector.load %arg9[%c0_120, %c0_121] : memref<2x5xf32, #tpu.memory_space<vmem>>, vector<2x5xf32>
    tpu.vector_store %arg9[%c0_120, %c0_121], %399 {strides = array<i32>} : memref<2x5xf32, #tpu.memory_space<vmem>>, vector<2x5xf32>,
    return
  }
}

</mosaic_0001>

<llo_original>
// kernel: tpu_custom_call.1
$region0: #{tpu_custom_call.1}
  #allocation0 [shape = 'u32[]', space=smem, size = 0x4, offset = 0x4, fixed_abs, tag = 'smem constant byte address 0x4 - core index']
  #allocation1 [shape = 'u32[144,128]{1,0:T(1,128)}', space=vmem, size = 0x12000, scoped, tag = 'internal scratch']
  %s0 = inlined_call_operand.vmem [shape: f32[16,96], index: 0, kind: input, shape index: {}]
  %s1 = inlined_call_operand.hbm [shape: f32[4,96,96], index: 1, kind: input, shape index: {}]
  %s2 = inlined_call_operand.hbm [shape: f32[4,96,96], index: 2, kind: input, shape index: {}]
  %s3 = inlined_call_operand.vmem [shape: f32[4,1,96], index: 3, kind: input, shape index: {}]
  %s4 = inlined_call_operand.vmem [shape: s32[6], index: 4, kind: input, shape index: {}]
  %s5 = inlined_call_operand.vmem [shape: f32[96,32], index: 5, kind: input, shape index: {}]
  %s6 = inlined_call_operand.vmem [shape: f32[1,32], index: 6, kind: input, shape index: {}]
  %s7 = inlined_call_operand.vmem [shape: f32[32,5], index: 7, kind: input, shape index: {}]
  %s8 = inlined_call_operand.vmem [shape: f32[1,5], index: 8, kind: input, shape index: {}]
  %s9 = inlined_call_operand.hbm [shape: f32[2,5], index: 9, kind: output, shape index: {}]
  %s10 = sld [smem:[#allocation0]]
  $region58: #{tpu_custom_call.1} parent=0
    _
  %s12 = ssub.s32 1, %s10
  %s13 = scalar_select 0, %s12, %s10
  $region1: #{tpu_custom_call.1} parent=0
    #allocation2 [shape = 'u8[196608]{0}', space=vmem, size = 0x30000, scoped, tag = 'input window, operand 1, single buffered']
    #allocation3 [shape = 's32[1]{0}', space=sflag, size = 0x4, scoped, tag = 'scoped memory for tpu_custom_call.1']
    #allocation4 [shape = 's32[1]{0}', space=sflag, size = 0x4, scoped, tag = 'scoped memory for tpu_custom_call.1']
    #allocation5 [shape = 's32[1]{0}', space=sflag, size = 0x4, scoped, tag = 'scoped memory for tpu_custom_call.1']
    #allocation6 [shape = 'u8[196608]{0}', space=vmem, size = 0x30000, scoped, tag = 'input window, operand 2, single buffered']
    #allocation7 [shape = 's32[1]{0}', space=sflag, size = 0x4, scoped, tag = 'scoped memory for tpu_custom_call.1']
    #allocation8 [shape = 'u8[512]{0}', space=smem, size = 0x200, scoped, tag = 'input window, operand 4, single buffered']
    #allocation9 [shape = 'u8[1024]{0}', space=vmem, size = 0x400, scoped, tag = 'output window, operand 0, single buffered']
    %14 = vsyncpa [#allocation3], 0
    %15 = vsyncpa [#allocation7], 0
    %16 = vsyncpa [#allocation5], 0
    %17 = vsyncpa [#allocation4], 0
    // Predicated region
    $region2: #{tpu_custom_call.1} parent=1 // pred_check
      _
    $region3: #{tpu_custom_call.1} parent=1 // pred_check_branch
      %19 = sbr.rel (0) target = $region5
    $region4: #{tpu_custom_call.1} parent=1 // pred_region
      _
    $region5: #{tpu_custom_call.1} parent=1 // pred_fallthru
      _
    // Predicated region
    $region6: #{tpu_custom_call.1} parent=1 // pred_check
      _
    $region7: #{tpu_custom_call.1} parent=1 // pred_check_branch
      %21 = sbr.rel (0) target = $region9
    $region8: #{tpu_custom_call.1} parent=1 // pred_region
      %s23 = ssub.s32 6144, 6144
      %24 = vsyncadd [#allocation3], %s23
      %s25 = sshll.u32 [#allocation2], 4
      %s26 = int_to_ptr.vmem [resolvable:$true] %s25
      %31 = dma.hbm_to_vmem [thread:$0]  %s1, 6144, %s26, [#allocation3], 128, 128, 8
    $region9: #{tpu_custom_call.1} parent=1 // pred_fallthru
      _
    // Predicated region
    $region10: #{tpu_custom_call.1} parent=1 // pred_check
      _
    $region11: #{tpu_custom_call.1} parent=1 // pred_check_branch
      %33 = sbr.rel (0) target = $region13
    $region12: #{tpu_custom_call.1} parent=1 // pred_region
      %s35 = ssub.s32 6144, 6144
      %36 = vsyncadd [#allocation7], %s35
      %s37 = sshll.u32 [#allocation6], 4
      %s38 = int_to_ptr.vmem [resolvable:$true] %s37
      %43 = dma.hbm_to_vmem [thread:$0]  %s2, 6144, %s38, [#allocation7], 128, 128, 8
    $region13: #{tpu_custom_call.1} parent=1 // pred_fallthru
      _
    // Predicated region
    $region14: #{tpu_custom_call.1} parent=1 // pred_check
      _
    $region15: #{tpu_custom_call.1} parent=1 // pred_check_branch
      %45 = sbr.rel (0) target = $region17
    $region16: #{tpu_custom_call.1} parent=1 // pred_region
      _
    $region17: #{tpu_custom_call.1} parent=1 // pred_fallthru
      _
    // Predicated region
    $region18: #{tpu_custom_call.1} parent=1 // pred_check
      _
    $region19: #{tpu_custom_call.1} parent=1 // pred_check_branch
      %47 = sbr.rel (0) target = $region21
    $region20: #{tpu_custom_call.1} parent=1 // pred_region
      %s49 = ssub.s32 16, 16
      %50 = vsyncadd [#allocation5], %s49
      %s52 = sshll.u32 %s4, 4
      %s53 = int_to_ptr.vmem [resolvable:$true] %s52
      %55 = dma.vmem_to_smem %s53, 16, [#allocation8], [#allocation5]
    $region21: #{tpu_custom_call.1} parent=1 // pred_fallthru
      _
    // Predicated region
    $region22: #{tpu_custom_call.1} parent=1 // pred_check
      _
    $region23: #{tpu_custom_call.1} parent=1 // pred_check_branch
      %57 = sbr.rel (0) target = $region25
    $region24: #{tpu_custom_call.1} parent=1 // pred_region
      _
    $region25: #{tpu_custom_call.1} parent=1 // pred_fallthru
      _
    // Predicated region
    $region26: #{tpu_custom_call.1} parent=1 // pred_check
      _
    $region27: #{tpu_custom_call.1} parent=1 // pred_check_branch
      %59 = sbr.rel (0) target = $region29
    $region28: #{tpu_custom_call.1} parent=1 // pred_region
      _
    $region29: #{tpu_custom_call.1} parent=1 // pred_fallthru
      _
    // Predicated region
    $region30: #{tpu_custom_call.1} parent=1 // pred_check
      _
    $region31: #{tpu_custom_call.1} parent=1 // pred_check_branch
      %61 = sbr.rel (0) target = $region33
    $region32: #{tpu_custom_call.1} parent=1 // pred_region
      _
    $region33: #{tpu_custom_call.1} parent=1 // pred_fallthru
      _
    // Predicated region
    $region34: #{tpu_custom_call.1} parent=1 // pred_check
      _
    $region35: #{tpu_custom_call.1} parent=1 // pred_check_branch
      %63 = sbr.rel (0) target = $region37
    $region36: #{tpu_custom_call.1} parent=1 // pred_region
      _
    $region37: #{tpu_custom_call.1} parent=1 // pred_fallthru
      _
    // Predicated region
    $region38: #{tpu_custom_call.1} parent=1 // pred_check
      _
    $region39: #{tpu_custom_call.1} parent=1 // pred_check_branch
      %65 = sbr.rel (0) target = $region41
    $region40: #{tpu_custom_call.1} parent=1 // pred_region
      %66 = dma.done [#allocation3], 6144
    $region41: #{tpu_custom_call.1} parent=1 // pred_fallthru
      _
    // Predicated region
    $region42: #{tpu_custom_call.1} parent=1 // pred_check
      _
    $region43: #{tpu_custom_call.1} parent=1 // pred_check_branch
      %68 = sbr.rel (0) target = $region45
    $region44: #{tpu_custom_call.1} parent=1 // pred_region
      %69 = dma.done [#allocation7], 6144
    $region45: #{tpu_custom_call.1} parent=1 // pred_fallthru
      _
    // Predicated region
    $region46: #{tpu_custom_call.1} parent=1 // pred_check
      _
    $region47: #{tpu_custom_call.1} parent=1 // pred_check_branch
      %71 = sbr.rel (0) target = $region49
    $region48: #{tpu_custom_call.1} parent=1 // pred_region
      %72 = dma.done [#allocation5], 16
    $region49: #{tpu_custom_call.1} parent=1 // pred_fallthru
      _
    %73 = sfence
    %v74 = vld [vmem:[%s0] sm:$0xff]
    %v75 = vld [vmem:[%s0 + $0x8] sm:$0xff]
    %v76 = vld [vmem:[#allocation2] sm:$0xff]
    %v77 = vld [vmem:[#allocation2 + $0x8] sm:$0xff]
    %v78 = vld [vmem:[#allocation2 + $0x10] sm:$0xff]
    %v79 = vld [vmem:[#allocation2 + $0x18] sm:$0xff]
    %v80 = vld [vmem:[#allocation2 + $0x20] sm:$0xff]
    %v81 = vld [vmem:[#allocation2 + $0x28] sm:$0xff]
    %v82 = vld [vmem:[#allocation2 + $0x30] sm:$0xff]
    %v83 = vld [vmem:[#allocation2 + $0x38] sm:$0xff]
    %v84 = vld [vmem:[#allocation2 + $0x40] sm:$0xff]
    %v85 = vld [vmem:[#allocation2 + $0x48] sm:$0xff]
    %v86 = vld [vmem:[#allocation2 + $0x50] sm:$0xff]
    %v87 = vld [vmem:[#allocation2 + $0x58] sm:$0xff]
    %v88 = vld [vmem:[%s3] sm:$0x1]
    %v90 = vlaneseq
    %v91 = vshrl.u32 %v90, 7
    %v92 = vsub.s32 0, %v91
    %v93 = vrot.slane %v88, %v92
    %vm95 = vcmask 785408
    %v97 = vsel %vm95, %v74, 0
    %v100 = vsel %vm95, %v75, 0
    %102 = vmatprep.subr.mxu0 0.0
    %103 = vmatpush1.msra.mxu0 %v76
    %104 = vmatprep.subr.mxu0 0.0
    %105 = vmatpush1.msra.mxu0 %v77
    %106 = vmatprep.subr.mxu0 0.0
    %107 = vmatpush1.msra.mxu0 %v78
    %108 = vmatprep.subr.mxu0 0.0
    %109 = vmatpush1.msra.mxu0 %v79
    %110 = vmatprep.subr.mxu0 0.0
    %111 = vmatpush1.msra.mxu0 %v80
    %112 = vmatprep.subr.mxu0 0.0
    %113 = vmatpush1.msra.mxu0 %v81
    %114 = vmatprep.subr.mxu0 0.0
    %115 = vmatpush1.msra.mxu0 %v82
    %116 = vmatprep.subr.mxu0 0.0
    %117 = vmatpush1.msra.mxu0 %v83
    %118 = vmatprep.subr.mxu0 0.0
    %119 = vmatpush1.msra.mxu0 %v84
    %120 = vmatprep.subr.mxu0 0.0
    %121 = vmatpush1.msra.mxu0 %v85
    %122 = vmatprep.subr.mxu0 0.0
    %123 = vmatpush1.msra.mxu0 %v86
    %124 = vmatprep.subr.mxu0 0.0
    %125 = vmatpush1.msra.mxu0 %v87
    %126 = vmatprep.subr.mxu0 0.0
    %127 = vmatpush1.msra.mxu0 0.0
    %128 = vmatprep.subr.mxu0 0.0
    %129 = vmatpush1.msra.mxu0 0.0
    %130 = vmatprep.subr.mxu0 0.0
    %131 = vmatpush1.msra.mxu0 0.0
    %132 = vmatprep.subr.mxu0 0.0
    %133 = vmatpush1.msra.mxu0 0.0
    %134 = vmatprep.subr.mxu0 0.0
    %135 = vmatpush1.msra.mxu0 0.0
    %136 = vmatprep.subr.mxu0 0.0
    %137 = vmatpush1.msra.mxu0 0.0
    %138 = vmatprep.subr.mxu0 0.0
    %139 = vmatpush1.msra.mxu0 0.0
    %140 = vmatprep.subr.mxu0 0.0
    %141 = vmatpush1.msra.mxu0 0.0
    %142 = vmatprep.subr.mxu0 0.0
    %143 = vmatpush1.msra.mxu0 0.0
    %144 = vmatprep.subr.mxu0 0.0
    %145 = vmatpush1.msra.mxu0 0.0
    %146 = vmatprep.subr.mxu0 0.0
    %147 = vmatpush1.msra.mxu0 0.0
    %148 = vmatprep.subr.mxu0 0.0
    %149 = vmatpush1.msra.mxu0 0.0
    %150 = vmatprep.subr.mxu0 0.0
    %151 = vmatpush1.msra.mxu0 0.0
    %152 = vmatprep.subr.mxu0 0.0
    %153 = vmatpush1.msra.mxu0 0.0
    %154 = vmatprep.subr.mxu0 0.0
    %155 = vmatpush1.msra.mxu0 0.0
    %156 = vmatprep.subr.mxu0 0.0
    %157 = vmatpush1.msra.mxu0 0.0
    %158 = vmatprep.subr.mxu0 0.0
    %159 = vmatpush1.msra.mxu0 0.0
    %160 = vmatprep.subr.mxu0 0.0
    %161 = vmatpush1.msra.mxu0 0.0
    %162 = vmatprep.subr.mxu0 0.0
    %163 = vmatpush1.msra.mxu0 0.0
    %164 = vmatprep.subr.mxu0 0.0
    %165 = vmatpush1.msra.mxu0 0.0
    %166 = vmatprep.mubr.f32.mxu0 0.0
    %167 = vmatmul.mubr.f32.gmra.mrb[0].mxu0 %v97
    %v168 = vpop.f32.mrb[0].mxu0
    %v169 = vadd.f32 %v93, %v168
    %v170 = vpop.f32.mrb[0].mxu0
    %171 = vmatprep.mubr.f32.mxu0 0.0
    %172 = vmatmul.mubr.f32.gmra.mrb[0].mxu0 %v100
    %v173 = vpop.f32.mrb[0].mxu0
    %v174 = vadd.f32 %v93, %v173
    %v175 = vpop.f32.mrb[0].mxu0
    %176 = vdwg.mxu0
    %s177 = scalar_lea.vmem [#allocation2], 96
    %v178 = vld [vmem:[%s177] sm:$0xff]
    %v179 = vld [vmem:[%s177 + $0x8] sm:$0xff]
    %v180 = vld [vmem:[%s177 + $0x10] sm:$0xff]
    %v181 = vld [vmem:[%s177 + $0x18] sm:$0xff]
    %v182 = vld [vmem:[%s177 + $0x20] sm:$0xff]
    %v183 = vld [vmem:[%s177 + $0x28] sm:$0xff]
    %v184 = vld [vmem:[%s177 + $0x30] sm:$0xff]
    %v185 = vld [vmem:[%s177 + $0x38] sm:$0xff]
    %v186 = vld [vmem:[%s177 + $0x40] sm:$0xff]
    %v187 = vld [vmem:[%s177 + $0x48] sm:$0xff]
    %v188 = vld [vmem:[%s177 + $0x50] sm:$0xff]
    %v189 = vld [vmem:[%s177 + $0x58] sm:$0xff]
    %s190 = scalar_lea.vmem %s3, 1
    %v191 = vld [vmem:[%s190] sm:$0x1]
    %v193 = vlaneseq
    %v194 = vshrl.u32 %v193, 7
    %v195 = vsub.s32 0, %v194
    %v196 = vrot.slane %v191, %v195
    %198 = vmatprep.subr.mxu0 0.0
    %199 = vmatpush1.msra.mxu0 %v178
    %200 = vmatprep.subr.mxu0 0.0
    %201 = vmatpush1.msra.mxu0 %v179
    %202 = vmatprep.subr.mxu0 0.0
    %203 = vmatpush1.msra.mxu0 %v180
    %204 = vmatprep.subr.mxu0 0.0
    %205 = vmatpush1.msra.mxu0 %v181
    %206 = vmatprep.subr.mxu0 0.0
    %207 = vmatpush1.msra.mxu0 %v182
    %208 = vmatprep.subr.mxu0 0.0
    %209 = vmatpush1.msra.mxu0 %v183
    %210 = vmatprep.subr.mxu0 0.0
    %211 = vmatpush1.msra.mxu0 %v184
    %212 = vmatprep.subr.mxu0 0.0
    %213 = vmatpush1.msra.mxu0 %v185
    %214 = vmatprep.subr.mxu0 0.0
    %215 = vmatpush1.msra.mxu0 %v186
    %216 = vmatprep.subr.mxu0 0.0
    %217 = vmatpush1.msra.mxu0 %v187
    %218 = vmatprep.subr.mxu0 0.0
    %219 = vmatpush1.msra.mxu0 %v188
    %220 = vmatprep.subr.mxu0 0.0
    %221 = vmatpush1.msra.mxu0 %v189
    %222 = vmatprep.subr.mxu0 0.0
    %223 = vmatpush1.msra.mxu0 0.0
    %224 = vmatprep.subr.mxu0 0.0
    %225 = vmatpush1.msra.mxu0 0.0
    %226 = vmatprep.subr.mxu0 0.0
    %227 = vmatpush1.msra.mxu0 0.0
    %228 = vmatprep.subr.mxu0 0.0
    %229 = vmatpush1.msra.mxu0 0.0
    %230 = vmatprep.subr.mxu0 0.0
    %231 = vmatpush1.msra.mxu0 0.0
    %232 = vmatprep.subr.mxu0 0.0
    %233 = vmatpush1.msra.mxu0 0.0
    %234 = vmatprep.subr.mxu0 0.0
    %235 = vmatpush1.msra.mxu0 0.0
    %236 = vmatprep.subr.mxu0 0.0
    %237 = vmatpush1.msra.mxu0 0.0
    %238 = vmatprep.subr.mxu0 0.0
    %239 = vmatpush1.msra.mxu0 0.0
    %240 = vmatprep.subr.mxu0 0.0
    %241 = vmatpush1.msra.mxu0 0.0
    %242 = vmatprep.subr.mxu0 0.0
    %243 = vmatpush1.msra.mxu0 0.0
    %244 = vmatprep.subr.mxu0 0.0
    %245 = vmatpush1.msra.mxu0 0.0
    %246 = vmatprep.subr.mxu0 0.0
    %247 = vmatpush1.msra.mxu0 0.0
    %248 = vmatprep.subr.mxu0 0.0
    %249 = vmatpush1.msra.mxu0 0.0
    %250 = vmatprep.subr.mxu0 0.0
    %251 = vmatpush1.msra.mxu0 0.0
    %252 = vmatprep.subr.mxu0 0.0
    %253 = vmatpush1.msra.mxu0 0.0
    %254 = vmatprep.subr.mxu0 0.0
    %255 = vmatpush1.msra.mxu0 0.0
    %256 = vmatprep.subr.mxu0 0.0
    %257 = vmatpush1.msra.mxu0 0.0
    %258 = vmatprep.subr.mxu0 0.0
    %259 = vmatpush1.msra.mxu0 0.0
    %260 = vmatprep.subr.mxu0 0.0
    %261 = vmatpush1.msra.mxu0 0.0
    %262 = vmatprep.mubr.f32.mxu0 0.0
    %263 = vmatmul.mubr.f32.gmra.mrb[0].mxu0 %v97
    %v264 = vpop.f32.mrb[0].mxu0
    %v265 = vadd.f32 %v196, %v264
    %v266 = vpop.f32.mrb[0].mxu0
    %267 = vmatprep.mubr.f32.mxu0 0.0
    %268 = vmatmul.mubr.f32.gmra.mrb[0].mxu0 %v100
    %v269 = vpop.f32.mrb[0].mxu0
    %v270 = vadd.f32 %v196, %v269
    %v271 = vpop.f32.mrb[0].mxu0
    %272 = vdwg.mxu0
    %s273 = scalar_lea.vmem [#allocation2], 192
    %v274 = vld [vmem:[%s273] sm:$0xff]
    %v275 = vld [vmem:[%s273 + $0x8] sm:$0xff]
    %v276 = vld [vmem:[%s273 + $0x10] sm:$0xff]
    %v277 = vld [vmem:[%s273 + $0x18] sm:$0xff]
    %v278 = vld [vmem:[%s273 + $0x20] sm:$0xff]
    %v279 = vld [vmem:[%s273 + $0x28] sm:$0xff]
    %v280 = vld [vmem:[%s273 + $0x30] sm:$0xff]
    %v281 = vld [vmem:[%s273 + $0x38] sm:$0xff]
    %v282 = vld [vmem:[%s273 + $0x40] sm:$0xff]
    %v283 = vld [vmem:[%s273 + $0x48] sm:$0xff]
    %v284 = vld [vmem:[%s273 + $0x50] sm:$0xff]
    %v285 = vld [vmem:[%s273 + $0x58] sm:$0xff]
    %s286 = scalar_lea.vmem %s3, 2
    %v287 = vld [vmem:[%s286] sm:$0x1]
    %v289 = vlaneseq
    %v290 = vshrl.u32 %v289, 7
    %v291 = vsub.s32 0, %v290
    %v292 = vrot.slane %v287, %v291
    %294 = vmatprep.subr.mxu0 0.0
    %295 = vmatpush1.msra.mxu0 %v274
    %296 = vmatprep.subr.mxu0 0.0
    %297 = vmatpush1.msra.mxu0 %v275
    %298 = vmatprep.subr.mxu0 0.0
    %299 = vmatpush1.msra.mxu0 %v276
    %300 = vmatprep.subr.mxu0 0.0
    %301 = vmatpush1.msra.mxu0 %v277
    %302 = vmatprep.subr.mxu0 0.0
    %303 = vmatpush1.msra.mxu0 %v278
    %304 = vmatprep.subr.mxu0 0.0
    %305 = vmatpush1.msra.mxu0 %v279
    %306 = vmatprep.subr.mxu0 0.0
    %307 = vmatpush1.msra.mxu0 %v280
    %308 = vmatprep.subr.mxu0 0.0
    %309 = vmatpush1.msra.mxu0 %v281
    %310 = vmatprep.subr.mxu0 0.0
    %311 = vmatpush1.msra.mxu0 %v282
    %312 = vmatprep.subr.mxu0 0.0
    %313 = vmatpush1.msra.mxu0 %v283
    %314 = vmatprep.subr.mxu0 0.0
    %315 = vmatpush1.msra.mxu0 %v284
    %316 = vmatprep.subr.mxu0 0.0
    %317 = vmatpush1.msra.mxu0 %v285
    %318 = vmatprep.subr.mxu0 0.0
    %319 = vmatpush1.msra.mxu0 0.0
    %320 = vmatprep.subr.mxu0 0.0
    %321 = vmatpush1.msra.mxu0 0.0
    %322 = vmatprep.subr.mxu0 0.0
    %323 = vmatpush1.msra.mxu0 0.0
    %324 = vmatprep.subr.mxu0 0.0
    %325 = vmatpush1.msra.mxu0 0.0
    %326 = vmatprep.subr.mxu0 0.0
    %327 = vmatpush1.msra.mxu0 0.0
    %328 = vmatprep.subr.mxu0 0.0
    %329 = vmatpush1.msra.mxu0 0.0
    %330 = vmatprep.subr.mxu0 0.0
    %331 = vmatpush1.msra.mxu0 0.0
    %332 = vmatprep.subr.mxu0 0.0
    %333 = vmatpush1.msra.mxu0 0.0
    %334 = vmatprep.subr.mxu0 0.0
    %335 = vmatpush1.msra.mxu0 0.0
    %336 = vmatprep.subr.mxu0 0.0
    %337 = vmatpush1.msra.mxu0 0.0
    %338 = vmatprep.subr.mxu0 0.0
    %339 = vmatpush1.msra.mxu0 0.0
    %340 = vmatprep.subr.mxu0 0.0
    %341 = vmatpush1.msra.mxu0 0.0
    %342 = vmatprep.subr.mxu0 0.0
    %343 = vmatpush1.msra.mxu0 0.0
    %344 = vmatprep.subr.mxu0 0.0
    %345 = vmatpush1.msra.mxu0 0.0
    %346 = vmatprep.subr.mxu0 0.0
    %347 = vmatpush1.msra.mxu0 0.0
    %348 = vmatprep.subr.mxu0 0.0
    %349 = vmatpush1.msra.mxu0 0.0
    %350 = vmatprep.subr.mxu0 0.0
    %351 = vmatpush1.msra.mxu0 0.0
    %352 = vmatprep.subr.mxu0 0.0
    %353 = vmatpush1.msra.mxu0 0.0
    %354 = vmatprep.subr.mxu0 0.0
    %355 = vmatpush1.msra.mxu0 0.0
    %356 = vmatprep.subr.mxu0 0.0
    %357 = vmatpush1.msra.mxu0 0.0
    %358 = vmatprep.mubr.f32.mxu0 0.0
    %359 = vmatmul.mubr.f32.gmra.mrb[0].mxu0 %v97
    %v360 = vpop.f32.mrb[0].mxu0
    %v361 = vadd.f32 %v292, %v360
    %v362 = vpop.f32.mrb[0].mxu0
    %363 = vmatprep.mubr.f32.mxu0 0.0
    %364 = vmatmul.mubr.f32.gmra.mrb[0].mxu0 %v100
    %v365 = vpop.f32.mrb[0].mxu0
    %v366 = vadd.f32 %v292, %v365
    %v367 = vpop.f32.mrb[0].mxu0
    %368 = vdwg.mxu0
    %s369 = scalar_lea.vmem [#allocation2], 288
    %v370 = vld [vmem:[%s369] sm:$0xff]
    %v371 = vld [vmem:[%s369 + $0x8] sm:$0xff]
    %v372 = vld [vmem:[%s369 + $0x10] sm:$0xff]
    %v373 = vld [vmem:[%s369 + $0x18] sm:$0xff]
    %v374 = vld [vmem:[%s369 + $0x20] sm:$0xff]
    %v375 = vld [vmem:[%s369 + $0x28] sm:$0xff]
    %v376 = vld [vmem:[%s369 + $0x30] sm:$0xff]
    %v377 = vld [vmem:[%s369 + $0x38] sm:$0xff]
    %v378 = vld [vmem:[%s369 + $0x40] sm:$0xff]
    %v379 = vld [vmem:[%s369 + $0x48] sm:$0xff]
    %v380 = vld [vmem:[%s369 + $0x50] sm:$0xff]
    %v381 = vld [vmem:[%s369 + $0x58] sm:$0xff]
    %s382 = scalar_lea.vmem %s3, 3
    %v383 = vld [vmem:[%s382] sm:$0x1]
    %v385 = vlaneseq
    %v386 = vshrl.u32 %v385, 7
    %v387 = vsub.s32 0, %v386
    %v388 = vrot.slane %v383, %v387
    %390 = vmatprep.subr.mxu0 0.0
    %391 = vmatpush1.msra.mxu0 %v370
    %392 = vmatprep.subr.mxu0 0.0
    %393 = vmatpush1.msra.mxu0 %v371
    %394 = vmatprep.subr.mxu0 0.0
    %395 = vmatpush1.msra.mxu0 %v372
    %396 = vmatprep.subr.mxu0 0.0
    %397 = vmatpush1.msra.mxu0 %v373
    %398 = vmatprep.subr.mxu0 0.0
    %399 = vmatpush1.msra.mxu0 %v374
    %400 = vmatprep.subr.mxu0 0.0
    %401 = vmatpush1.msra.mxu0 %v375
    %402 = vmatprep.subr.mxu0 0.0
    %403 = vmatpush1.msra.mxu0 %v376
    %404 = vmatprep.subr.mxu0 0.0
    %405 = vmatpush1.msra.mxu0 %v377
    %406 = vmatprep.subr.mxu0 0.0
    %407 = vmatpush1.msra.mxu0 %v378
    %408 = vmatprep.subr.mxu0 0.0
    %409 = vmatpush1.msra.mxu0 %v379
    %410 = vmatprep.subr.mxu0 0.0
    %411 = vmatpush1.msra.mxu0 %v380
    %412 = vmatprep.subr.mxu0 0.0
    %413 = vmatpush1.msra.mxu0 %v381
    %414 = vmatprep.subr.mxu0 0.0
    %415 = vmatpush1.msra.mxu0 0.0
    %416 = vmatprep.subr.mxu0 0.0
    %417 = vmatpush1.msra.mxu0 0.0
    %418 = vmatprep.subr.mxu0 0.0
    %419 = vmatpush1.msra.mxu0 0.0
    %420 = vmatprep.subr.mxu0 0.0
    %421 = vmatpush1.msra.mxu0 0.0
    %422 = vmatprep.subr.mxu0 0.0
    %423 = vmatpush1.msra.mxu0 0.0
    %424 = vmatprep.subr.mxu0 0.0
    %425 = vmatpush1.msra.mxu0 0.0
    %426 = vmatprep.subr.mxu0 0.0
    %427 = vmatpush1.msra.mxu0 0.0
    %428 = vmatprep.subr.mxu0 0.0
    %429 = vmatpush1.msra.mxu0 0.0
    %430 = vmatprep.subr.mxu0 0.0
    %431 = vmatpush1.msra.mxu0 0.0
    %432 = vmatprep.subr.mxu0 0.0
    %433 = vmatpush1.msra.mxu0 0.0
    %434 = vmatprep.subr.mxu0 0.0
    %435 = vmatpush1.msra.mxu0 0.0
    %436 = vmatprep.subr.mxu0 0.0
    %437 = vmatpush1.msra.mxu0 0.0
    %438 = vmatprep.subr.mxu0 0.0
    %439 = vmatpush1.msra.mxu0 0.0
    %440 = vmatprep.subr.mxu0 0.0
    %441 = vmatpush1.msra.mxu0 0.0
    %442 = vmatprep.subr.mxu0 0.0
    %443 = vmatpush1.msra.mxu0 0.0
    %444 = vmatprep.subr.mxu0 0.0
    %445 = vmatpush1.msra.mxu0 0.0
    %446 = vmatprep.subr.mxu0 0.0
    %447 = vmatpush1.msra.mxu0 0.0
    %448 = vmatprep.subr.mxu0 0.0
    %449 = vmatpush1.msra.mxu0 0.0
    %450 = vmatprep.subr.mxu0 0.0
    %451 = vmatpush1.msra.mxu0 0.0
    %452 = vmatprep.subr.mxu0 0.0
    %453 = vmatpush1.msra.mxu0 0.0
    %454 = vmatprep.mubr.f32.mxu0 0.0
    %455 = vmatmul.mubr.f32.gmra.mrb[0].mxu0 %v97
    %v456 = vpop.f32.mrb[0].mxu0
    %v457 = vadd.f32 %v388, %v456
    %v458 = vpop.f32.mrb[0].mxu0
    %459 = vmatprep.mubr.f32.mxu0 0.0
    %460 = vmatmul.mubr.f32.gmra.mrb[0].mxu0 %v100
    %v461 = vpop.f32.mrb[0].mxu0
    %v462 = vadd.f32 %v388, %v461
    %v463 = vpop.f32.mrb[0].mxu0
    %464 = vdwg.mxu0
    %v465 = vld [vmem:[#allocation6] sm:$0xff]
    %v466 = vld [vmem:[#allocation6 + $0x8] sm:$0xff]
    %v467 = vld [vmem:[#allocation6 + $0x10] sm:$0xff]
    %v468 = vld [vmem:[#allocation6 + $0x18] sm:$0xff]
    %v469 = vld [vmem:[#allocation6 + $0x20] sm:$0xff]
    %v470 = vld [vmem:[#allocation6 + $0x28] sm:$0xff]
    %v471 = vld [vmem:[#allocation6 + $0x30] sm:$0xff]
    %v472 = vld [vmem:[#allocation6 + $0x38] sm:$0xff]
    %v473 = vld [vmem:[#allocation6 + $0x40] sm:$0xff]
    %v474 = vld [vmem:[#allocation6 + $0x48] sm:$0xff]
    %v475 = vld [vmem:[#allocation6 + $0x50] sm:$0xff]
    %v476 = vld [vmem:[#allocation6 + $0x58] sm:$0xff]
    %s477 = scalar_lea.vmem [#allocation6], 96
    %v478 = vld [vmem:[%s477] sm:$0xff]
    %v479 = vld [vmem:[%s477 + $0x8] sm:$0xff]
    %v480 = vld [vmem:[%s477 + $0x10] sm:$0xff]
    %v481 = vld [vmem:[%s477 + $0x18] sm:$0xff]
    %v482 = vld [vmem:[%s477 + $0x20] sm:$0xff]
    %v483 = vld [vmem:[%s477 + $0x28] sm:$0xff]
    %v484 = vld [vmem:[%s477 + $0x30] sm:$0xff]
    %v485 = vld [vmem:[%s477 + $0x38] sm:$0xff]
    %v486 = vld [vmem:[%s477 + $0x40] sm:$0xff]
    %v487 = vld [vmem:[%s477 + $0x48] sm:$0xff]
    %v488 = vld [vmem:[%s477 + $0x50] sm:$0xff]
    %v489 = vld [vmem:[%s477 + $0x58] sm:$0xff]
    %s490 = scalar_lea.vmem [#allocation6], 192
    %v491 = vld [vmem:[%s490] sm:$0xff]
    %v492 = vld [vmem:[%s490 + $0x8] sm:$0xff]
    %v493 = vld [vmem:[%s490 + $0x10] sm:$0xff]
    %v494 = vld [vmem:[%s490 + $0x18] sm:$0xff]
    %v495 = vld [vmem:[%s490 + $0x20] sm:$0xff]
    %v496 = vld [vmem:[%s490 + $0x28] sm:$0xff]
    %v497 = vld [vmem:[%s490 + $0x30] sm:$0xff]
    %v498 = vld [vmem:[%s490 + $0x38] sm:$0xff]
    %v499 = vld [vmem:[%s490 + $0x40] sm:$0xff]
    %v500 = vld [vmem:[%s490 + $0x48] sm:$0xff]
    %v501 = vld [vmem:[%s490 + $0x50] sm:$0xff]
    %v502 = vld [vmem:[%s490 + $0x58] sm:$0xff]
    %s503 = scalar_lea.vmem [#allocation6], 288
    %v504 = vld [vmem:[%s503] sm:$0xff]
    %v505 = vld [vmem:[%s503 + $0x8] sm:$0xff]
    %v506 = vld [vmem:[%s503 + $0x10] sm:$0xff]
    %v507 = vld [vmem:[%s503 + $0x18] sm:$0xff]
    %v508 = vld [vmem:[%s503 + $0x20] sm:$0xff]
    %v509 = vld [vmem:[%s503 + $0x28] sm:$0xff]
    %v510 = vld [vmem:[%s503 + $0x30] sm:$0xff]
    %v511 = vld [vmem:[%s503 + $0x38] sm:$0xff]
    %v512 = vld [vmem:[%s503 + $0x40] sm:$0xff]
    %v513 = vld [vmem:[%s503 + $0x48] sm:$0xff]
    %v514 = vld [vmem:[%s503 + $0x50] sm:$0xff]
    %v515 = vld [vmem:[%s503 + $0x58] sm:$0xff]
    %v516 = vlaneseq
    %v517 = vshrl.u32 %v516, 7
    %v518 = vlaneseq
    %v519 = vand.u32 %v518, 127
    %vm520 = vcmp.ge.s32.totalorder %v519, 0
    %vm521 = vcmp.lt.s32.totalorder %v519, 32
    %vm522 = vmand %vm520, %vm521
    %vm523 = vcmp.eq.s32.totalorder %v517, 0
    %vm524 = vmand %vm522, %vm523
    %s525 = sld [smem:[#allocation8]]
    %v526 = vstv %s525
    %v527 = vsel %vm524, %v526, 0
    %vm528 = vcmp.eq.s32.totalorder %v517, 1
    %vm529 = vmand %vm522, %vm528
    %s530 = sld [smem:[#allocation8 + $0x1]]
    %v531 = vstv %s530
    %v532 = vsel %vm529, %v531, %v527
    %vm533 = vcmp.ge.s32.totalorder %v519, 32
    %vm534 = vcmp.lt.s32.totalorder %v519, 64
    %vm535 = vmand %vm533, %vm534
    %vm536 = vmand %vm535, %vm523
    %s537 = sld [smem:[#allocation8 + $0x2]]
    %v538 = vstv %s537
    %v539 = vsel %vm536, %v538, %v532
    %vm540 = vmand %vm535, %vm528
    %s541 = sld [smem:[#allocation8 + $0x3]]
    %v542 = vstv %s541
    %v543 = vsel %vm540, %v542, %v539
    %vm544 = vcmp.ge.s32.totalorder %v519, 64
    %vm545 = vcmp.lt.s32.totalorder %v519, 96
    %vm546 = vmand %vm544, %vm545
    %vm547 = vmand %vm546, %vm523
    %s548 = sld [smem:[#allocation8 + $0x4]]
    %v549 = vstv %s548
    %v550 = vsel %vm547, %v549, %v543
    %vm551 = vmand %vm546, %vm528
    %s552 = sld [smem:[#allocation8 + $0x5]]
    %v553 = vstv %s552
    %v554 = vsel %vm551, %v553, %v550
    %v556 = vsel %vm95, 0.0, 0
    %558 = vmatprep.subr.mxu0 0.0
    %559 = vmatpush1.msra.mxu0 %v465
    %560 = vmatprep.subr.mxu0 0.0
    %561 = vmatpush1.msra.mxu0 %v466
    %562 = vmatprep.subr.mxu0 0.0
    %563 = vmatpush1.msra.mxu0 %v467
    %564 = vmatprep.subr.mxu0 0.0
    %565 = vmatpush1.msra.mxu0 %v468
    %566 = vmatprep.subr.mxu0 0.0
    %567 = vmatpush1.msra.mxu0 %v469
    %568 = vmatprep.subr.mxu0 0.0
    %569 = vmatpush1.msra.mxu0 %v470
    %570 = vmatprep.subr.mxu0 0.0
    %571 = vmatpush1.msra.mxu0 %v471
    %572 = vmatprep.subr.mxu0 0.0
    %573 = vmatpush1.msra.mxu0 %v472
    %574 = vmatprep.subr.mxu0 0.0
    %575 = vmatpush1.msra.mxu0 %v473
    %576 = vmatprep.subr.mxu0 0.0
    %577 = vmatpush1.msra.mxu0 %v474
    %578 = vmatprep.subr.mxu0 0.0
    %579 = vmatpush1.msra.mxu0 %v475
    %580 = vmatprep.subr.mxu0 0.0
    %581 = vmatpush1.msra.mxu0 %v476
    %582 = vmatprep.subr.mxu0 0.0
    %583 = vmatpush1.msra.mxu0 0.0
    %584 = vmatprep.subr.mxu0 0.0
    %585 = vmatpush1.msra.mxu0 0.0
    %586 = vmatprep.subr.mxu0 0.0
    %587 = vmatpush1.msra.mxu0 0.0
    %588 = vmatprep.subr.mxu0 0.0
    %589 = vmatpush1.msra.mxu0 0.0
    %590 = vmatprep.subr.mxu0 0.0
    %591 = vmatpush1.msra.mxu0 0.0
    %592 = vmatprep.subr.mxu0 0.0
    %593 = vmatpush1.msra.mxu0 0.0
    %594 = vmatprep.subr.mxu0 0.0
    %595 = vmatpush1.msra.mxu0 0.0
    %596 = vmatprep.subr.mxu0 0.0
    %597 = vmatpush1.msra.mxu0 0.0
    %598 = vmatprep.subr.mxu0 0.0
    %599 = vmatpush1.msra.mxu0 0.0
    %600 = vmatprep.subr.mxu0 0.0
    %601 = vmatpush1.msra.mxu0 0.0
    %602 = vmatprep.subr.mxu0 0.0
    %603 = vmatpush1.msra.mxu0 0.0
    %604 = vmatprep.subr.mxu0 0.0
    %605 = vmatpush1.msra.mxu0 0.0
    %606 = vmatprep.subr.mxu0 0.0
    %607 = vmatpush1.msra.mxu0 0.0
    %608 = vmatprep.subr.mxu0 0.0
    %609 = vmatpush1.msra.mxu0 0.0
    %610 = vmatprep.subr.mxu0 0.0
    %611 = vmatpush1.msra.mxu0 0.0
    %612 = vmatprep.subr.mxu0 0.0
    %613 = vmatpush1.msra.mxu0 0.0
    %614 = vmatprep.subr.mxu0 0.0
    %615 = vmatpush1.msra.mxu0 0.0
    %616 = vmatprep.subr.mxu0 0.0
    %617 = vmatpush1.msra.mxu0 0.0
    %618 = vmatprep.subr.mxu0 0.0
    %619 = vmatpush1.msra.mxu0 0.0
    %620 = vmatprep.subr.mxu0 0.0
    %621 = vmatpush1.msra.mxu0 0.0
    %622 = vmatprep.mubr.f32.mxu0 0.0
    %623 = vmatmul.mubr.f32.gmra.mrb[0].mxu0 %v556
    %v624 = vpop.f32.mrb[0].mxu0
    %v625 = vadd.f32 0.0, %v624
    %v626 = vpop.f32.mrb[0].mxu0
    %627 = vdwg.mxu0
    %v628 = vadd.f32 %v169, %v625
    %629 = vmatprep.subr.mxu0 0.0
    %630 = vmatpush1.msra.mxu0 %v478
    %631 = vmatprep.subr.mxu0 0.0
    %632 = vmatpush1.msra.mxu0 %v479
    %633 = vmatprep.subr.mxu0 0.0
    %634 = vmatpush1.msra.mxu0 %v480
    %635 = vmatprep.subr.mxu0 0.0
    %636 = vmatpush1.msra.mxu0 %v481
    %637 = vmatprep.subr.mxu0 0.0
    %638 = vmatpush1.msra.mxu0 %v482
    %639 = vmatprep.subr.mxu0 0.0
    %640 = vmatpush1.msra.mxu0 %v483
    %641 = vmatprep.subr.mxu0 0.0
    %642 = vmatpush1.msra.mxu0 %v484
    %643 = vmatprep.subr.mxu0 0.0
    %644 = vmatpush1.msra.mxu0 %v485
    %645 = vmatprep.subr.mxu0 0.0
    %646 = vmatpush1.msra.mxu0 %v486
    %647 = vmatprep.subr.mxu0 0.0
    %648 = vmatpush1.msra.mxu0 %v487
    %649 = vmatprep.subr.mxu0 0.0
    %650 = vmatpush1.msra.mxu0 %v488
    %651 = vmatprep.subr.mxu0 0.0
    %652 = vmatpush1.msra.mxu0 %v489
    %653 = vmatprep.subr.mxu0 0.0
    %654 = vmatpush1.msra.mxu0 0.0
    %655 = vmatprep.subr.mxu0 0.0
    %656 = vmatpush1.msra.mxu0 0.0
    %657 = vmatprep.subr.mxu0 0.0
    %658 = vmatpush1.msra.mxu0 0.0
    %659 = vmatprep.subr.mxu0 0.0
    %660 = vmatpush1.msra.mxu0 0.0
    %661 = vmatprep.subr.mxu0 0.0
    %662 = vmatpush1.msra.mxu0 0.0
    %663 = vmatprep.subr.mxu0 0.0
    %664 = vmatpush1.msra.mxu0 0.0
    %665 = vmatprep.subr.mxu0 0.0
    %666 = vmatpush1.msra.mxu0 0.0
    %667 = vmatprep.subr.mxu0 0.0
    %668 = vmatpush1.msra.mxu0 0.0
    %669 = vmatprep.subr.mxu0 0.0
    %670 = vmatpush1.msra.mxu0 0.0
    %671 = vmatprep.subr.mxu0 0.0
    %672 = vmatpush1.msra.mxu0 0.0
    %673 = vmatprep.subr.mxu0 0.0
    %674 = vmatpush1.msra.mxu0 0.0
    %675 = vmatprep.subr.mxu0 0.0
    %676 = vmatpush1.msra.mxu0 0.0
    %677 = vmatprep.subr.mxu0 0.0
    %678 = vmatpush1.msra.mxu0 0.0
    %679 = vmatprep.subr.mxu0 0.0
    %680 = vmatpush1.msra.mxu0 0.0
    %681 = vmatprep.subr.mxu0 0.0
    %682 = vmatpush1.msra.mxu0 0.0
    %683 = vmatprep.subr.mxu0 0.0
    %684 = vmatpush1.msra.mxu0 0.0
    %685 = vmatprep.subr.mxu0 0.0
    %686 = vmatpush1.msra.mxu0 0.0
    %687 = vmatprep.subr.mxu0 0.0
    %688 = vmatpush1.msra.mxu0 0.0
    %689 = vmatprep.subr.mxu0 0.0
    %690 = vmatpush1.msra.mxu0 0.0
    %691 = vmatprep.subr.mxu0 0.0
    %692 = vmatpush1.msra.mxu0 0.0
    %693 = vmatprep.mubr.f32.mxu0 0.0
    %694 = vmatmul.mubr.f32.gmra.mrb[0].mxu0 %v556
    %v695 = vpop.f32.mrb[0].mxu0
    %v696 = vadd.f32 0.0, %v695
    %v697 = vpop.f32.mrb[0].mxu0
    %698 = vdwg.mxu0
    %v699 = vadd.f32 %v265, %v696
    %700 = vmatprep.subr.mxu0 0.0
    %701 = vmatpush1.msra.mxu0 %v491
    %702 = vmatprep.subr.mxu0 0.0
    %703 = vmatpush1.msra.mxu0 %v492
    %704 = vmatprep.subr.mxu0 0.0
    %705 = vmatpush1.msra.mxu0 %v493
    %706 = vmatprep.subr.mxu0 0.0
    %707 = vmatpush1.msra.mxu0 %v494
    %708 = vmatprep.subr.mxu0 0.0
    %709 = vmatpush1.msra.mxu0 %v495
    %710 = vmatprep.subr.mxu0 0.0
    %711 = vmatpush1.msra.mxu0 %v496
    %712 = vmatprep.subr.mxu0 0.0
    %713 = vmatpush1.msra.mxu0 %v497
    %714 = vmatprep.subr.mxu0 0.0
    %715 = vmatpush1.msra.mxu0 %v498
    %716 = vmatprep.subr.mxu0 0.0
    %717 = vmatpush1.msra.mxu0 %v499
    %718 = vmatprep.subr.mxu0 0.0
    %719 = vmatpush1.msra.mxu0 %v500
    %720 = vmatprep.subr.mxu0 0.0
    %721 = vmatpush1.msra.mxu0 %v501
    %722 = vmatprep.subr.mxu0 0.0
    %723 = vmatpush1.msra.mxu0 %v502
    %724 = vmatprep.subr.mxu0 0.0
    %725 = vmatpush1.msra.mxu0 0.0
    %726 = vmatprep.subr.mxu0 0.0
    %727 = vmatpush1.msra.mxu0 0.0
    %728 = vmatprep.subr.mxu0 0.0
    %729 = vmatpush1.msra.mxu0 0.0
    %730 = vmatprep.subr.mxu0 0.0
    %731 = vmatpush1.msra.mxu0 0.0
    %732 = vmatprep.subr.mxu0 0.0
    %733 = vmatpush1.msra.mxu0 0.0
    %734 = vmatprep.subr.mxu0 0.0
    %735 = vmatpush1.msra.mxu0 0.0
    %736 = vmatprep.subr.mxu0 0.0
    %737 = vmatpush1.msra.mxu0 0.0
    %738 = vmatprep.subr.mxu0 0.0
    %739 = vmatpush1.msra.mxu0 0.0
    %740 = vmatprep.subr.mxu0 0.0
    %741 = vmatpush1.msra.mxu0 0.0
    %742 = vmatprep.subr.mxu0 0.0
    %743 = vmatpush1.msra.mxu0 0.0
    %744 = vmatprep.subr.mxu0 0.0
    %745 = vmatpush1.msra.mxu0 0.0
    %746 = vmatprep.subr.mxu0 0.0
    %747 = vmatpush1.msra.mxu0 0.0
    %748 = vmatprep.subr.mxu0 0.0
    %749 = vmatpush1.msra.mxu0 0.0
    %750 = vmatprep.subr.mxu0 0.0
    %751 = vmatpush1.msra.mxu0 0.0
    %752 = vmatprep.subr.mxu0 0.0
    %753 = vmatpush1.msra.mxu0 0.0
    %754 = vmatprep.subr.mxu0 0.0
    %755 = vmatpush1.msra.mxu0 0.0
    %756 = vmatprep.subr.mxu0 0.0
    %757 = vmatpush1.msra.mxu0 0.0
    %758 = vmatprep.subr.mxu0 0.0
    %759 = vmatpush1.msra.mxu0 0.0
    %760 = vmatprep.subr.mxu0 0.0
    %761 = vmatpush1.msra.mxu0 0.0
    %762 = vmatprep.subr.mxu0 0.0
    %763 = vmatpush1.msra.mxu0 0.0
    %764 = vmatprep.mubr.f32.mxu0 0.0
    %765 = vmatmul.mubr.f32.gmra.mrb[0].mxu0 %v556
    %v766 = vpop.f32.mrb[0].mxu0
    %v767 = vadd.f32 0.0, %v766
    %v768 = vpop.f32.mrb[0].mxu0
    %769 = vdwg.mxu0
    %v770 = vadd.f32 %v361, %v767
    %771 = vmatprep.subr.mxu0 0.0
    %772 = vmatpush1.msra.mxu0 %v504
    %773 = vmatprep.subr.mxu0 0.0
    %774 = vmatpush1.msra.mxu0 %v505
    %775 = vmatprep.subr.mxu0 0.0
    %776 = vmatpush1.msra.mxu0 %v506
    %777 = vmatprep.subr.mxu0 0.0
    %778 = vmatpush1.msra.mxu0 %v507
    %779 = vmatprep.subr.mxu0 0.0
    %780 = vmatpush1.msra.mxu0 %v508
    %781 = vmatprep.subr.mxu0 0.0
    %782 = vmatpush1.msra.mxu0 %v509
    %783 = vmatprep.subr.mxu0 0.0
    %784 = vmatpush1.msra.mxu0 %v510
    %785 = vmatprep.subr.mxu0 0.0
    %786 = vmatpush1.msra.mxu0 %v511
    %787 = vmatprep.subr.mxu0 0.0
    %788 = vmatpush1.msra.mxu0 %v512
    %789 = vmatprep.subr.mxu0 0.0
    %790 = vmatpush1.msra.mxu0 %v513
    %791 = vmatprep.subr.mxu0 0.0
    %792 = vmatpush1.msra.mxu0 %v514
    %793 = vmatprep.subr.mxu0 0.0
    %794 = vmatpush1.msra.mxu0 %v515
    %795 = vmatprep.subr.mxu0 0.0
    %796 = vmatpush1.msra.mxu0 0.0
    %797 = vmatprep.subr.mxu0 0.0
    %798 = vmatpush1.msra.mxu0 0.0
    %799 = vmatprep.subr.mxu0 0.0
    %800 = vmatpush1.msra.mxu0 0.0
    %801 = vmatprep.subr.mxu0 0.0
    %802 = vmatpush1.msra.mxu0 0.0
    %803 = vmatprep.subr.mxu0 0.0
    %804 = vmatpush1.msra.mxu0 0.0
    %805 = vmatprep.subr.mxu0 0.0
    %806 = vmatpush1.msra.mxu0 0.0
    %807 = vmatprep.subr.mxu0 0.0
    %808 = vmatpush1.msra.mxu0 0.0
    %809 = vmatprep.subr.mxu0 0.0
    %810 = vmatpush1.msra.mxu0 0.0
    %811 = vmatprep.subr.mxu0 0.0
    %812 = vmatpush1.msra.mxu0 0.0
    %813 = vmatprep.subr.mxu0 0.0
    %814 = vmatpush1.msra.mxu0 0.0
    %815 = vmatprep.subr.mxu0 0.0
    %816 = vmatpush1.msra.mxu0 0.0
    %817 = vmatprep.subr.mxu0 0.0
    %818 = vmatpush1.msra.mxu0 0.0
    %819 = vmatprep.subr.mxu0 0.0
    %820 = vmatpush1.msra.mxu0 0.0
    %821 = vmatprep.subr.mxu0 0.0
    %822 = vmatpush1.msra.mxu0 0.0
    %823 = vmatprep.subr.mxu0 0.0
    %824 = vmatpush1.msra.mxu0 0.0
    %825 = vmatprep.subr.mxu0 0.0
    %826 = vmatpush1.msra.mxu0 0.0
    %827 = vmatprep.subr.mxu0 0.0
    %828 = vmatpush1.msra.mxu0 0.0
    %829 = vmatprep.subr.mxu0 0.0
    %830 = vmatpush1.msra.mxu0 0.0
    %831 = vmatprep.subr.mxu0 0.0
    %832 = vmatpush1.msra.mxu0 0.0
    %833 = vmatprep.subr.mxu0 0.0
    %834 = vmatpush1.msra.mxu0 0.0
    %835 = vmatprep.mubr.f32.mxu0 0.0
    %836 = vmatmul.mubr.f32.gmra.mrb[0].mxu0 %v556
    %v837 = vpop.f32.mrb[0].mxu0
    %v838 = vadd.f32 0.0, %v837
    %v839 = vpop.f32.mrb[0].mxu0
    %840 = vdwg.mxu0
    %v841 = vadd.f32 %v457, %v838
    %v842 = vxor.u32 %v628, 2147483648
    %v843 = vmul.f32 %v842, 1.442695
    %v844 = vpow.pop %v843
    %v845 = vadd.f32 %v844, 1.0
    %v846 = vrcp.pop %v845
    %v847 = vmul.f32 1.0, %v846
    %v848 = vxor.u32 %v699, 2147483648
    %v849 = vmul.f32 %v848, 1.442695
    %v850 = vpow.pop %v849
    %v851 = vadd.f32 %v850, 1.0
    %v852 = vrcp.pop %v851
    %v853 = vmul.f32 1.0, %v852
    %v854 = vtanh.pop %v770
    %v855 = vxor.u32 %v841, 2147483648
    %v856 = vmul.f32 %v855, 1.442695
    %v857 = vpow.pop %v856
    %v858 = vadd.f32 %v857, 1.0
    %v859 = vrcp.pop %v858
    %v860 = vmul.f32 1.0, %v859
    %v861 = vmul.f32 %v853, 0.0
    %v862 = vmul.f32 %v847, %v854
    %v863 = vadd.f32 %v861, %v862
    %v864 = vtanh.pop %v863
    %v865 = vmul.f32 %v860, %v864
    %vm866 = vcmp.gt.s32.totalorder %v554, 0
    %v867 = vsel %vm866, %v863, 0.0
    %v868 = vsel %vm866, %v865, 0.0
    %v870 = vsel %vm95, %v868, 0
    %872 = vmatprep.subr.mxu0 0.0
    %873 = vmatpush1.msra.mxu0 %v465
    %874 = vmatprep.subr.mxu0 0.0
    %875 = vmatpush1.msra.mxu0 %v466
    %876 = vmatprep.subr.mxu0 0.0
    %877 = vmatpush1.msra.mxu0 %v467
    %878 = vmatprep.subr.mxu0 0.0
    %879 = vmatpush1.msra.mxu0 %v468
    %880 = vmatprep.subr.mxu0 0.0
    %881 = vmatpush1.msra.mxu0 %v469
    %882 = vmatprep.subr.mxu0 0.0
    %883 = vmatpush1.msra.mxu0 %v470
    %884 = vmatprep.subr.mxu0 0.0
    %885 = vmatpush1.msra.mxu0 %v471
    %886 = vmatprep.subr.mxu0 0.0
    %887 = vmatpush1.msra.mxu0 %v472
    %888 = vmatprep.subr.mxu0 0.0
    %889 = vmatpush1.msra.mxu0 %v473
    %890 = vmatprep.subr.mxu0 0.0
    %891 = vmatpush1.msra.mxu0 %v474
    %892 = vmatprep.subr.mxu0 0.0
    %893 = vmatpush1.msra.mxu0 %v475
    %894 = vmatprep.subr.mxu0 0.0
    %895 = vmatpush1.msra.mxu0 %v476
    %896 = vmatprep.subr.mxu0 0.0
    %897 = vmatpush1.msra.mxu0 0.0
    %898 = vmatprep.subr.mxu0 0.0
    %899 = vmatpush1.msra.mxu0 0.0
    %900 = vmatprep.subr.mxu0 0.0
    %901 = vmatpush1.msra.mxu0 0.0
    %902 = vmatprep.subr.mxu0 0.0
    %903 = vmatpush1.msra.mxu0 0.0
    %904 = vmatprep.subr.mxu0 0.0
    %905 = vmatpush1.msra.mxu0 0.0
    %906 = vmatprep.subr.mxu0 0.0
    %907 = vmatpush1.msra.mxu0 0.0
    %908 = vmatprep.subr.mxu0 0.0
    %909 = vmatpush1.msra.mxu0 0.0
    %910 = vmatprep.subr.mxu0 0.0
    %911 = vmatpush1.msra.mxu0 0.0
    %912 = vmatprep.subr.mxu0 0.0
    %913 = vmatpush1.msra.mxu0 0.0
    %914 = vmatprep.subr.mxu0 0.0
    %915 = vmatpush1.msra.mxu0 0.0
    %916 = vmatprep.subr.mxu0 0.0
    %917 = vmatpush1.msra.mxu0 0.0
    %918 = vmatprep.subr.mxu0 0.0
    %919 = vmatpush1.msra.mxu0 0.0
    %920 = vmatprep.subr.mxu0 0.0
    %921 = vmatpush1.msra.mxu0 0.0
    %922 = vmatprep.subr.mxu0 0.0
    %923 = vmatpush1.msra.mxu0 0.0
    %924 = vmatprep.subr.mxu0 0.0
    %925 = vmatpush1.msra.mxu0 0.0
    %926 = vmatprep.subr.mxu0 0.0
    %927 = vmatpush1.msra.mxu0 0.0
    %928 = vmatprep.subr.mxu0 0.0
    %929 = vmatpush1.msra.mxu0 0.0
    %930 = vmatprep.subr.mxu0 0.0
    %931 = vmatpush1.msra.mxu0 0.0
    %932 = vmatprep.subr.mxu0 0.0
    %933 = vmatpush1.msra.mxu0 0.0
    %934 = vmatprep.subr.mxu0 0.0
    %935 = vmatpush1.msra.mxu0 0.0
    %936 = vmatprep.mubr.f32.mxu0 0.0
    %937 = vmatmul.mubr.f32.gmra.mrb[0].mxu0 %v870
    %v938 = vpop.f32.mrb[0].mxu0
    %v939 = vadd.f32 0.0, %v938
    %v940 = vpop.f32.mrb[0].mxu0
    %941 = vdwg.mxu0
    %v943 = vrot.slane %v939, 6
    %v945 = vadd.f32 %v169, %v943
    %946 = vmatprep.subr.mxu0 0.0
    %947 = vmatpush1.msra.mxu0 %v478
    %948 = vmatprep.subr.mxu0 0.0
    %949 = vmatpush1.msra.mxu0 %v479
    %950 = vmatprep.subr.mxu0 0.0
    %951 = vmatpush1.msra.mxu0 %v480
    %952 = vmatprep.subr.mxu0 0.0
    %953 = vmatpush1.msra.mxu0 %v481
    %954 = vmatprep.subr.mxu0 0.0
    %955 = vmatpush1.msra.mxu0 %v482
    %956 = vmatprep.subr.mxu0 0.0
    %957 = vmatpush1.msra.mxu0 %v483
    %958 = vmatprep.subr.mxu0 0.0
    %959 = vmatpush1.msra.mxu0 %v484
    %960 = vmatprep.subr.mxu0 0.0
    %961 = vmatpush1.msra.mxu0 %v485
    %962 = vmatprep.subr.mxu0 0.0
    %963 = vmatpush1.msra.mxu0 %v486
    %964 = vmatprep.subr.mxu0 0.0
    %965 = vmatpush1.msra.mxu0 %v487
    %966 = vmatprep.subr.mxu0 0.0
    %967 = vmatpush1.msra.mxu0 %v488
    %968 = vmatprep.subr.mxu0 0.0
    %969 = vmatpush1.msra.mxu0 %v489
    %970 = vmatprep.subr.mxu0 0.0
    %971 = vmatpush1.msra.mxu0 0.0
    %972 = vmatprep.subr.mxu0 0.0
    %973 = vmatpush1.msra.mxu0 0.0
    %974 = vmatprep.subr.mxu0 0.0
    %975 = vmatpush1.msra.mxu0 0.0
    %976 = vmatprep.subr.mxu0 0.0
    %977 = vmatpush1.msra.mxu0 0.0
    %978 = vmatprep.subr.mxu0 0.0
    %979 = vmatpush1.msra.mxu0 0.0
    %980 = vmatprep.subr.mxu0 0.0
    %981 = vmatpush1.msra.mxu0 0.0
    %982 = vmatprep.subr.mxu0 0.0
    %983 = vmatpush1.msra.mxu0 0.0
    %984 = vmatprep.subr.mxu0 0.0
    %985 = vmatpush1.msra.mxu0 0.0
    %986 = vmatprep.subr.mxu0 0.0
    %987 = vmatpush1.msra.mxu0 0.0
    %988 = vmatprep.subr.mxu0 0.0
    %989 = vmatpush1.msra.mxu0 0.0
    %990 = vmatprep.subr.mxu0 0.0
    %991 = vmatpush1.msra.mxu0 0.0
    %992 = vmatprep.subr.mxu0 0.0
    %993 = vmatpush1.msra.mxu0 0.0
    %994 = vmatprep.subr.mxu0 0.0
    %995 = vmatpush1.msra.mxu0 0.0
    %996 = vmatprep.subr.mxu0 0.0
    %997 = vmatpush1.msra.mxu0 0.0
    %998 = vmatprep.subr.mxu0 0.0
    %999 = vmatpush1.msra.mxu0 0.0
    %1000 = vmatprep.subr.mxu0 0.0
    %1001 = vmatpush1.msra.mxu0 0.0
    %1002 = vmatprep.subr.mxu0 0.0
    %1003 = vmatpush1.msra.mxu0 0.0
    %1004 = vmatprep.subr.mxu0 0.0
    %1005 = vmatpush1.msra.mxu0 0.0
    %1006 = vmatprep.subr.mxu0 0.0
    %1007 = vmatpush1.msra.mxu0 0.0
    %1008 = vmatprep.subr.mxu0 0.0
    %1009 = vmatpush1.msra.mxu0 0.0
    %1010 = vmatprep.mubr.f32.mxu0 0.0
    %1011 = vmatmul.mubr.f32.gmra.mrb[0].mxu0 %v870
    %v1012 = vpop.f32.mrb[0].mxu0
    %v1013 = vadd.f32 0.0, %v1012
    %v1014 = vpop.f32.mrb[0].mxu0
    %1015 = vdwg.mxu0
    %v1017 = vrot.slane %v1013, 6
    %v1019 = vadd.f32 %v265, %v1017
    %1020 = vmatprep.subr.mxu0 0.0
    %1021 = vmatpush1.msra.mxu0 %v491
    %1022 = vmatprep.subr.mxu0 0.0
    %1023 = vmatpush1.msra.mxu0 %v492
    %1024 = vmatprep.subr.mxu0 0.0
    %1025 = vmatpush1.msra.mxu0 %v493
    %1026 = vmatprep.subr.mxu0 0.0
    %1027 = vmatpush1.msra.mxu0 %v494
    %1028 = vmatprep.subr.mxu0 0.0
    %1029 = vmatpush1.msra.mxu0 %v495
    %1030 = vmatprep.subr.mxu0 0.0
    %1031 = vmatpush1.msra.mxu0 %v496
    %1032 = vmatprep.subr.mxu0 0.0
    %1033 = vmatpush1.msra.mxu0 %v497
    %1034 = vmatprep.subr.mxu0 0.0
    %1035 = vmatpush1.msra.mxu0 %v498
    %1036 = vmatprep.subr.mxu0 0.0
    %1037 = vmatpush1.msra.mxu0 %v499
    %1038 = vmatprep.subr.mxu0 0.0
    %1039 = vmatpush1.msra.mxu0 %v500
    %1040 = vmatprep.subr.mxu0 0.0
    %1041 = vmatpush1.msra.mxu0 %v501
    %1042 = vmatprep.subr.mxu0 0.0
    %1043 = vmatpush1.msra.mxu0 %v502
    %1044 = vmatprep.subr.mxu0 0.0
    %1045 = vmatpush1.msra.mxu0 0.0
    %1046 = vmatprep.subr.mxu0 0.0
    %1047 = vmatpush1.msra.mxu0 0.0
    %1048 = vmatprep.subr.mxu0 0.0
    %1049 = vmatpush1.msra.mxu0 0.0
    %1050 = vmatprep.subr.mxu0 0.0
    %1051 = vmatpush1.msra.mxu0 0.0
    %1052 = vmatprep.subr.mxu0 0.0
    %1053 = vmatpush1.msra.mxu0 0.0
    %1054 = vmatprep.subr.mxu0 0.0
    %1055 = vmatpush1.msra.mxu0 0.0
    %1056 = vmatprep.subr.mxu0 0.0
    %1057 = vmatpush1.msra.mxu0 0.0
    %1058 = vmatprep.subr.mxu0 0.0
    %1059 = vmatpush1.msra.mxu0 0.0
    %1060 = vmatprep.subr.mxu0 0.0
    %1061 = vmatpush1.msra.mxu0 0.0
    %1062 = vmatprep.subr.mxu0 0.0
    %1063 = vmatpush1.msra.mxu0 0.0
    %1064 = vmatprep.subr.mxu0 0.0
    %1065 = vmatpush1.msra.mxu0 0.0
    %1066 = vmatprep.subr.mxu0 0.0
    %1067 = vmatpush1.msra.mxu0 0.0
    %1068 = vmatprep.subr.mxu0 0.0
    %1069 = vmatpush1.msra.mxu0 0.0
    %1070 = vmatprep.subr.mxu0 0.0
    %1071 = vmatpush1.msra.mxu0 0.0
    %1072 = vmatprep.subr.mxu0 0.0
    %1073 = vmatpush1.msra.mxu0 0.0
    %1074 = vmatprep.subr.mxu0 0.0
    %1075 = vmatpush1.msra.mxu0 0.0
    %1076 = vmatprep.subr.mxu0 0.0
    %1077 = vmatpush1.msra.mxu0 0.0
    %1078 = vmatprep.subr.mxu0 0.0
    %1079 = vmatpush1.msra.mxu0 0.0
    %1080 = vmatprep.subr.mxu0 0.0
    %1081 = vmatpush1.msra.mxu0 0.0
    %1082 = vmatprep.subr.mxu0 0.0
    %1083 = vmatpush1.msra.mxu0 0.0
    %1084 = vmatprep.mubr.f32.mxu0 0.0
    %1085 = vmatmul.mubr.f32.gmra.mrb[0].mxu0 %v870
    %v1086 = vpop.f32.mrb[0].mxu0
    %v1087 = vadd.f32 0.0, %v1086
    %v1088 = vpop.f32.mrb[0].mxu0
    %1089 = vdwg.mxu0
    %v1091 = vrot.slane %v1087, 6
    %v1093 = vadd.f32 %v361, %v1091
    %1094 = vmatprep.subr.mxu0 0.0
    %1095 = vmatpush1.msra.mxu0 %v504
    %1096 = vmatprep.subr.mxu0 0.0
    %1097 = vmatpush1.msra.mxu0 %v505
    %1098 = vmatprep.subr.mxu0 0.0
    %1099 = vmatpush1.msra.mxu0 %v506
    %1100 = vmatprep.subr.mxu0 0.0
    %1101 = vmatpush1.msra.mxu0 %v507
    %1102 = vmatprep.subr.mxu0 0.0
    %1103 = vmatpush1.msra.mxu0 %v508
    %1104 = vmatprep.subr.mxu0 0.0
    %1105 = vmatpush1.msra.mxu0 %v509
    %1106 = vmatprep.subr.mxu0 0.0
    %1107 = vmatpush1.msra.mxu0 %v510
    %1108 = vmatprep.subr.mxu0 0.0
    %1109 = vmatpush1.msra.mxu0 %v511
    %1110 = vmatprep.subr.mxu0 0.0
    %1111 = vmatpush1.msra.mxu0 %v512
    %1112 = vmatprep.subr.mxu0 0.0
    %1113 = vmatpush1.msra.mxu0 %v513
    %1114 = vmatprep.subr.mxu0 0.0
    %1115 = vmatpush1.msra.mxu0 %v514
    %1116 = vmatprep.subr.mxu0 0.0
    %1117 = vmatpush1.msra.mxu0 %v515
    %1118 = vmatprep.subr.mxu0 0.0
    %1119 = vmatpush1.msra.mxu0 0.0
    %1120 = vmatprep.subr.mxu0 0.0
    %1121 = vmatpush1.msra.mxu0 0.0
    %1122 = vmatprep.subr.mxu0 0.0
    %1123 = vmatpush1.msra.mxu0 0.0
    %1124 = vmatprep.subr.mxu0 0.0
    %1125 = vmatpush1.msra.mxu0 0.0
    %1126 = vmatprep.subr.mxu0 0.0
    %1127 = vmatpush1.msra.mxu0 0.0
    %1128 = vmatprep.subr.mxu0 0.0
    %1129 = vmatpush1.msra.mxu0 0.0
    %1130 = vmatprep.subr.mxu0 0.0
    %1131 = vmatpush1.msra.mxu0 0.0
    %1132 = vmatprep.subr.mxu0 0.0
    %1133 = vmatpush1.msra.mxu0 0.0
    %1134 = vmatprep.subr.mxu0 0.0
    %1135 = vmatpush1.msra.mxu0 0.0
    %1136 = vmatprep.subr.mxu0 0.0
    %1137 = vmatpush1.msra.mxu0 0.0
    %1138 = vmatprep.subr.mxu0 0.0
    %1139 = vmatpush1.msra.mxu0 0.0
    %1140 = vmatprep.subr.mxu0 0.0
    %1141 = vmatpush1.msra.mxu0 0.0
    %1142 = vmatprep.subr.mxu0 0.0
    %1143 = vmatpush1.msra.mxu0 0.0
    %1144 = vmatprep.subr.mxu0 0.0
    %1145 = vmatpush1.msra.mxu0 0.0
    %1146 = vmatprep.subr.mxu0 0.0
    %1147 = vmatpush1.msra.mxu0 0.0
    %1148 = vmatprep.subr.mxu0 0.0
    %1149 = vmatpush1.msra.mxu0 0.0
    %1150 = vmatprep.subr.mxu0 0.0
    %1151 = vmatpush1.msra.mxu0 0.0
    %1152 = vmatprep.subr.mxu0 0.0
    %1153 = vmatpush1.msra.mxu0 0.0
    %1154 = vmatprep.subr.mxu0 0.0
    %1155 = vmatpush1.msra.mxu0 0.0
    %1156 = vmatprep.subr.mxu0 0.0
    %1157 = vmatpush1.msra.mxu0 0.0
    %1158 = vmatprep.mubr.f32.mxu0 0.0
    %1159 = vmatmul.mubr.f32.gmra.mrb[0].mxu0 %v870
    %v1160 = vpop.f32.mrb[0].mxu0
    %v1161 = vadd.f32 0.0, %v1160
    %v1162 = vpop.f32.mrb[0].mxu0
    %1163 = vdwg.mxu0
    %v1165 = vrot.slane %v1161, 6
    %v1167 = vadd.f32 %v457, %v1165
    %v1168 = vxor.u32 %v945, 2147483648
    %v1169 = vmul.f32 %v1168, 1.442695
    %v1170 = vpow.pop %v1169
    %v1171 = vadd.f32 %v1170, 1.0
    %v1172 = vrcp.pop %v1171
    %v1173 = vmul.f32 1.0, %v1172
    %v1174 = vxor.u32 %v1019, 2147483648
    %v1175 = vmul.f32 %v1174, 1.442695
    %v1176 = vpow.pop %v1175
    %v1177 = vadd.f32 %v1176, 1.0
    %v1178 = vrcp.pop %v1177
    %v1179 = vmul.f32 1.0, %v1178
    %v1180 = vtanh.pop %v1093
    %v1181 = vxor.u32 %v1167, 2147483648
    %v1182 = vmul.f32 %v1181, 1.442695
    %v1183 = vpow.pop %v1182
    %v1184 = vadd.f32 %v1183, 1.0
    %v1185 = vrcp.pop %v1184
    %v1186 = vmul.f32 1.0, %v1185
    %v1188 = vrot.slane %v867, 6
    %v1190 = vmul.f32 %v1179, %v1188
    %v1191 = vmul.f32 %v1173, %v1180
    %v1192 = vadd.f32 %v1190, %v1191
    %v1193 = vtanh.pop %v1192
    %v1194 = vmul.f32 %v1186, %v1193
    %vm1195 = vcmp.gt.s32.totalorder %v554, 1
    %v1197 = vrot.slane %v1192, 2
    %v1199 = vsel %vm1195, %v1197, %v867
    %v1201 = vrot.slane %v1194, 2
    %v1203 = vsel %vm1195, %v1201, %v868
    %v1205 = vsel %vm95, %v1203, 0
    %1207 = vmatprep.subr.mxu0 0.0
    %1208 = vmatpush1.msra.mxu0 %v465
    %1209 = vmatprep.subr.mxu0 0.0
    %1210 = vmatpush1.msra.mxu0 %v466
    %1211 = vmatprep.subr.mxu0 0.0
    %1212 = vmatpush1.msra.mxu0 %v467
    %1213 = vmatprep.subr.mxu0 0.0
    %1214 = vmatpush1.msra.mxu0 %v468
    %1215 = vmatprep.subr.mxu0 0.0
    %1216 = vmatpush1.msra.mxu0 %v469
    %1217 = vmatprep.subr.mxu0 0.0
    %1218 = vmatpush1.msra.mxu0 %v470
    %1219 = vmatprep.subr.mxu0 0.0
    %1220 = vmatpush1.msra.mxu0 %v471
    %1221 = vmatprep.subr.mxu0 0.0
    %1222 = vmatpush1.msra.mxu0 %v472
    %1223 = vmatprep.subr.mxu0 0.0
    %1224 = vmatpush1.msra.mxu0 %v473
    %1225 = vmatprep.subr.mxu0 0.0
    %1226 = vmatpush1.msra.mxu0 %v474
    %1227 = vmatprep.subr.mxu0 0.0
    %1228 = vmatpush1.msra.mxu0 %v475
    %1229 = vmatprep.subr.mxu0 0.0
    %1230 = vmatpush1.msra.mxu0 %v476
    %1231 = vmatprep.subr.mxu0 0.0
    %1232 = vmatpush1.msra.mxu0 0.0
    %1233 = vmatprep.subr.mxu0 0.0
    %1234 = vmatpush1.msra.mxu0 0.0
    %1235 = vmatprep.subr.mxu0 0.0
    %1236 = vmatpush1.msra.mxu0 0.0
    %1237 = vmatprep.subr.mxu0 0.0
    %1238 = vmatpush1.msra.mxu0 0.0
    %1239 = vmatprep.subr.mxu0 0.0
    %1240 = vmatpush1.msra.mxu0 0.0
    %1241 = vmatprep.subr.mxu0 0.0
    %1242 = vmatpush1.msra.mxu0 0.0
    %1243 = vmatprep.subr.mxu0 0.0
    %1244 = vmatpush1.msra.mxu0 0.0
    %1245 = vmatprep.subr.mxu0 0.0
    %1246 = vmatpush1.msra.mxu0 0.0
    %1247 = vmatprep.subr.mxu0 0.0
    %1248 = vmatpush1.msra.mxu0 0.0
    %1249 = vmatprep.subr.mxu0 0.0
    %1250 = vmatpush1.msra.mxu0 0.0
    %1251 = vmatprep.subr.mxu0 0.0
    %1252 = vmatpush1.msra.mxu0 0.0
    %1253 = vmatprep.subr.mxu0 0.0
    %1254 = vmatpush1.msra.mxu0 0.0
    %1255 = vmatprep.subr.mxu0 0.0
    %1256 = vmatpush1.msra.mxu0 0.0
    %1257 = vmatprep.subr.mxu0 0.0
    %1258 = vmatpush1.msra.mxu0 0.0
    %1259 = vmatprep.subr.mxu0 0.0
    %1260 = vmatpush1.msra.mxu0 0.0
    %1261 = vmatprep.subr.mxu0 0.0
    %1262 = vmatpush1.msra.mxu0 0.0
    %1263 = vmatprep.subr.mxu0 0.0
    %1264 = vmatpush1.msra.mxu0 0.0
    %1265 = vmatprep.subr.mxu0 0.0
    %1266 = vmatpush1.msra.mxu0 0.0
    %1267 = vmatprep.subr.mxu0 0.0
    %1268 = vmatpush1.msra.mxu0 0.0
    %1269 = vmatprep.subr.mxu0 0.0
    %1270 = vmatpush1.msra.mxu0 0.0
    %1271 = vmatprep.mubr.f32.mxu0 0.0
    %1272 = vmatmul.mubr.f32.gmra.mrb[0].mxu0 %v1205
    %v1273 = vpop.f32.mrb[0].mxu0
    %v1274 = vadd.f32 0.0, %v1273
    %v1275 = vpop.f32.mrb[0].mxu0
    %1276 = vdwg.mxu0
    %v1278 = vrot.slane %v1274, 4
    %v1280 = vadd.f32 %v169, %v1278
    %1281 = vmatprep.subr.mxu0 0.0
    %1282 = vmatpush1.msra.mxu0 %v478
    %1283 = vmatprep.subr.mxu0 0.0
    %1284 = vmatpush1.msra.mxu0 %v479
    %1285 = vmatprep.subr.mxu0 0.0
    %1286 = vmatpush1.msra.mxu0 %v480
    %1287 = vmatprep.subr.mxu0 0.0
    %1288 = vmatpush1.msra.mxu0 %v481
    %1289 = vmatprep.subr.mxu0 0.0
    %1290 = vmatpush1.msra.mxu0 %v482
    %1291 = vmatprep.subr.mxu0 0.0
    %1292 = vmatpush1.msra.mxu0 %v483
    %1293 = vmatprep.subr.mxu0 0.0
    %1294 = vmatpush1.msra.mxu0 %v484
    %1295 = vmatprep.subr.mxu0 0.0
    %1296 = vmatpush1.msra.mxu0 %v485
    %1297 = vmatprep.subr.mxu0 0.0
    %1298 = vmatpush1.msra.mxu0 %v486
    %1299 = vmatprep.subr.mxu0 0.0
    %1300 = vmatpush1.msra.mxu0 %v487
    %1301 = vmatprep.subr.mxu0 0.0
    %1302 = vmatpush1.msra.mxu0 %v488
    %1303 = vmatprep.subr.mxu0 0.0
    %1304 = vmatpush1.msra.mxu0 %v489
    %1305 = vmatprep.subr.mxu0 0.0
    %1306 = vmatpush1.msra.mxu0 0.0
    %1307 = vmatprep.subr.mxu0 0.0
    %1308 = vmatpush1.msra.mxu0 0.0
    %1309 = vmatprep.subr.mxu0 0.0
    %1310 = vmatpush1.msra.mxu0 0.0
    %1311 = vmatprep.subr.mxu0 0.0
    %1312 = vmatpush1.msra.mxu0 0.0
    %1313 = vmatprep.subr.mxu0 0.0
    %1314 = vmatpush1.msra.mxu0 0.0
    %1315 = vmatprep.subr.mxu0 0.0
    %1316 = vmatpush1.msra.mxu0 0.0
    %1317 = vmatprep.subr.mxu0 0.0
    %1318 = vmatpush1.msra.mxu0 0.0
    %1319 = vmatprep.subr.mxu0 0.0
    %1320 = vmatpush1.msra.mxu0 0.0
    %1321 = vmatprep.subr.mxu0 0.0
    %1322 = vmatpush1.msra.mxu0 0.0
    %1323 = vmatprep.subr.mxu0 0.0
    %1324 = vmatpush1.msra.mxu0 0.0
    %1325 = vmatprep.subr.mxu0 0.0
    %1326 = vmatpush1.msra.mxu0 0.0
    %1327 = vmatprep.subr.mxu0 0.0
    %1328 = vmatpush1.msra.mxu0 0.0
    %1329 = vmatprep.subr.mxu0 0.0
    %1330 = vmatpush1.msra.mxu0 0.0
    %1331 = vmatprep.subr.mxu0 0.0
    %1332 = vmatpush1.msra.mxu0 0.0
    %1333 = vmatprep.subr.mxu0 0.0
    %1334 = vmatpush1.msra.mxu0 0.0
    %1335 = vmatprep.subr.mxu0 0.0
    %1336 = vmatpush1.msra.mxu0 0.0
    %1337 = vmatprep.subr.mxu0 0.0
    %1338 = vmatpush1.msra.mxu0 0.0
    %1339 = vmatprep.subr.mxu0 0.0
    %1340 = vmatpush1.msra.mxu0 0.0
    %1341 = vmatprep.subr.mxu0 0.0
    %1342 = vmatpush1.msra.mxu0 0.0
    %1343 = vmatprep.subr.mxu0 0.0
    %1344 = vmatpush1.msra.mxu0 0.0
    %1345 = vmatprep.mubr.f32.mxu0 0.0
    %1346 = vmatmul.mubr.f32.gmra.mrb[0].mxu0 %v1205
    %v1347 = vpop.f32.mrb[0].mxu0
    %v1348 = vadd.f32 0.0, %v1347
    %v1349 = vpop.f32.mrb[0].mxu0
    %1350 = vdwg.mxu0
    %v1352 = vrot.slane %v1348, 4
    %v1354 = vadd.f32 %v265, %v1352
    %1355 = vmatprep.subr.mxu0 0.0
    %1356 = vmatpush1.msra.mxu0 %v491
    %1357 = vmatprep.subr.mxu0 0.0
    %1358 = vmatpush1.msra.mxu0 %v492
    %1359 = vmatprep.subr.mxu0 0.0
    %1360 = vmatpush1.msra.mxu0 %v493
    %1361 = vmatprep.subr.mxu0 0.0
    %1362 = vmatpush1.msra.mxu0 %v494
    %1363 = vmatprep.subr.mxu0 0.0
    %1364 = vmatpush1.msra.mxu0 %v495
    %1365 = vmatprep.subr.mxu0 0.0
    %1366 = vmatpush1.msra.mxu0 %v496
    %1367 = vmatprep.subr.mxu0 0.0
    %1368 = vmatpush1.msra.mxu0 %v497
    %1369 = vmatprep.subr.mxu0 0.0
    %1370 = vmatpush1.msra.mxu0 %v498
    %1371 = vmatprep.subr.mxu0 0.0
    %1372 = vmatpush1.msra.mxu0 %v499
    %1373 = vmatprep.subr.mxu0 0.0
    %1374 = vmatpush1.msra.mxu0 %v500
    %1375 = vmatprep.subr.mxu0 0.0
    %1376 = vmatpush1.msra.mxu0 %v501
    %1377 = vmatprep.subr.mxu0 0.0
    %1378 = vmatpush1.msra.mxu0 %v502
    %1379 = vmatprep.subr.mxu0 0.0
    %1380 = vmatpush1.msra.mxu0 0.0
    %1381 = vmatprep.subr.mxu0 0.0
    %1382 = vmatpush1.msra.mxu0 0.0
    %1383 = vmatprep.subr.mxu0 0.0
    %1384 = vmatpush1.msra.mxu0 0.0
    %1385 = vmatprep.subr.mxu0 0.0
    %1386 = vmatpush1.msra.mxu0 0.0
    %1387 = vmatprep.subr.mxu0 0.0
    %1388 = vmatpush1.msra.mxu0 0.0
    %1389 = vmatprep.subr.mxu0 0.0
    %1390 = vmatpush1.msra.mxu0 0.0
    %1391 = vmatprep.subr.mxu0 0.0
    %1392 = vmatpush1.msra.mxu0 0.0
    %1393 = vmatprep.subr.mxu0 0.0
    %1394 = vmatpush1.msra.mxu0 0.0
    %1395 = vmatprep.subr.mxu0 0.0
    %1396 = vmatpush1.msra.mxu0 0.0
    %1397 = vmatprep.subr.mxu0 0.0
    %1398 = vmatpush1.msra.mxu0 0.0
    %1399 = vmatprep.subr.mxu0 0.0
    %1400 = vmatpush1.msra.mxu0 0.0
    %1401 = vmatprep.subr.mxu0 0.0
    %1402 = vmatpush1.msra.mxu0 0.0
    %1403 = vmatprep.subr.mxu0 0.0
    %1404 = vmatpush1.msra.mxu0 0.0
    %1405 = vmatprep.subr.mxu0 0.0
    %1406 = vmatpush1.msra.mxu0 0.0
    %1407 = vmatprep.subr.mxu0 0.0
    %1408 = vmatpush1.msra.mxu0 0.0
    %1409 = vmatprep.subr.mxu0 0.0
    %1410 = vmatpush1.msra.mxu0 0.0
    %1411 = vmatprep.subr.mxu0 0.0
    %1412 = vmatpush1.msra.mxu0 0.0
    %1413 = vmatprep.subr.mxu0 0.0
    %1414 = vmatpush1.msra.mxu0 0.0
    %1415 = vmatprep.subr.mxu0 0.0
    %1416 = vmatpush1.msra.mxu0 0.0
    %1417 = vmatprep.subr.mxu0 0.0
    %1418 = vmatpush1.msra.mxu0 0.0
    %1419 = vmatprep.mubr.f32.mxu0 0.0
    %1420 = vmatmul.mubr.f32.gmra.mrb[0].mxu0 %v1205
    %v1421 = vpop.f32.mrb[0].mxu0
    %v1422 = vadd.f32 0.0, %v1421
    %v1423 = vpop.f32.mrb[0].mxu0
    %1424 = vdwg.mxu0
    %v1426 = vrot.slane %v1422, 4
    %v1428 = vadd.f32 %v361, %v1426
    %1429 = vmatprep.subr.mxu0 0.0
    %1430 = vmatpush1.msra.mxu0 %v504
    %1431 = vmatprep.subr.mxu0 0.0
    %1432 = vmatpush1.msra.mxu0 %v505
    %1433 = vmatprep.subr.mxu0 0.0
    %1434 = vmatpush1.msra.mxu0 %v506
    %1435 = vmatprep.subr.mxu0 0.0
    %1436 = vmatpush1.msra.mxu0 %v507
    %1437 = vmatprep.subr.mxu0 0.0
    %1438 = vmatpush1.msra.mxu0 %v508
    %1439 = vmatprep.subr.mxu0 0.0
    %1440 = vmatpush1.msra.mxu0 %v509
    %1441 = vmatprep.subr.mxu0 0.0
    %1442 = vmatpush1.msra.mxu0 %v510
    %1443 = vmatprep.subr.mxu0 0.0
    %1444 = vmatpush1.msra.mxu0 %v511
    %1445 = vmatprep.subr.mxu0 0.0
    %1446 = vmatpush1.msra.mxu0 %v512
    %1447 = vmatprep.subr.mxu0 0.0
    %1448 = vmatpush1.msra.mxu0 %v513
    %1449 = vmatprep.subr.mxu0 0.0
    %1450 = vmatpush1.msra.mxu0 %v514
    %1451 = vmatprep.subr.mxu0 0.0
    %1452 = vmatpush1.msra.mxu0 %v515
    %1453 = vmatprep.subr.mxu0 0.0
    %1454 = vmatpush1.msra.mxu0 0.0
    %1455 = vmatprep.subr.mxu0 0.0
    %1456 = vmatpush1.msra.mxu0 0.0
    %1457 = vmatprep.subr.mxu0 0.0
    %1458 = vmatpush1.msra.mxu0 0.0
    %1459 = vmatprep.subr.mxu0 0.0
    %1460 = vmatpush1.msra.mxu0 0.0
    %1461 = vmatprep.subr.mxu0 0.0
    %1462 = vmatpush1.msra.mxu0 0.0
    %1463 = vmatprep.subr.mxu0 0.0
    %1464 = vmatpush1.msra.mxu0 0.0
    %1465 = vmatprep.subr.mxu0 0.0
    %1466 = vmatpush1.msra.mxu0 0.0
    %1467 = vmatprep.subr.mxu0 0.0
    %1468 = vmatpush1.msra.mxu0 0.0
    %1469 = vmatprep.subr.mxu0 0.0
    %1470 = vmatpush1.msra.mxu0 0.0
    %1471 = vmatprep.subr.mxu0 0.0
    %1472 = vmatpush1.msra.mxu0 0.0
    %1473 = vmatprep.subr.mxu0 0.0
    %1474 = vmatpush1.msra.mxu0 0.0
    %1475 = vmatprep.subr.mxu0 0.0
    %1476 = vmatpush1.msra.mxu0 0.0
    %1477 = vmatprep.subr.mxu0 0.0
    %1478 = vmatpush1.msra.mxu0 0.0
    %1479 = vmatprep.subr.mxu0 0.0
    %1480 = vmatpush1.msra.mxu0 0.0
    %1481 = vmatprep.subr.mxu0 0.0
    %1482 = vmatpush1.msra.mxu0 0.0
    %1483 = vmatprep.subr.mxu0 0.0
    %1484 = vmatpush1.msra.mxu0 0.0
    %1485 = vmatprep.subr.mxu0 0.0
    %1486 = vmatpush1.msra.mxu0 0.0
    %1487 = vmatprep.subr.mxu0 0.0
    %1488 = vmatpush1.msra.mxu0 0.0
    %1489 = vmatprep.subr.mxu0 0.0
    %1490 = vmatpush1.msra.mxu0 0.0
    %1491 = vmatprep.subr.mxu0 0.0
    %1492 = vmatpush1.msra.mxu0 0.0
    %1493 = vmatprep.mubr.f32.mxu0 0.0
    %1494 = vmatmul.mubr.f32.gmra.mrb[0].mxu0 %v1205
    %v1495 = vpop.f32.mrb[0].mxu0
    %v1496 = vadd.f32 0.0, %v1495
    %v1497 = vpop.f32.mrb[0].mxu0
    %1498 = vdwg.mxu0
    %v1500 = vrot.slane %v1496, 4
    %v1502 = vadd.f32 %v457, %v1500
    %v1503 = vxor.u32 %v1280, 2147483648
    %v1504 = vmul.f32 %v1503, 1.442695
    %v1505 = vpow.pop %v1504
    %v1506 = vadd.f32 %v1505, 1.0
    %v1507 = vrcp.pop %v1506
    %v1508 = vmul.f32 1.0, %v1507
    %v1509 = vxor.u32 %v1354, 2147483648
    %v1510 = vmul.f32 %v1509, 1.442695
    %v1511 = vpow.pop %v1510
    %v1512 = vadd.f32 %v1511, 1.0
    %v1513 = vrcp.pop %v1512
    %v1514 = vmul.f32 1.0, %v1513
    %v1515 = vtanh.pop %v1428
    %v1516 = vxor.u32 %v1502, 2147483648
    %v1517 = vmul.f32 %v1516, 1.442695
    %v1518 = vpow.pop %v1517
    %v1519 = vadd.f32 %v1518, 1.0
    %v1520 = vrcp.pop %v1519
    %v1521 = vmul.f32 1.0, %v1520
    %v1523 = vrot.slane %v1199, 4
    %v1525 = vmul.f32 %v1514, %v1523
    %v1526 = vmul.f32 %v1508, %v1515
    %v1527 = vadd.f32 %v1525, %v1526
    %v1528 = vtanh.pop %v1527
    %v1529 = vmul.f32 %v1521, %v1528
    %vm1530 = vcmp.gt.s32.totalorder %v554, 2
    %v1532 = vrot.slane %v1527, 4
    %v1534 = vsel %vm1530, %v1532, %v1199
    %v1536 = vrot.slane %v1529, 4
    %v1538 = vsel %vm1530, %v1536, %v1203
    %v1540 = vsel %vm95, %v1538, 0
    %1542 = vmatprep.subr.mxu0 0.0
    %1543 = vmatpush1.msra.mxu0 %v465
    %1544 = vmatprep.subr.mxu0 0.0
    %1545 = vmatpush1.msra.mxu0 %v466
    %1546 = vmatprep.subr.mxu0 0.0
    %1547 = vmatpush1.msra.mxu0 %v467
    %1548 = vmatprep.subr.mxu0 0.0
    %1549 = vmatpush1.msra.mxu0 %v468
    %1550 = vmatprep.subr.mxu0 0.0
    %1551 = vmatpush1.msra.mxu0 %v469
    %1552 = vmatprep.subr.mxu0 0.0
    %1553 = vmatpush1.msra.mxu0 %v470
    %1554 = vmatprep.subr.mxu0 0.0
    %1555 = vmatpush1.msra.mxu0 %v471
    %1556 = vmatprep.subr.mxu0 0.0
    %1557 = vmatpush1.msra.mxu0 %v472
    %1558 = vmatprep.subr.mxu0 0.0
    %1559 = vmatpush1.msra.mxu0 %v473
    %1560 = vmatprep.subr.mxu0 0.0
    %1561 = vmatpush1.msra.mxu0 %v474
    %1562 = vmatprep.subr.mxu0 0.0
    %1563 = vmatpush1.msra.mxu0 %v475
    %1564 = vmatprep.subr.mxu0 0.0
    %1565 = vmatpush1.msra.mxu0 %v476
    %1566 = vmatprep.subr.mxu0 0.0
    %1567 = vmatpush1.msra.mxu0 0.0
    %1568 = vmatprep.subr.mxu0 0.0
    %1569 = vmatpush1.msra.mxu0 0.0
    %1570 = vmatprep.subr.mxu0 0.0
    %1571 = vmatpush1.msra.mxu0 0.0
    %1572 = vmatprep.subr.mxu0 0.0
    %1573 = vmatpush1.msra.mxu0 0.0
    %1574 = vmatprep.subr.mxu0 0.0
    %1575 = vmatpush1.msra.mxu0 0.0
    %1576 = vmatprep.subr.mxu0 0.0
    %1577 = vmatpush1.msra.mxu0 0.0
    %1578 = vmatprep.subr.mxu0 0.0
    %1579 = vmatpush1.msra.mxu0 0.0
    %1580 = vmatprep.subr.mxu0 0.0
    %1581 = vmatpush1.msra.mxu0 0.0
    %1582 = vmatprep.subr.mxu0 0.0
    %1583 = vmatpush1.msra.mxu0 0.0
    %1584 = vmatprep.subr.mxu0 0.0
    %1585 = vmatpush1.msra.mxu0 0.0
    %1586 = vmatprep.subr.mxu0 0.0
    %1587 = vmatpush1.msra.mxu0 0.0
    %1588 = vmatprep.subr.mxu0 0.0
    %1589 = vmatpush1.msra.mxu0 0.0
    %1590 = vmatprep.subr.mxu0 0.0
    %1591 = vmatpush1.msra.mxu0 0.0
    %1592 = vmatprep.subr.mxu0 0.0
    %1593 = vmatpush1.msra.mxu0 0.0
    %1594 = vmatprep.subr.mxu0 0.0
    %1595 = vmatpush1.msra.mxu0 0.0
    %1596 = vmatprep.subr.mxu0 0.0
    %1597 = vmatpush1.msra.mxu0 0.0
    %1598 = vmatprep.subr.mxu0 0.0
    %1599 = vmatpush1.msra.mxu0 0.0
    %1600 = vmatprep.subr.mxu0 0.0
    %1601 = vmatpush1.msra.mxu0 0.0
    %1602 = vmatprep.subr.mxu0 0.0
    %1603 = vmatpush1.msra.mxu0 0.0
    %1604 = vmatprep.subr.mxu0 0.0
    %1605 = vmatpush1.msra.mxu0 0.0
    %1606 = vmatprep.mubr.f32.mxu0 0.0
    %1607 = vmatmul.mubr.f32.gmra.mrb[0].mxu0 %v1540
    %v1608 = vpop.f32.mrb[0].mxu0
    %v1609 = vadd.f32 0.0, %v1608
    %v1610 = vpop.f32.mrb[0].mxu0
    %1611 = vdwg.mxu0
    %v1613 = vrot.slane %v1609, 2
    %v1615 = vadd.f32 %v169, %v1613
    %1616 = vmatprep.subr.mxu0 0.0
    %1617 = vmatpush1.msra.mxu0 %v478
    %1618 = vmatprep.subr.mxu0 0.0
    %1619 = vmatpush1.msra.mxu0 %v479
    %1620 = vmatprep.subr.mxu0 0.0
    %1621 = vmatpush1.msra.mxu0 %v480
    %1622 = vmatprep.subr.mxu0 0.0
    %1623 = vmatpush1.msra.mxu0 %v481
    %1624 = vmatprep.subr.mxu0 0.0
    %1625 = vmatpush1.msra.mxu0 %v482
    %1626 = vmatprep.subr.mxu0 0.0
    %1627 = vmatpush1.msra.mxu0 %v483
    %1628 = vmatprep.subr.mxu0 0.0
    %1629 = vmatpush1.msra.mxu0 %v484
    %1630 = vmatprep.subr.mxu0 0.0
    %1631 = vmatpush1.msra.mxu0 %v485
    %1632 = vmatprep.subr.mxu0 0.0
    %1633 = vmatpush1.msra.mxu0 %v486
    %1634 = vmatprep.subr.mxu0 0.0
    %1635 = vmatpush1.msra.mxu0 %v487
    %1636 = vmatprep.subr.mxu0 0.0
    %1637 = vmatpush1.msra.mxu0 %v488
    %1638 = vmatprep.subr.mxu0 0.0
    %1639 = vmatpush1.msra.mxu0 %v489
    %1640 = vmatprep.subr.mxu0 0.0
    %1641 = vmatpush1.msra.mxu0 0.0
    %1642 = vmatprep.subr.mxu0 0.0
    %1643 = vmatpush1.msra.mxu0 0.0
    %1644 = vmatprep.subr.mxu0 0.0
    %1645 = vmatpush1.msra.mxu0 0.0
    %1646 = vmatprep.subr.mxu0 0.0
    %1647 = vmatpush1.msra.mxu0 0.0
    %1648 = vmatprep.subr.mxu0 0.0
    %1649 = vmatpush1.msra.mxu0 0.0
    %1650 = vmatprep.subr.mxu0 0.0
    %1651 = vmatpush1.msra.mxu0 0.0
    %1652 = vmatprep.subr.mxu0 0.0
    %1653 = vmatpush1.msra.mxu0 0.0
    %1654 = vmatprep.subr.mxu0 0.0
    %1655 = vmatpush1.msra.mxu0 0.0
    %1656 = vmatprep.subr.mxu0 0.0
    %1657 = vmatpush1.msra.mxu0 0.0
    %1658 = vmatprep.subr.mxu0 0.0
    %1659 = vmatpush1.msra.mxu0 0.0
    %1660 = vmatprep.subr.mxu0 0.0
    %1661 = vmatpush1.msra.mxu0 0.0
    %1662 = vmatprep.subr.mxu0 0.0
    %1663 = vmatpush1.msra.mxu0 0.0
    %1664 = vmatprep.subr.mxu0 0.0
    %1665 = vmatpush1.msra.mxu0 0.0
    %1666 = vmatprep.subr.mxu0 0.0
    %1667 = vmatpush1.msra.mxu0 0.0
    %1668 = vmatprep.subr.mxu0 0.0
    %1669 = vmatpush1.msra.mxu0 0.0
    %1670 = vmatprep.subr.mxu0 0.0
    %1671 = vmatpush1.msra.mxu0 0.0
    %1672 = vmatprep.subr.mxu0 0.0
    %1673 = vmatpush1.msra.mxu0 0.0
    %1674 = vmatprep.subr.mxu0 0.0
    %1675 = vmatpush1.msra.mxu0 0.0
    %1676 = vmatprep.subr.mxu0 0.0
    %1677 = vmatpush1.msra.mxu0 0.0
    %1678 = vmatprep.subr.mxu0 0.0
    %1679 = vmatpush1.msra.mxu0 0.0
    %1680 = vmatprep.mubr.f32.mxu0 0.0
    %1681 = vmatmul.mubr.f32.gmra.mrb[0].mxu0 %v1540
    %v1682 = vpop.f32.mrb[0].mxu0
    %v1683 = vadd.f32 0.0, %v1682
    %v1684 = vpop.f32.mrb[0].mxu0
    %1685 = vdwg.mxu0
    %v1687 = vrot.slane %v1683, 2
    %v1689 = vadd.f32 %v265, %v1687
    %1690 = vmatprep.subr.mxu0 0.0
    %1691 = vmatpush1.msra.mxu0 %v491
    %1692 = vmatprep.subr.mxu0 0.0
    %1693 = vmatpush1.msra.mxu0 %v492
    %1694 = vmatprep.subr.mxu0 0.0
    %1695 = vmatpush1.msra.mxu0 %v493
    %1696 = vmatprep.subr.mxu0 0.0
    %1697 = vmatpush1.msra.mxu0 %v494
    %1698 = vmatprep.subr.mxu0 0.0
    %1699 = vmatpush1.msra.mxu0 %v495
    %1700 = vmatprep.subr.mxu0 0.0
    %1701 = vmatpush1.msra.mxu0 %v496
    %1702 = vmatprep.subr.mxu0 0.0
    %1703 = vmatpush1.msra.mxu0 %v497
    %1704 = vmatprep.subr.mxu0 0.0
    %1705 = vmatpush1.msra.mxu0 %v498
    %1706 = vmatprep.subr.mxu0 0.0
    %1707 = vmatpush1.msra.mxu0 %v499
    %1708 = vmatprep.subr.mxu0 0.0
    %1709 = vmatpush1.msra.mxu0 %v500
    %1710 = vmatprep.subr.mxu0 0.0
    %1711 = vmatpush1.msra.mxu0 %v501
    %1712 = vmatprep.subr.mxu0 0.0
    %1713 = vmatpush1.msra.mxu0 %v502
    %1714 = vmatprep.subr.mxu0 0.0
    %1715 = vmatpush1.msra.mxu0 0.0
    %1716 = vmatprep.subr.mxu0 0.0
    %1717 = vmatpush1.msra.mxu0 0.0
    %1718 = vmatprep.subr.mxu0 0.0
    %1719 = vmatpush1.msra.mxu0 0.0
    %1720 = vmatprep.subr.mxu0 0.0
    %1721 = vmatpush1.msra.mxu0 0.0
    %1722 = vmatprep.subr.mxu0 0.0
    %1723 = vmatpush1.msra.mxu0 0.0
    %1724 = vmatprep.subr.mxu0 0.0
    %1725 = vmatpush1.msra.mxu0 0.0
    %1726 = vmatprep.subr.mxu0 0.0
    %1727 = vmatpush1.msra.mxu0 0.0
    %1728 = vmatprep.subr.mxu0 0.0
    %1729 = vmatpush1.msra.mxu0 0.0
    %1730 = vmatprep.subr.mxu0 0.0
    %1731 = vmatpush1.msra.mxu0 0.0
    %1732 = vmatprep.subr.mxu0 0.0
    %1733 = vmatpush1.msra.mxu0 0.0
    %1734 = vmatprep.subr.mxu0 0.0
    %1735 = vmatpush1.msra.mxu0 0.0
    %1736 = vmatprep.subr.mxu0 0.0
    %1737 = vmatpush1.msra.mxu0 0.0
    %1738 = vmatprep.subr.mxu0 0.0
    %1739 = vmatpush1.msra.mxu0 0.0
    %1740 = vmatprep.subr.mxu0 0.0
    %1741 = vmatpush1.msra.mxu0 0.0
    %1742 = vmatprep.subr.mxu0 0.0
    %1743 = vmatpush1.msra.mxu0 0.0
    %1744 = vmatprep.subr.mxu0 0.0
    %1745 = vmatpush1.msra.mxu0 0.0
    %1746 = vmatprep.subr.mxu0 0.0
    %1747 = vmatpush1.msra.mxu0 0.0
    %1748 = vmatprep.subr.mxu0 0.0
    %1749 = vmatpush1.msra.mxu0 0.0
    %1750 = vmatprep.subr.mxu0 0.0
    %1751 = vmatpush1.msra.mxu0 0.0
    %1752 = vmatprep.subr.mxu0 0.0
    %1753 = vmatpush1.msra.mxu0 0.0
    %1754 = vmatprep.mubr.f32.mxu0 0.0
    %1755 = vmatmul.mubr.f32.gmra.mrb[0].mxu0 %v1540
    %v1756 = vpop.f32.mrb[0].mxu0
    %v1757 = vadd.f32 0.0, %v1756
    %v1758 = vpop.f32.mrb[0].mxu0
    %1759 = vdwg.mxu0
    %v1761 = vrot.slane %v1757, 2
    %v1763 = vadd.f32 %v361, %v1761
    %1764 = vmatprep.subr.mxu0 0.0
    %1765 = vmatpush1.msra.mxu0 %v504
    %1766 = vmatprep.subr.mxu0 0.0
    %1767 = vmatpush1.msra.mxu0 %v505
    %1768 = vmatprep.subr.mxu0 0.0
    %1769 = vmatpush1.msra.mxu0 %v506
    %1770 = vmatprep.subr.mxu0 0.0
    %1771 = vmatpush1.msra.mxu0 %v507
    %1772 = vmatprep.subr.mxu0 0.0
    %1773 = vmatpush1.msra.mxu0 %v508
    %1774 = vmatprep.subr.mxu0 0.0
    %1775 = vmatpush1.msra.mxu0 %v509
    %1776 = vmatprep.subr.mxu0 0.0
    %1777 = vmatpush1.msra.mxu0 %v510
    %1778 = vmatprep.subr.mxu0 0.0
    %1779 = vmatpush1.msra.mxu0 %v511
    %1780 = vmatprep.subr.mxu0 0.0
    %1781 = vmatpush1.msra.mxu0 %v512
    %1782 = vmatprep.subr.mxu0 0.0
    %1783 = vmatpush1.msra.mxu0 %v513
    %1784 = vmatprep.subr.mxu0 0.0
    %1785 = vmatpush1.msra.mxu0 %v514
    %1786 = vmatprep.subr.mxu0 0.0
    %1787 = vmatpush1.msra.mxu0 %v515
    %1788 = vmatprep.subr.mxu0 0.0
    %1789 = vmatpush1.msra.mxu0 0.0
    %1790 = vmatprep.subr.mxu0 0.0
    %1791 = vmatpush1.msra.mxu0 0.0
    %1792 = vmatprep.subr.mxu0 0.0
    %1793 = vmatpush1.msra.mxu0 0.0
    %1794 = vmatprep.subr.mxu0 0.0
    %1795 = vmatpush1.msra.mxu0 0.0
    %1796 = vmatprep.subr.mxu0 0.0
    %1797 = vmatpush1.msra.mxu0 0.0
    %1798 = vmatprep.subr.mxu0 0.0
    %1799 = vmatpush1.msra.mxu0 0.0
    %1800 = vmatprep.subr.mxu0 0.0
    %1801 = vmatpush1.msra.mxu0 0.0
    %1802 = vmatprep.subr.mxu0 0.0
    %1803 = vmatpush1.msra.mxu0 0.0
    %1804 = vmatprep.subr.mxu0 0.0
    %1805 = vmatpush1.msra.mxu0 0.0
    %1806 = vmatprep.subr.mxu0 0.0
    %1807 = vmatpush1.msra.mxu0 0.0
    %1808 = vmatprep.subr.mxu0 0.0
    %1809 = vmatpush1.msra.mxu0 0.0
    %1810 = vmatprep.subr.mxu0 0.0
    %1811 = vmatpush1.msra.mxu0 0.0
    %1812 = vmatprep.subr.mxu0 0.0
    %1813 = vmatpush1.msra.mxu0 0.0
    %1814 = vmatprep.subr.mxu0 0.0
    %1815 = vmatpush1.msra.mxu0 0.0
    %1816 = vmatprep.subr.mxu0 0.0
    %1817 = vmatpush1.msra.mxu0 0.0
    %1818 = vmatprep.subr.mxu0 0.0
    %1819 = vmatpush1.msra.mxu0 0.0
    %1820 = vmatprep.subr.mxu0 0.0
    %1821 = vmatpush1.msra.mxu0 0.0
    %1822 = vmatprep.subr.mxu0 0.0
    %1823 = vmatpush1.msra.mxu0 0.0
    %1824 = vmatprep.subr.mxu0 0.0
    %1825 = vmatpush1.msra.mxu0 0.0
    %1826 = vmatprep.subr.mxu0 0.0
    %1827 = vmatpush1.msra.mxu0 0.0
    %1828 = vmatprep.mubr.f32.mxu0 0.0
    %1829 = vmatmul.mubr.f32.gmra.mrb[0].mxu0 %v1540
    %v1830 = vpop.f32.mrb[0].mxu0
    %v1831 = vadd.f32 0.0, %v1830
    %v1832 = vpop.f32.mrb[0].mxu0
    %1833 = vdwg.mxu0
    %v1835 = vrot.slane %v1831, 2
    %v1837 = vadd.f32 %v457, %v1835
    %v1838 = vxor.u32 %v1615, 2147483648
    %v1839 = vmul.f32 %v1838, 1.442695
    %v1840 = vpow.pop %v1839
    %v1841 = vadd.f32 %v1840, 1.0
    %v1842 = vrcp.pop %v1841
    %v1843 = vmul.f32 1.0, %v1842
    %v1844 = vxor.u32 %v1689, 2147483648
    %v1845 = vmul.f32 %v1844, 1.442695
    %v1846 = vpow.pop %v1845
    %v1847 = vadd.f32 %v1846, 1.0
    %v1848 = vrcp.pop %v1847
    %v1849 = vmul.f32 1.0, %v1848
    %v1850 = vtanh.pop %v1763
    %v1851 = vxor.u32 %v1837, 2147483648
    %v1852 = vmul.f32 %v1851, 1.442695
    %v1853 = vpow.pop %v1852
    %v1854 = vadd.f32 %v1853, 1.0
    %v1855 = vrcp.pop %v1854
    %v1856 = vmul.f32 1.0, %v1855
    %v1858 = vrot.slane %v1534, 2
    %v1860 = vmul.f32 %v1849, %v1858
    %v1861 = vmul.f32 %v1843, %v1850
    %v1862 = vadd.f32 %v1860, %v1861
    %v1863 = vtanh.pop %v1862
    %v1864 = vmul.f32 %v1856, %v1863
    %vm1865 = vcmp.gt.s32.totalorder %v554, 3
    %v1867 = vrot.slane %v1862, 6
    %v1869 = vsel %vm1865, %v1867, %v1534
    %v1871 = vrot.slane %v1864, 6
    %v1873 = vsel %vm1865, %v1871, %v1538
    %v1875 = vsel %vm95, %v1873, 0
    %1877 = vmatprep.subr.mxu0 0.0
    %1878 = vmatpush1.msra.mxu0 %v465
    %1879 = vmatprep.subr.mxu0 0.0
    %1880 = vmatpush1.msra.mxu0 %v466
    %1881 = vmatprep.subr.mxu0 0.0
    %1882 = vmatpush1.msra.mxu0 %v467
    %1883 = vmatprep.subr.mxu0 0.0
    %1884 = vmatpush1.msra.mxu0 %v468
    %1885 = vmatprep.subr.mxu0 0.0
    %1886 = vmatpush1.msra.mxu0 %v469
    %1887 = vmatprep.subr.mxu0 0.0
    %1888 = vmatpush1.msra.mxu0 %v470
    %1889 = vmatprep.subr.mxu0 0.0
    %1890 = vmatpush1.msra.mxu0 %v471
    %1891 = vmatprep.subr.mxu0 0.0
    %1892 = vmatpush1.msra.mxu0 %v472
    %1893 = vmatprep.subr.mxu0 0.0
    %1894 = vmatpush1.msra.mxu0 %v473
    %1895 = vmatprep.subr.mxu0 0.0
    %1896 = vmatpush1.msra.mxu0 %v474
    %1897 = vmatprep.subr.mxu0 0.0
    %1898 = vmatpush1.msra.mxu0 %v475
    %1899 = vmatprep.subr.mxu0 0.0
    %1900 = vmatpush1.msra.mxu0 %v476
    %1901 = vmatprep.subr.mxu0 0.0
    %1902 = vmatpush1.msra.mxu0 0.0
    %1903 = vmatprep.subr.mxu0 0.0
    %1904 = vmatpush1.msra.mxu0 0.0
    %1905 = vmatprep.subr.mxu0 0.0
    %1906 = vmatpush1.msra.mxu0 0.0
    %1907 = vmatprep.subr.mxu0 0.0
    %1908 = vmatpush1.msra.mxu0 0.0
    %1909 = vmatprep.subr.mxu0 0.0
    %1910 = vmatpush1.msra.mxu0 0.0
    %1911 = vmatprep.subr.mxu0 0.0
    %1912 = vmatpush1.msra.mxu0 0.0
    %1913 = vmatprep.subr.mxu0 0.0
    %1914 = vmatpush1.msra.mxu0 0.0
    %1915 = vmatprep.subr.mxu0 0.0
    %1916 = vmatpush1.msra.mxu0 0.0
    %1917 = vmatprep.subr.mxu0 0.0
    %1918 = vmatpush1.msra.mxu0 0.0
    %1919 = vmatprep.subr.mxu0 0.0
    %1920 = vmatpush1.msra.mxu0 0.0
    %1921 = vmatprep.subr.mxu0 0.0
    %1922 = vmatpush1.msra.mxu0 0.0
    %1923 = vmatprep.subr.mxu0 0.0
    %1924 = vmatpush1.msra.mxu0 0.0
    %1925 = vmatprep.subr.mxu0 0.0
    %1926 = vmatpush1.msra.mxu0 0.0
    %1927 = vmatprep.subr.mxu0 0.0
    %1928 = vmatpush1.msra.mxu0 0.0
    %1929 = vmatprep.subr.mxu0 0.0
    %1930 = vmatpush1.msra.mxu0 0.0
    %1931 = vmatprep.subr.mxu0 0.0
    %1932 = vmatpush1.msra.mxu0 0.0
    %1933 = vmatprep.subr.mxu0 0.0
    %1934 = vmatpush1.msra.mxu0 0.0
    %1935 = vmatprep.subr.mxu0 0.0
    %1936 = vmatpush1.msra.mxu0 0.0
    %1937 = vmatprep.subr.mxu0 0.0
    %1938 = vmatpush1.msra.mxu0 0.0
    %1939 = vmatprep.subr.mxu0 0.0
    %1940 = vmatpush1.msra.mxu0 0.0
    %1941 = vmatprep.mubr.f32.mxu0 0.0
    %1942 = vmatmul.mubr.f32.gmra.mrb[0].mxu0 %v1875
    %v1943 = vpop.f32.mrb[0].mxu0
    %v1944 = vadd.f32 0.0, %v1943
    %v1945 = vpop.f32.mrb[0].mxu0
    %1946 = vdwg.mxu0
    %v1947 = vadd.f32 %v174, %v1944
    %1948 = vmatprep.subr.mxu0 0.0
    %1949 = vmatpush1.msra.mxu0 %v478
    %1950 = vmatprep.subr.mxu0 0.0
    %1951 = vmatpush1.msra.mxu0 %v479
    %1952 = vmatprep.subr.mxu0 0.0
    %1953 = vmatpush1.msra.mxu0 %v480
    %1954 = vmatprep.subr.mxu0 0.0
    %1955 = vmatpush1.msra.mxu0 %v481
    %1956 = vmatprep.subr.mxu0 0.0
    %1957 = vmatpush1.msra.mxu0 %v482
    %1958 = vmatprep.subr.mxu0 0.0
    %1959 = vmatpush1.msra.mxu0 %v483
    %1960 = vmatprep.subr.mxu0 0.0
    %1961 = vmatpush1.msra.mxu0 %v484
    %1962 = vmatprep.subr.mxu0 0.0
    %1963 = vmatpush1.msra.mxu0 %v485
    %1964 = vmatprep.subr.mxu0 0.0
    %1965 = vmatpush1.msra.mxu0 %v486
    %1966 = vmatprep.subr.mxu0 0.0
    %1967 = vmatpush1.msra.mxu0 %v487
    %1968 = vmatprep.subr.mxu0 0.0
    %1969 = vmatpush1.msra.mxu0 %v488
    %1970 = vmatprep.subr.mxu0 0.0
    %1971 = vmatpush1.msra.mxu0 %v489
    %1972 = vmatprep.subr.mxu0 0.0
    %1973 = vmatpush1.msra.mxu0 0.0
    %1974 = vmatprep.subr.mxu0 0.0
    %1975 = vmatpush1.msra.mxu0 0.0
    %1976 = vmatprep.subr.mxu0 0.0
    %1977 = vmatpush1.msra.mxu0 0.0
    %1978 = vmatprep.subr.mxu0 0.0
    %1979 = vmatpush1.msra.mxu0 0.0
    %1980 = vmatprep.subr.mxu0 0.0
    %1981 = vmatpush1.msra.mxu0 0.0
    %1982 = vmatprep.subr.mxu0 0.0
    %1983 = vmatpush1.msra.mxu0 0.0
    %1984 = vmatprep.subr.mxu0 0.0
    %1985 = vmatpush1.msra.mxu0 0.0
    %1986 = vmatprep.subr.mxu0 0.0
    %1987 = vmatpush1.msra.mxu0 0.0
    %1988 = vmatprep.subr.mxu0 0.0
    %1989 = vmatpush1.msra.mxu0 0.0
    %1990 = vmatprep.subr.mxu0 0.0
    %1991 = vmatpush1.msra.mxu0 0.0
    %1992 = vmatprep.subr.mxu0 0.0
    %1993 = vmatpush1.msra.mxu0 0.0
    %1994 = vmatprep.subr.mxu0 0.0
    %1995 = vmatpush1.msra.mxu0 0.0
    %1996 = vmatprep.subr.mxu0 0.0
    %1997 = vmatpush1.msra.mxu0 0.0
    %1998 = vmatprep.subr.mxu0 0.0
    %1999 = vmatpush1.msra.mxu0 0.0
    %2000 = vmatprep.subr.mxu0 0.0
    %2001 = vmatpush1.msra.mxu0 0.0
    %2002 = vmatprep.subr.mxu0 0.0
    %2003 = vmatpush1.msra.mxu0 0.0
    %2004 = vmatprep.subr.mxu0 0.0
    %2005 = vmatpush1.msra.mxu0 0.0
    %2006 = vmatprep.subr.mxu0 0.0
    %2007 = vmatpush1.msra.mxu0 0.0
    %2008 = vmatprep.subr.mxu0 0.0
    %2009 = vmatpush1.msra.mxu0 0.0
    %2010 = vmatprep.subr.mxu0 0.0
    %2011 = vmatpush1.msra.mxu0 0.0
    %2012 = vmatprep.mubr.f32.mxu0 0.0
    %2013 = vmatmul.mubr.f32.gmra.mrb[0].mxu0 %v1875
    %v2014 = vpop.f32.mrb[0].mxu0
    %v2015 = vadd.f32 0.0, %v2014
    %v2016 = vpop.f32.mrb[0].mxu0
    %2017 = vdwg.mxu0
    %v2018 = vadd.f32 %v270, %v2015
    %2019 = vmatprep.subr.mxu0 0.0
    %2020 = vmatpush1.msra.mxu0 %v491
    %2021 = vmatprep.subr.mxu0 0.0
    %2022 = vmatpush1.msra.mxu0 %v492
    %2023 = vmatprep.subr.mxu0 0.0
    %2024 = vmatpush1.msra.mxu0 %v493
    %2025 = vmatprep.subr.mxu0 0.0
    %2026 = vmatpush1.msra.mxu0 %v494
    %2027 = vmatprep.subr.mxu0 0.0
    %2028 = vmatpush1.msra.mxu0 %v495
    %2029 = vmatprep.subr.mxu0 0.0
    %2030 = vmatpush1.msra.mxu0 %v496
    %2031 = vmatprep.subr.mxu0 0.0
    %2032 = vmatpush1.msra.mxu0 %v497
    %2033 = vmatprep.subr.mxu0 0.0
    %2034 = vmatpush1.msra.mxu0 %v498
    %2035 = vmatprep.subr.mxu0 0.0
    %2036 = vmatpush1.msra.mxu0 %v499
    %2037 = vmatprep.subr.mxu0 0.0
    %2038 = vmatpush1.msra.mxu0 %v500
    %2039 = vmatprep.subr.mxu0 0.0
    %2040 = vmatpush1.msra.mxu0 %v501
    %2041 = vmatprep.subr.mxu0 0.0
    %2042 = vmatpush1.msra.mxu0 %v502
    %2043 = vmatprep.subr.mxu0 0.0
    %2044 = vmatpush1.msra.mxu0 0.0
    %2045 = vmatprep.subr.mxu0 0.0
    %2046 = vmatpush1.msra.mxu0 0.0
    %2047 = vmatprep.subr.mxu0 0.0
    %2048 = vmatpush1.msra.mxu0 0.0
    %2049 = vmatprep.subr.mxu0 0.0
    %2050 = vmatpush1.msra.mxu0 0.0
    %2051 = vmatprep.subr.mxu0 0.0
    %2052 = vmatpush1.msra.mxu0 0.0
    %2053 = vmatprep.subr.mxu0 0.0
    %2054 = vmatpush1.msra.mxu0 0.0
    %2055 = vmatprep.subr.mxu0 0.0
    %2056 = vmatpush1.msra.mxu0 0.0
    %2057 = vmatprep.subr.mxu0 0.0
    %2058 = vmatpush1.msra.mxu0 0.0
    %2059 = vmatprep.subr.mxu0 0.0
    %2060 = vmatpush1.msra.mxu0 0.0
    %2061 = vmatprep.subr.mxu0 0.0
    %2062 = vmatpush1.msra.mxu0 0.0
    %2063 = vmatprep.subr.mxu0 0.0
    %2064 = vmatpush1.msra.mxu0 0.0
    %2065 = vmatprep.subr.mxu0 0.0
    %2066 = vmatpush1.msra.mxu0 0.0
    %2067 = vmatprep.subr.mxu0 0.0
    %2068 = vmatpush1.msra.mxu0 0.0
    %2069 = vmatprep.subr.mxu0 0.0
    %2070 = vmatpush1.msra.mxu0 0.0
    %2071 = vmatprep.subr.mxu0 0.0
    %2072 = vmatpush1.msra.mxu0 0.0
    %2073 = vmatprep.subr.mxu0 0.0
    %2074 = vmatpush1.msra.mxu0 0.0
    %2075 = vmatprep.subr.mxu0 0.0
    %2076 = vmatpush1.msra.mxu0 0.0
    %2077 = vmatprep.subr.mxu0 0.0
    %2078 = vmatpush1.msra.mxu0 0.0
    %2079 = vmatprep.subr.mxu0 0.0
    %2080 = vmatpush1.msra.mxu0 0.0
    %2081 = vmatprep.subr.mxu0 0.0
    %2082 = vmatpush1.msra.mxu0 0.0
    %2083 = vmatprep.mubr.f32.mxu0 0.0
    %2084 = vmatmul.mubr.f32.gmra.mrb[0].mxu0 %v1875
    %v2085 = vpop.f32.mrb[0].mxu0
    %v2086 = vadd.f32 0.0, %v2085
    %v2087 = vpop.f32.mrb[0].mxu0
    %2088 = vdwg.mxu0
    %v2089 = vadd.f32 %v366, %v2086
    %2090 = vmatprep.subr.mxu0 0.0
    %2091 = vmatpush1.msra.mxu0 %v504
    %2092 = vmatprep.subr.mxu0 0.0
    %2093 = vmatpush1.msra.mxu0 %v505
    %2094 = vmatprep.subr.mxu0 0.0
    %2095 = vmatpush1.msra.mxu0 %v506
    %2096 = vmatprep.subr.mxu0 0.0
    %2097 = vmatpush1.msra.mxu0 %v507
    %2098 = vmatprep.subr.mxu0 0.0
    %2099 = vmatpush1.msra.mxu0 %v508
    %2100 = vmatprep.subr.mxu0 0.0
    %2101 = vmatpush1.msra.mxu0 %v509
    %2102 = vmatprep.subr.mxu0 0.0
    %2103 = vmatpush1.msra.mxu0 %v510
    %2104 = vmatprep.subr.mxu0 0.0
    %2105 = vmatpush1.msra.mxu0 %v511
    %2106 = vmatprep.subr.mxu0 0.0
    %2107 = vmatpush1.msra.mxu0 %v512
    %2108 = vmatprep.subr.mxu0 0.0
    %2109 = vmatpush1.msra.mxu0 %v513
    %2110 = vmatprep.subr.mxu0 0.0
    %2111 = vmatpush1.msra.mxu0 %v514
    %2112 = vmatprep.subr.mxu0 0.0
    %2113 = vmatpush1.msra.mxu0 %v515
    %2114 = vmatprep.subr.mxu0 0.0
    %2115 = vmatpush1.msra.mxu0 0.0
    %2116 = vmatprep.subr.mxu0 0.0
    %2117 = vmatpush1.msra.mxu0 0.0
    %2118 = vmatprep.subr.mxu0 0.0
    %2119 = vmatpush1.msra.mxu0 0.0
    %2120 = vmatprep.subr.mxu0 0.0
    %2121 = vmatpush1.msra.mxu0 0.0
    %2122 = vmatprep.subr.mxu0 0.0
    %2123 = vmatpush1.msra.mxu0 0.0
    %2124 = vmatprep.subr.mxu0 0.0
    %2125 = vmatpush1.msra.mxu0 0.0
    %2126 = vmatprep.subr.mxu0 0.0
    %2127 = vmatpush1.msra.mxu0 0.0
    %2128 = vmatprep.subr.mxu0 0.0
    %2129 = vmatpush1.msra.mxu0 0.0
    %2130 = vmatprep.subr.mxu0 0.0
    %2131 = vmatpush1.msra.mxu0 0.0
    %2132 = vmatprep.subr.mxu0 0.0
    %2133 = vmatpush1.msra.mxu0 0.0
    %2134 = vmatprep.subr.mxu0 0.0
    %2135 = vmatpush1.msra.mxu0 0.0
    %2136 = vmatprep.subr.mxu0 0.0
    %2137 = vmatpush1.msra.mxu0 0.0
    %2138 = vmatprep.subr.mxu0 0.0
    %2139 = vmatpush1.msra.mxu0 0.0
    %2140 = vmatprep.subr.mxu0 0.0
    %2141 = vmatpush1.msra.mxu0 0.0
    %2142 = vmatprep.subr.mxu0 0.0
    %2143 = vmatpush1.msra.mxu0 0.0
    %2144 = vmatprep.subr.mxu0 0.0
    %2145 = vmatpush1.msra.mxu0 0.0
    %2146 = vmatprep.subr.mxu0 0.0
    %2147 = vmatpush1.msra.mxu0 0.0
    %2148 = vmatprep.subr.mxu0 0.0
    %2149 = vmatpush1.msra.mxu0 0.0
    %2150 = vmatprep.subr.mxu0 0.0
    %2151 = vmatpush1.msra.mxu0 0.0
    %2152 = vmatprep.subr.mxu0 0.0
    %2153 = vmatpush1.msra.mxu0 0.0
    %2154 = vmatprep.mubr.f32.mxu0 0.0
    %2155 = vmatmul.mubr.f32.gmra.mrb[0].mxu0 %v1875
    %v2156 = vpop.f32.mrb[0].mxu0
    %v2157 = vadd.f32 0.0, %v2156
    %v2158 = vpop.f32.mrb[0].mxu0
    %2159 = vdwg.mxu0
    %v2160 = vadd.f32 %v462, %v2157
    %v2161 = vxor.u32 %v1947, 2147483648
    %v2162 = vmul.f32 %v2161, 1.442695
    %v2163 = vpow.pop %v2162
    %v2164 = vadd.f32 %v2163, 1.0
    %v2165 = vrcp.pop %v2164
    %v2166 = vmul.f32 1.0, %v2165
    %v2167 = vxor.u32 %v2018, 2147483648
    %v2168 = vmul.f32 %v2167, 1.442695
    %v2169 = vpow.pop %v2168
    %v2170 = vadd.f32 %v2169, 1.0
    %v2171 = vrcp.pop %v2170
    %v2172 = vmul.f32 1.0, %v2171
    %v2173 = vtanh.pop %v2089
    %v2174 = vxor.u32 %v2160, 2147483648
    %v2175 = vmul.f32 %v2174, 1.442695
    %v2176 = vpow.pop %v2175
    %v2177 = vadd.f32 %v2176, 1.0
    %v2178 = vrcp.pop %v2177
    %v2179 = vmul.f32 1.0, %v2178
    %v2180 = vmul.f32 %v2172, %v1869
    %v2181 = vmul.f32 %v2166, %v2173
    %v2182 = vadd.f32 %v2180, %v2181
    %v2183 = vtanh.pop %v2182
    %v2184 = vmul.f32 %v2179, %v2183
    %vm2185 = vcmp.gt.s32.totalorder %v554, 4
    %v2186 = vsel %vm2185, %v2182, %v1869
    %v2187 = vsel %vm2185, %v2184, %v1873
    %v2189 = vsel %vm95, %v2187, 0
    %2191 = vmatprep.subr.mxu0 0.0
    %2192 = vmatpush1.msra.mxu0 %v465
    %2193 = vmatprep.subr.mxu0 0.0
    %2194 = vmatpush1.msra.mxu0 %v466
    %2195 = vmatprep.subr.mxu0 0.0
    %2196 = vmatpush1.msra.mxu0 %v467
    %2197 = vmatprep.subr.mxu0 0.0
    %2198 = vmatpush1.msra.mxu0 %v468
    %2199 = vmatprep.subr.mxu0 0.0
    %2200 = vmatpush1.msra.mxu0 %v469
    %2201 = vmatprep.subr.mxu0 0.0
    %2202 = vmatpush1.msra.mxu0 %v470
    %2203 = vmatprep.subr.mxu0 0.0
    %2204 = vmatpush1.msra.mxu0 %v471
    %2205 = vmatprep.subr.mxu0 0.0
    %2206 = vmatpush1.msra.mxu0 %v472
    %2207 = vmatprep.subr.mxu0 0.0
    %2208 = vmatpush1.msra.mxu0 %v473
    %2209 = vmatprep.subr.mxu0 0.0
    %2210 = vmatpush1.msra.mxu0 %v474
    %2211 = vmatprep.subr.mxu0 0.0
    %2212 = vmatpush1.msra.mxu0 %v475
    %2213 = vmatprep.subr.mxu0 0.0
    %2214 = vmatpush1.msra.mxu0 %v476
    %2215 = vmatprep.subr.mxu0 0.0
    %2216 = vmatpush1.msra.mxu0 0.0
    %2217 = vmatprep.subr.mxu0 0.0
    %2218 = vmatpush1.msra.mxu0 0.0
    %2219 = vmatprep.subr.mxu0 0.0
    %2220 = vmatpush1.msra.mxu0 0.0
    %2221 = vmatprep.subr.mxu0 0.0
    %2222 = vmatpush1.msra.mxu0 0.0
    %2223 = vmatprep.subr.mxu0 0.0
    %2224 = vmatpush1.msra.mxu0 0.0
    %2225 = vmatprep.subr.mxu0 0.0
    %2226 = vmatpush1.msra.mxu0 0.0
    %2227 = vmatprep.subr.mxu0 0.0
    %2228 = vmatpush1.msra.mxu0 0.0
    %2229 = vmatprep.subr.mxu0 0.0
    %2230 = vmatpush1.msra.mxu0 0.0
    %2231 = vmatprep.subr.mxu0 0.0
    %2232 = vmatpush1.msra.mxu0 0.0
    %2233 = vmatprep.subr.mxu0 0.0
    %2234 = vmatpush1.msra.mxu0 0.0
    %2235 = vmatprep.subr.mxu0 0.0
    %2236 = vmatpush1.msra.mxu0 0.0
    %2237 = vmatprep.subr.mxu0 0.0
    %2238 = vmatpush1.msra.mxu0 0.0
    %2239 = vmatprep.subr.mxu0 0.0
    %2240 = vmatpush1.msra.mxu0 0.0
    %2241 = vmatprep.subr.mxu0 0.0
    %2242 = vmatpush1.msra.mxu0 0.0
    %2243 = vmatprep.subr.mxu0 0.0
    %2244 = vmatpush1.msra.mxu0 0.0
    %2245 = vmatprep.subr.mxu0 0.0
    %2246 = vmatpush1.msra.mxu0 0.0
    %2247 = vmatprep.subr.mxu0 0.0
    %2248 = vmatpush1.msra.mxu0 0.0
    %2249 = vmatprep.subr.mxu0 0.0
    %2250 = vmatpush1.msra.mxu0 0.0
    %2251 = vmatprep.subr.mxu0 0.0
    %2252 = vmatpush1.msra.mxu0 0.0
    %2253 = vmatprep.subr.mxu0 0.0
    %2254 = vmatpush1.msra.mxu0 0.0
    %2255 = vmatprep.mubr.f32.mxu0 0.0
    %2256 = vmatmul.mubr.f32.gmra.mrb[0].mxu0 %v2189
    %v2257 = vpop.f32.mrb[0].mxu0
    %v2258 = vadd.f32 0.0, %v2257
    %v2259 = vpop.f32.mrb[0].mxu0
    %2260 = vdwg.mxu0
    %v2262 = vrot.slane %v2258, 6
    %v2264 = vadd.f32 %v174, %v2262
    %2265 = vmatprep.subr.mxu0 0.0
    %2266 = vmatpush1.msra.mxu0 %v478
    %2267 = vmatprep.subr.mxu0 0.0
    %2268 = vmatpush1.msra.mxu0 %v479
    %2269 = vmatprep.subr.mxu0 0.0
    %2270 = vmatpush1.msra.mxu0 %v480
    %2271 = vmatprep.subr.mxu0 0.0
    %2272 = vmatpush1.msra.mxu0 %v481
    %2273 = vmatprep.subr.mxu0 0.0
    %2274 = vmatpush1.msra.mxu0 %v482
    %2275 = vmatprep.subr.mxu0 0.0
    %2276 = vmatpush1.msra.mxu0 %v483
    %2277 = vmatprep.subr.mxu0 0.0
    %2278 = vmatpush1.msra.mxu0 %v484
    %2279 = vmatprep.subr.mxu0 0.0
    %2280 = vmatpush1.msra.mxu0 %v485
    %2281 = vmatprep.subr.mxu0 0.0
    %2282 = vmatpush1.msra.mxu0 %v486
    %2283 = vmatprep.subr.mxu0 0.0
    %2284 = vmatpush1.msra.mxu0 %v487
    %2285 = vmatprep.subr.mxu0 0.0
    %2286 = vmatpush1.msra.mxu0 %v488
    %2287 = vmatprep.subr.mxu0 0.0
    %2288 = vmatpush1.msra.mxu0 %v489
    %2289 = vmatprep.subr.mxu0 0.0
    %2290 = vmatpush1.msra.mxu0 0.0
    %2291 = vmatprep.subr.mxu0 0.0
    %2292 = vmatpush1.msra.mxu0 0.0
    %2293 = vmatprep.subr.mxu0 0.0
    %2294 = vmatpush1.msra.mxu0 0.0
    %2295 = vmatprep.subr.mxu0 0.0
    %2296 = vmatpush1.msra.mxu0 0.0
    %2297 = vmatprep.subr.mxu0 0.0
    %2298 = vmatpush1.msra.mxu0 0.0
    %2299 = vmatprep.subr.mxu0 0.0
    %2300 = vmatpush1.msra.mxu0 0.0
    %2301 = vmatprep.subr.mxu0 0.0
    %2302 = vmatpush1.msra.mxu0 0.0
    %2303 = vmatprep.subr.mxu0 0.0
    %2304 = vmatpush1.msra.mxu0 0.0
    %2305 = vmatprep.subr.mxu0 0.0
    %2306 = vmatpush1.msra.mxu0 0.0
    %2307 = vmatprep.subr.mxu0 0.0
    %2308 = vmatpush1.msra.mxu0 0.0
    %2309 = vmatprep.subr.mxu0 0.0
    %2310 = vmatpush1.msra.mxu0 0.0
    %2311 = vmatprep.subr.mxu0 0.0
    %2312 = vmatpush1.msra.mxu0 0.0
    %2313 = vmatprep.subr.mxu0 0.0
    %2314 = vmatpush1.msra.mxu0 0.0
    %2315 = vmatprep.subr.mxu0 0.0
    %2316 = vmatpush1.msra.mxu0 0.0
    %2317 = vmatprep.subr.mxu0 0.0
    %2318 = vmatpush1.msra.mxu0 0.0
    %2319 = vmatprep.subr.mxu0 0.0
    %2320 = vmatpush1.msra.mxu0 0.0
    %2321 = vmatprep.subr.mxu0 0.0
    %2322 = vmatpush1.msra.mxu0 0.0
    %2323 = vmatprep.subr.mxu0 0.0
    %2324 = vmatpush1.msra.mxu0 0.0
    %2325 = vmatprep.subr.mxu0 0.0
    %2326 = vmatpush1.msra.mxu0 0.0
    %2327 = vmatprep.subr.mxu0 0.0
    %2328 = vmatpush1.msra.mxu0 0.0
    %2329 = vmatprep.mubr.f32.mxu0 0.0
    %2330 = vmatmul.mubr.f32.gmra.mrb[0].mxu0 %v2189
    %v2331 = vpop.f32.mrb[0].mxu0
    %v2332 = vadd.f32 0.0, %v2331
    %v2333 = vpop.f32.mrb[0].mxu0
    %2334 = vdwg.mxu0
    %v2336 = vrot.slane %v2332, 6
    %v2338 = vadd.f32 %v270, %v2336
    %2339 = vmatprep.subr.mxu0 0.0
    %2340 = vmatpush1.msra.mxu0 %v491
    %2341 = vmatprep.subr.mxu0 0.0
    %2342 = vmatpush1.msra.mxu0 %v492
    %2343 = vmatprep.subr.mxu0 0.0
    %2344 = vmatpush1.msra.mxu0 %v493
    %2345 = vmatprep.subr.mxu0 0.0
    %2346 = vmatpush1.msra.mxu0 %v494
    %2347 = vmatprep.subr.mxu0 0.0
    %2348 = vmatpush1.msra.mxu0 %v495
    %2349 = vmatprep.subr.mxu0 0.0
    %2350 = vmatpush1.msra.mxu0 %v496
    %2351 = vmatprep.subr.mxu0 0.0
    %2352 = vmatpush1.msra.mxu0 %v497
    %2353 = vmatprep.subr.mxu0 0.0
    %2354 = vmatpush1.msra.mxu0 %v498
    %2355 = vmatprep.subr.mxu0 0.0
    %2356 = vmatpush1.msra.mxu0 %v499
    %2357 = vmatprep.subr.mxu0 0.0
    %2358 = vmatpush1.msra.mxu0 %v500
    %2359 = vmatprep.subr.mxu0 0.0
    %2360 = vmatpush1.msra.mxu0 %v501
    %2361 = vmatprep.subr.mxu0 0.0
    %2362 = vmatpush1.msra.mxu0 %v502
    %2363 = vmatprep.subr.mxu0 0.0
    %2364 = vmatpush1.msra.mxu0 0.0
    %2365 = vmatprep.subr.mxu0 0.0
    %2366 = vmatpush1.msra.mxu0 0.0
    %2367 = vmatprep.subr.mxu0 0.0
    %2368 = vmatpush1.msra.mxu0 0.0
    %2369 = vmatprep.subr.mxu0 0.0
    %2370 = vmatpush1.msra.mxu0 0.0
    %2371 = vmatprep.subr.mxu0 0.0
    %2372 = vmatpush1.msra.mxu0 0.0
    %2373 = vmatprep.subr.mxu0 0.0
    %2374 = vmatpush1.msra.mxu0 0.0
    %2375 = vmatprep.subr.mxu0 0.0
    %2376 = vmatpush1.msra.mxu0 0.0
    %2377 = vmatprep.subr.mxu0 0.0
    %2378 = vmatpush1.msra.mxu0 0.0
    %2379 = vmatprep.subr.mxu0 0.0
    %2380 = vmatpush1.msra.mxu0 0.0
    %2381 = vmatprep.subr.mxu0 0.0
    %2382 = vmatpush1.msra.mxu0 0.0
    %2383 = vmatprep.subr.mxu0 0.0
    %2384 = vmatpush1.msra.mxu0 0.0
    %2385 = vmatprep.subr.mxu0 0.0
    %2386 = vmatpush1.msra.mxu0 0.0
    %2387 = vmatprep.subr.mxu0 0.0
    %2388 = vmatpush1.msra.mxu0 0.0
    %2389 = vmatprep.subr.mxu0 0.0
    %2390 = vmatpush1.msra.mxu0 0.0
    %2391 = vmatprep.subr.mxu0 0.0
    %2392 = vmatpush1.msra.mxu0 0.0
    %2393 = vmatprep.subr.mxu0 0.0
    %2394 = vmatpush1.msra.mxu0 0.0
    %2395 = vmatprep.subr.mxu0 0.0
    %2396 = vmatpush1.msra.mxu0 0.0
    %2397 = vmatprep.subr.mxu0 0.0
    %2398 = vmatpush1.msra.mxu0 0.0
    %2399 = vmatprep.subr.mxu0 0.0
    %2400 = vmatpush1.msra.mxu0 0.0
    %2401 = vmatprep.subr.mxu0 0.0
    %2402 = vmatpush1.msra.mxu0 0.0
    %2403 = vmatprep.mubr.f32.mxu0 0.0
    %2404 = vmatmul.mubr.f32.gmra.mrb[0].mxu0 %v2189
    %v2405 = vpop.f32.mrb[0].mxu0
    %v2406 = vadd.f32 0.0, %v2405
    %v2407 = vpop.f32.mrb[0].mxu0
    %2408 = vdwg.mxu0
    %v2410 = vrot.slane %v2406, 6
    %v2412 = vadd.f32 %v366, %v2410
    %2413 = vmatprep.subr.mxu0 0.0
    %2414 = vmatpush1.msra.mxu0 %v504
    %2415 = vmatprep.subr.mxu0 0.0
    %2416 = vmatpush1.msra.mxu0 %v505
    %2417 = vmatprep.subr.mxu0 0.0
    %2418 = vmatpush1.msra.mxu0 %v506
    %2419 = vmatprep.subr.mxu0 0.0
    %2420 = vmatpush1.msra.mxu0 %v507
    %2421 = vmatprep.subr.mxu0 0.0
    %2422 = vmatpush1.msra.mxu0 %v508
    %2423 = vmatprep.subr.mxu0 0.0
    %2424 = vmatpush1.msra.mxu0 %v509
    %2425 = vmatprep.subr.mxu0 0.0
    %2426 = vmatpush1.msra.mxu0 %v510
    %2427 = vmatprep.subr.mxu0 0.0
    %2428 = vmatpush1.msra.mxu0 %v511
    %2429 = vmatprep.subr.mxu0 0.0
    %2430 = vmatpush1.msra.mxu0 %v512
    %2431 = vmatprep.subr.mxu0 0.0
    %2432 = vmatpush1.msra.mxu0 %v513
    %2433 = vmatprep.subr.mxu0 0.0
    %2434 = vmatpush1.msra.mxu0 %v514
    %2435 = vmatprep.subr.mxu0 0.0
    %2436 = vmatpush1.msra.mxu0 %v515
    %2437 = vmatprep.subr.mxu0 0.0
    %2438 = vmatpush1.msra.mxu0 0.0
    %2439 = vmatprep.subr.mxu0 0.0
    %2440 = vmatpush1.msra.mxu0 0.0
    %2441 = vmatprep.subr.mxu0 0.0
    %2442 = vmatpush1.msra.mxu0 0.0
    %2443 = vmatprep.subr.mxu0 0.0
    %2444 = vmatpush1.msra.mxu0 0.0
    %2445 = vmatprep.subr.mxu0 0.0
    %2446 = vmatpush1.msra.mxu0 0.0
    %2447 = vmatprep.subr.mxu0 0.0
    %2448 = vmatpush1.msra.mxu0 0.0
    %2449 = vmatprep.subr.mxu0 0.0
    %2450 = vmatpush1.msra.mxu0 0.0
    %2451 = vmatprep.subr.mxu0 0.0
    %2452 = vmatpush1.msra.mxu0 0.0
    %2453 = vmatprep.subr.mxu0 0.0
    %2454 = vmatpush1.msra.mxu0 0.0
    %2455 = vmatprep.subr.mxu0 0.0
    %2456 = vmatpush1.msra.mxu0 0.0
    %2457 = vmatprep.subr.mxu0 0.0
    %2458 = vmatpush1.msra.mxu0 0.0
    %2459 = vmatprep.subr.mxu0 0.0
    %2460 = vmatpush1.msra.mxu0 0.0
    %2461 = vmatprep.subr.mxu0 0.0
    %2462 = vmatpush1.msra.mxu0 0.0
    %2463 = vmatprep.subr.mxu0 0.0
    %2464 = vmatpush1.msra.mxu0 0.0
    %2465 = vmatprep.subr.mxu0 0.0
    %2466 = vmatpush1.msra.mxu0 0.0
    %2467 = vmatprep.subr.mxu0 0.0
    %2468 = vmatpush1.msra.mxu0 0.0
    %2469 = vmatprep.subr.mxu0 0.0
    %2470 = vmatpush1.msra.mxu0 0.0
    %2471 = vmatprep.subr.mxu0 0.0
    %2472 = vmatpush1.msra.mxu0 0.0
    %2473 = vmatprep.subr.mxu0 0.0
    %2474 = vmatpush1.msra.mxu0 0.0
    %2475 = vmatprep.subr.mxu0 0.0
    %2476 = vmatpush1.msra.mxu0 0.0
    %2477 = vmatprep.mubr.f32.mxu0 0.0
    %2478 = vmatmul.mubr.f32.gmra.mrb[0].mxu0 %v2189
    %v2479 = vpop.f32.mrb[0].mxu0
    %v2480 = vadd.f32 0.0, %v2479
    %v2481 = vpop.f32.mrb[0].mxu0
    %2482 = vdwg.mxu0
    %v2484 = vrot.slane %v2480, 6
    %v2486 = vadd.f32 %v462, %v2484
    %v2487 = vxor.u32 %v2264, 2147483648
    %v2488 = vmul.f32 %v2487, 1.442695
    %v2489 = vpow.pop %v2488
    %v2490 = vadd.f32 %v2489, 1.0
    %v2491 = vrcp.pop %v2490
    %v2492 = vmul.f32 1.0, %v2491
    %v2493 = vxor.u32 %v2338, 2147483648
    %v2494 = vmul.f32 %v2493, 1.442695
    %v2495 = vpow.pop %v2494
    %v2496 = vadd.f32 %v2495, 1.0
    %v2497 = vrcp.pop %v2496
    %v2498 = vmul.f32 1.0, %v2497
    %v2499 = vtanh.pop %v2412
    %v2500 = vxor.u32 %v2486, 2147483648
    %v2501 = vmul.f32 %v2500, 1.442695
    %v2502 = vpow.pop %v2501
    %v2503 = vadd.f32 %v2502, 1.0
    %v2504 = vrcp.pop %v2503
    %v2505 = vmul.f32 1.0, %v2504
    %v2507 = vrot.slane %v2186, 6
    %v2509 = vmul.f32 %v2498, %v2507
    %v2510 = vmul.f32 %v2492, %v2499
    %v2511 = vadd.f32 %v2509, %v2510
    %v2512 = vtanh.pop %v2511
    %v2513 = vmul.f32 %v2505, %v2512
    %vm2514 = vcmp.gt.s32.totalorder %v554, 5
    %v2516 = vrot.slane %v2511, 2
    %v2518 = vsel %vm2514, %v2516, %v2186
    %v2520 = vrot.slane %v2513, 2
    %v2522 = vsel %vm2514, %v2520, %v2187
    %v2524 = vsel %vm95, %v2522, 0
    %2526 = vmatprep.subr.mxu0 0.0
    %2527 = vmatpush1.msra.mxu0 %v465
    %2528 = vmatprep.subr.mxu0 0.0
    %2529 = vmatpush1.msra.mxu0 %v466
    %2530 = vmatprep.subr.mxu0 0.0
    %2531 = vmatpush1.msra.mxu0 %v467
    %2532 = vmatprep.subr.mxu0 0.0
    %2533 = vmatpush1.msra.mxu0 %v468
    %2534 = vmatprep.subr.mxu0 0.0
    %2535 = vmatpush1.msra.mxu0 %v469
    %2536 = vmatprep.subr.mxu0 0.0
    %2537 = vmatpush1.msra.mxu0 %v470
    %2538 = vmatprep.subr.mxu0 0.0
    %2539 = vmatpush1.msra.mxu0 %v471
    %2540 = vmatprep.subr.mxu0 0.0
    %2541 = vmatpush1.msra.mxu0 %v472
    %2542 = vmatprep.subr.mxu0 0.0
    %2543 = vmatpush1.msra.mxu0 %v473
    %2544 = vmatprep.subr.mxu0 0.0
    %2545 = vmatpush1.msra.mxu0 %v474
    %2546 = vmatprep.subr.mxu0 0.0
    %2547 = vmatpush1.msra.mxu0 %v475
    %2548 = vmatprep.subr.mxu0 0.0
    %2549 = vmatpush1.msra.mxu0 %v476
    %2550 = vmatprep.subr.mxu0 0.0
    %2551 = vmatpush1.msra.mxu0 0.0
    %2552 = vmatprep.subr.mxu0 0.0
    %2553 = vmatpush1.msra.mxu0 0.0
    %2554 = vmatprep.subr.mxu0 0.0
    %2555 = vmatpush1.msra.mxu0 0.0
    %2556 = vmatprep.subr.mxu0 0.0
    %2557 = vmatpush1.msra.mxu0 0.0
    %2558 = vmatprep.subr.mxu0 0.0
    %2559 = vmatpush1.msra.mxu0 0.0
    %2560 = vmatprep.subr.mxu0 0.0
    %2561 = vmatpush1.msra.mxu0 0.0
    %2562 = vmatprep.subr.mxu0 0.0
    %2563 = vmatpush1.msra.mxu0 0.0
    %2564 = vmatprep.subr.mxu0 0.0
    %2565 = vmatpush1.msra.mxu0 0.0
    %2566 = vmatprep.subr.mxu0 0.0
    %2567 = vmatpush1.msra.mxu0 0.0
    %2568 = vmatprep.subr.mxu0 0.0
    %2569 = vmatpush1.msra.mxu0 0.0
    %2570 = vmatprep.subr.mxu0 0.0
    %2571 = vmatpush1.msra.mxu0 0.0
    %2572 = vmatprep.subr.mxu0 0.0
    %2573 = vmatpush1.msra.mxu0 0.0
    %2574 = vmatprep.subr.mxu0 0.0
    %2575 = vmatpush1.msra.mxu0 0.0
    %2576 = vmatprep.subr.mxu0 0.0
    %2577 = vmatpush1.msra.mxu0 0.0
    %2578 = vmatprep.subr.mxu0 0.0
    %2579 = vmatpush1.msra.mxu0 0.0
    %2580 = vmatprep.subr.mxu0 0.0
    %2581 = vmatpush1.msra.mxu0 0.0
    %2582 = vmatprep.subr.mxu0 0.0
    %2583 = vmatpush1.msra.mxu0 0.0
    %2584 = vmatprep.subr.mxu0 0.0
    %2585 = vmatpush1.msra.mxu0 0.0
    %2586 = vmatprep.subr.mxu0 0.0
    %2587 = vmatpush1.msra.mxu0 0.0
    %2588 = vmatprep.subr.mxu0 0.0
    %2589 = vmatpush1.msra.mxu0 0.0
    %2590 = vmatprep.mubr.f32.mxu0 0.0
    %2591 = vmatmul.mubr.f32.gmra.mrb[0].mxu0 %v2524
    %v2592 = vpop.f32.mrb[0].mxu0
    %v2593 = vadd.f32 0.0, %v2592
    %v2594 = vpop.f32.mrb[0].mxu0
    %2595 = vdwg.mxu0
    %v2597 = vrot.slane %v2593, 4
    %v2599 = vadd.f32 %v174, %v2597
    %2600 = vmatprep.subr.mxu0 0.0
    %2601 = vmatpush1.msra.mxu0 %v478
    %2602 = vmatprep.subr.mxu0 0.0
    %2603 = vmatpush1.msra.mxu0 %v479
    %2604 = vmatprep.subr.mxu0 0.0
    %2605 = vmatpush1.msra.mxu0 %v480
    %2606 = vmatprep.subr.mxu0 0.0
    %2607 = vmatpush1.msra.mxu0 %v481
    %2608 = vmatprep.subr.mxu0 0.0
    %2609 = vmatpush1.msra.mxu0 %v482
    %2610 = vmatprep.subr.mxu0 0.0
    %2611 = vmatpush1.msra.mxu0 %v483
    %2612 = vmatprep.subr.mxu0 0.0
    %2613 = vmatpush1.msra.mxu0 %v484
    %2614 = vmatprep.subr.mxu0 0.0
    %2615 = vmatpush1.msra.mxu0 %v485
    %2616 = vmatprep.subr.mxu0 0.0
    %2617 = vmatpush1.msra.mxu0 %v486
    %2618 = vmatprep.subr.mxu0 0.0
    %2619 = vmatpush1.msra.mxu0 %v487
    %2620 = vmatprep.subr.mxu0 0.0
    %2621 = vmatpush1.msra.mxu0 %v488
    %2622 = vmatprep.subr.mxu0 0.0
    %2623 = vmatpush1.msra.mxu0 %v489
    %2624 = vmatprep.subr.mxu0 0.0
    %2625 = vmatpush1.msra.mxu0 0.0
    %2626 = vmatprep.subr.mxu0 0.0
    %2627 = vmatpush1.msra.mxu0 0.0
    %2628 = vmatprep.subr.mxu0 0.0
    %2629 = vmatpush1.msra.mxu0 0.0
    %2630 = vmatprep.subr.mxu0 0.0
    %2631 = vmatpush1.msra.mxu0 0.0
    %2632 = vmatprep.subr.mxu0 0.0
    %2633 = vmatpush1.msra.mxu0 0.0
    %2634 = vmatprep.subr.mxu0 0.0
    %2635 = vmatpush1.msra.mxu0 0.0
    %2636 = vmatprep.subr.mxu0 0.0
    %2637 = vmatpush1.msra.mxu0 0.0
    %2638 = vmatprep.subr.mxu0 0.0
    %2639 = vmatpush1.msra.mxu0 0.0
    %2640 = vmatprep.subr.mxu0 0.0
    %2641 = vmatpush1.msra.mxu0 0.0
    %2642 = vmatprep.subr.mxu0 0.0
    %2643 = vmatpush1.msra.mxu0 0.0
    %2644 = vmatprep.subr.mxu0 0.0
    %2645 = vmatpush1.msra.mxu0 0.0
    %2646 = vmatprep.subr.mxu0 0.0
    %2647 = vmatpush1.msra.mxu0 0.0
    %2648 = vmatprep.subr.mxu0 0.0
    %2649 = vmatpush1.msra.mxu0 0.0
    %2650 = vmatprep.subr.mxu0 0.0
    %2651 = vmatpush1.msra.mxu0 0.0
    %2652 = vmatprep.subr.mxu0 0.0
    %2653 = vmatpush1.msra.mxu0 0.0
    %2654 = vmatprep.subr.mxu0 0.0
    %2655 = vmatpush1.msra.mxu0 0.0
    %2656 = vmatprep.subr.mxu0 0.0
    %2657 = vmatpush1.msra.mxu0 0.0
    %2658 = vmatprep.subr.mxu0 0.0
    %2659 = vmatpush1.msra.mxu0 0.0
    %2660 = vmatprep.subr.mxu0 0.0
    %2661 = vmatpush1.msra.mxu0 0.0
    %2662 = vmatprep.subr.mxu0 0.0
    %2663 = vmatpush1.msra.mxu0 0.0
    %2664 = vmatprep.mubr.f32.mxu0 0.0
    %2665 = vmatmul.mubr.f32.gmra.mrb[0].mxu0 %v2524
    %v2666 = vpop.f32.mrb[0].mxu0
    %v2667 = vadd.f32 0.0, %v2666
    %v2668 = vpop.f32.mrb[0].mxu0
    %2669 = vdwg.mxu0
    %v2671 = vrot.slane %v2667, 4
    %v2673 = vadd.f32 %v270, %v2671
    %2674 = vmatprep.subr.mxu0 0.0
    %2675 = vmatpush1.msra.mxu0 %v491
    %2676 = vmatprep.subr.mxu0 0.0
    %2677 = vmatpush1.msra.mxu0 %v492
    %2678 = vmatprep.subr.mxu0 0.0
    %2679 = vmatpush1.msra.mxu0 %v493
    %2680 = vmatprep.subr.mxu0 0.0
    %2681 = vmatpush1.msra.mxu0 %v494
    %2682 = vmatprep.subr.mxu0 0.0
    %2683 = vmatpush1.msra.mxu0 %v495
    %2684 = vmatprep.subr.mxu0 0.0
    %2685 = vmatpush1.msra.mxu0 %v496
    %2686 = vmatprep.subr.mxu0 0.0
    %2687 = vmatpush1.msra.mxu0 %v497
    %2688 = vmatprep.subr.mxu0 0.0
    %2689 = vmatpush1.msra.mxu0 %v498
    %2690 = vmatprep.subr.mxu0 0.0
    %2691 = vmatpush1.msra.mxu0 %v499
    %2692 = vmatprep.subr.mxu0 0.0
    %2693 = vmatpush1.msra.mxu0 %v500
    %2694 = vmatprep.subr.mxu0 0.0
    %2695 = vmatpush1.msra.mxu0 %v501
    %2696 = vmatprep.subr.mxu0 0.0
    %2697 = vmatpush1.msra.mxu0 %v502
    %2698 = vmatprep.subr.mxu0 0.0
    %2699 = vmatpush1.msra.mxu0 0.0
    %2700 = vmatprep.subr.mxu0 0.0
    %2701 = vmatpush1.msra.mxu0 0.0
    %2702 = vmatprep.subr.mxu0 0.0
    %2703 = vmatpush1.msra.mxu0 0.0
    %2704 = vmatprep.subr.mxu0 0.0
    %2705 = vmatpush1.msra.mxu0 0.0
    %2706 = vmatprep.subr.mxu0 0.0
    %2707 = vmatpush1.msra.mxu0 0.0
    %2708 = vmatprep.subr.mxu0 0.0
    %2709 = vmatpush1.msra.mxu0 0.0
    %2710 = vmatprep.subr.mxu0 0.0
    %2711 = vmatpush1.msra.mxu0 0.0
    %2712 = vmatprep.subr.mxu0 0.0
    %2713 = vmatpush1.msra.mxu0 0.0
    %2714 = vmatprep.subr.mxu0 0.0
    %2715 = vmatpush1.msra.mxu0 0.0
    %2716 = vmatprep.subr.mxu0 0.0
    %2717 = vmatpush1.msra.mxu0 0.0
    %2718 = vmatprep.subr.mxu0 0.0
    %2719 = vmatpush1.msra.mxu0 0.0
    %2720 = vmatprep.subr.mxu0 0.0
    %2721 = vmatpush1.msra.mxu0 0.0
    %2722 = vmatprep.subr.mxu0 0.0
    %2723 = vmatpush1.msra.mxu0 0.0
    %2724 = vmatprep.subr.mxu0 0.0
    %2725 = vmatpush1.msra.mxu0 0.0
    %2726 = vmatprep.subr.mxu0 0.0
    %2727 = vmatpush1.msra.mxu0 0.0
    %2728 = vmatprep.subr.mxu0 0.0
    %2729 = vmatpush1.msra.mxu0 0.0
    %2730 = vmatprep.subr.mxu0 0.0
    %2731 = vmatpush1.msra.mxu0 0.0
    %2732 = vmatprep.subr.mxu0 0.0
    %2733 = vmatpush1.msra.mxu0 0.0
    %2734 = vmatprep.subr.mxu0 0.0
    %2735 = vmatpush1.msra.mxu0 0.0
    %2736 = vmatprep.subr.mxu0 0.0
    %2737 = vmatpush1.msra.mxu0 0.0
    %2738 = vmatprep.mubr.f32.mxu0 0.0
    %2739 = vmatmul.mubr.f32.gmra.mrb[0].mxu0 %v2524
    %v2740 = vpop.f32.mrb[0].mxu0
    %v2741 = vadd.f32 0.0, %v2740
    %v2742 = vpop.f32.mrb[0].mxu0
    %2743 = vdwg.mxu0
    %v2745 = vrot.slane %v2741, 4
    %v2747 = vadd.f32 %v366, %v2745
    %2748 = vmatprep.subr.mxu0 0.0
    %2749 = vmatpush1.msra.mxu0 %v504
    %2750 = vmatprep.subr.mxu0 0.0
    %2751 = vmatpush1.msra.mxu0 %v505
    %2752 = vmatprep.subr.mxu0 0.0
    %2753 = vmatpush1.msra.mxu0 %v506
    %2754 = vmatprep.subr.mxu0 0.0
    %2755 = vmatpush1.msra.mxu0 %v507
    %2756 = vmatprep.subr.mxu0 0.0
    %2757 = vmatpush1.msra.mxu0 %v508
    %2758 = vmatprep.subr.mxu0 0.0
    %2759 = vmatpush1.msra.mxu0 %v509
    %2760 = vmatprep.subr.mxu0 0.0
    %2761 = vmatpush1.msra.mxu0 %v510
    %2762 = vmatprep.subr.mxu0 0.0
    %2763 = vmatpush1.msra.mxu0 %v511
    %2764 = vmatprep.subr.mxu0 0.0
    %2765 = vmatpush1.msra.mxu0 %v512
    %2766 = vmatprep.subr.mxu0 0.0
    %2767 = vmatpush1.msra.mxu0 %v513
    %2768 = vmatprep.subr.mxu0 0.0
    %2769 = vmatpush1.msra.mxu0 %v514
    %2770 = vmatprep.subr.mxu0 0.0
    %2771 = vmatpush1.msra.mxu0 %v515
    %2772 = vmatprep.subr.mxu0 0.0
    %2773 = vmatpush1.msra.mxu0 0.0
    %2774 = vmatprep.subr.mxu0 0.0
    %2775 = vmatpush1.msra.mxu0 0.0
    %2776 = vmatprep.subr.mxu0 0.0
    %2777 = vmatpush1.msra.mxu0 0.0
    %2778 = vmatprep.subr.mxu0 0.0
    %2779 = vmatpush1.msra.mxu0 0.0
    %2780 = vmatprep.subr.mxu0 0.0
    %2781 = vmatpush1.msra.mxu0 0.0
    %2782 = vmatprep.subr.mxu0 0.0
    %2783 = vmatpush1.msra.mxu0 0.0
    %2784 = vmatprep.subr.mxu0 0.0
    %2785 = vmatpush1.msra.mxu0 0.0
    %2786 = vmatprep.subr.mxu0 0.0
    %2787 = vmatpush1.msra.mxu0 0.0
    %2788 = vmatprep.subr.mxu0 0.0
    %2789 = vmatpush1.msra.mxu0 0.0
    %2790 = vmatprep.subr.mxu0 0.0
    %2791 = vmatpush1.msra.mxu0 0.0
    %2792 = vmatprep.subr.mxu0 0.0
    %2793 = vmatpush1.msra.mxu0 0.0
    %2794 = vmatprep.subr.mxu0 0.0
    %2795 = vmatpush1.msra.mxu0 0.0
    %2796 = vmatprep.subr.mxu0 0.0
    %2797 = vmatpush1.msra.mxu0 0.0
    %2798 = vmatprep.subr.mxu0 0.0
    %2799 = vmatpush1.msra.mxu0 0.0
    %2800 = vmatprep.subr.mxu0 0.0
    %2801 = vmatpush1.msra.mxu0 0.0
    %2802 = vmatprep.subr.mxu0 0.0
    %2803 = vmatpush1.msra.mxu0 0.0
    %2804 = vmatprep.subr.mxu0 0.0
    %2805 = vmatpush1.msra.mxu0 0.0
    %2806 = vmatprep.subr.mxu0 0.0
    %2807 = vmatpush1.msra.mxu0 0.0
    %2808 = vmatprep.subr.mxu0 0.0
    %2809 = vmatpush1.msra.mxu0 0.0
    %2810 = vmatprep.subr.mxu0 0.0
    %2811 = vmatpush1.msra.mxu0 0.0
    %2812 = vmatprep.mubr.f32.mxu0 0.0
    %2813 = vmatmul.mubr.f32.gmra.mrb[0].mxu0 %v2524
    %v2814 = vpop.f32.mrb[0].mxu0
    %v2815 = vadd.f32 0.0, %v2814
    %v2816 = vpop.f32.mrb[0].mxu0
    %2817 = vdwg.mxu0
    %v2819 = vrot.slane %v2815, 4
    %v2821 = vadd.f32 %v462, %v2819
    %v2822 = vxor.u32 %v2599, 2147483648
    %v2823 = vmul.f32 %v2822, 1.442695
    %v2824 = vpow.pop %v2823
    %v2825 = vadd.f32 %v2824, 1.0
    %v2826 = vrcp.pop %v2825
    %v2827 = vmul.f32 1.0, %v2826
    %v2828 = vxor.u32 %v2673, 2147483648
    %v2829 = vmul.f32 %v2828, 1.442695
    %v2830 = vpow.pop %v2829
    %v2831 = vadd.f32 %v2830, 1.0
    %v2832 = vrcp.pop %v2831
    %v2833 = vmul.f32 1.0, %v2832
    %v2834 = vtanh.pop %v2747
    %v2835 = vxor.u32 %v2821, 2147483648
    %v2836 = vmul.f32 %v2835, 1.442695
    %v2837 = vpow.pop %v2836
    %v2838 = vadd.f32 %v2837, 1.0
    %v2839 = vrcp.pop %v2838
    %v2840 = vmul.f32 1.0, %v2839
    %v2842 = vrot.slane %v2518, 4
    %v2844 = vmul.f32 %v2833, %v2842
    %v2845 = vmul.f32 %v2827, %v2834
    %v2846 = vadd.f32 %v2844, %v2845
    %v2847 = vtanh.pop %v2846
    %v2848 = vmul.f32 %v2840, %v2847
    %vm2849 = vcmp.gt.s32.totalorder %v554, 6
    %v2851 = vrot.slane %v2846, 4
    %v2853 = vsel %vm2849, %v2851, %v2518
    %v2855 = vrot.slane %v2848, 4
    %v2857 = vsel %vm2849, %v2855, %v2522
    %v2859 = vsel %vm95, %v2857, 0
    %2861 = vmatprep.subr.mxu0 0.0
    %2862 = vmatpush1.msra.mxu0 %v465
    %2863 = vmatprep.subr.mxu0 0.0
    %2864 = vmatpush1.msra.mxu0 %v466
    %2865 = vmatprep.subr.mxu0 0.0
    %2866 = vmatpush1.msra.mxu0 %v467
    %2867 = vmatprep.subr.mxu0 0.0
    %2868 = vmatpush1.msra.mxu0 %v468
    %2869 = vmatprep.subr.mxu0 0.0
    %2870 = vmatpush1.msra.mxu0 %v469
    %2871 = vmatprep.subr.mxu0 0.0
    %2872 = vmatpush1.msra.mxu0 %v470
    %2873 = vmatprep.subr.mxu0 0.0
    %2874 = vmatpush1.msra.mxu0 %v471
    %2875 = vmatprep.subr.mxu0 0.0
    %2876 = vmatpush1.msra.mxu0 %v472
    %2877 = vmatprep.subr.mxu0 0.0
    %2878 = vmatpush1.msra.mxu0 %v473
    %2879 = vmatprep.subr.mxu0 0.0
    %2880 = vmatpush1.msra.mxu0 %v474
    %2881 = vmatprep.subr.mxu0 0.0
    %2882 = vmatpush1.msra.mxu0 %v475
    %2883 = vmatprep.subr.mxu0 0.0
    %2884 = vmatpush1.msra.mxu0 %v476
    %2885 = vmatprep.subr.mxu0 0.0
    %2886 = vmatpush1.msra.mxu0 0.0
    %2887 = vmatprep.subr.mxu0 0.0
    %2888 = vmatpush1.msra.mxu0 0.0
    %2889 = vmatprep.subr.mxu0 0.0
    %2890 = vmatpush1.msra.mxu0 0.0
    %2891 = vmatprep.subr.mxu0 0.0
    %2892 = vmatpush1.msra.mxu0 0.0
    %2893 = vmatprep.subr.mxu0 0.0
    %2894 = vmatpush1.msra.mxu0 0.0
    %2895 = vmatprep.subr.mxu0 0.0
    %2896 = vmatpush1.msra.mxu0 0.0
    %2897 = vmatprep.subr.mxu0 0.0
    %2898 = vmatpush1.msra.mxu0 0.0
    %2899 = vmatprep.subr.mxu0 0.0
    %2900 = vmatpush1.msra.mxu0 0.0
    %2901 = vmatprep.subr.mxu0 0.0
    %2902 = vmatpush1.msra.mxu0 0.0
    %2903 = vmatprep.subr.mxu0 0.0
    %2904 = vmatpush1.msra.mxu0 0.0
    %2905 = vmatprep.subr.mxu0 0.0
    %2906 = vmatpush1.msra.mxu0 0.0
    %2907 = vmatprep.subr.mxu0 0.0
    %2908 = vmatpush1.msra.mxu0 0.0
    %2909 = vmatprep.subr.mxu0 0.0
    %2910 = vmatpush1.msra.mxu0 0.0
    %2911 = vmatprep.subr.mxu0 0.0
    %2912 = vmatpush1.msra.mxu0 0.0
    %2913 = vmatprep.subr.mxu0 0.0
    %2914 = vmatpush1.msra.mxu0 0.0
    %2915 = vmatprep.subr.mxu0 0.0
    %2916 = vmatpush1.msra.mxu0 0.0
    %2917 = vmatprep.subr.mxu0 0.0
    %2918 = vmatpush1.msra.mxu0 0.0
    %2919 = vmatprep.subr.mxu0 0.0
    %2920 = vmatpush1.msra.mxu0 0.0
    %2921 = vmatprep.subr.mxu0 0.0
    %2922 = vmatpush1.msra.mxu0 0.0
    %2923 = vmatprep.subr.mxu0 0.0
    %2924 = vmatpush1.msra.mxu0 0.0
    %2925 = vmatprep.mubr.f32.mxu0 0.0
    %2926 = vmatmul.mubr.f32.gmra.mrb[0].mxu0 %v2859
    %v2927 = vpop.f32.mrb[0].mxu0
    %v2928 = vadd.f32 0.0, %v2927
    %v2929 = vpop.f32.mrb[0].mxu0
    %2930 = vdwg.mxu0
    %v2932 = vrot.slane %v2928, 2
    %v2934 = vadd.f32 %v174, %v2932
    %2935 = vmatprep.subr.mxu0 0.0
    %2936 = vmatpush1.msra.mxu0 %v478
    %2937 = vmatprep.subr.mxu0 0.0
    %2938 = vmatpush1.msra.mxu0 %v479
    %2939 = vmatprep.subr.mxu0 0.0
    %2940 = vmatpush1.msra.mxu0 %v480
    %2941 = vmatprep.subr.mxu0 0.0
    %2942 = vmatpush1.msra.mxu0 %v481
    %2943 = vmatprep.subr.mxu0 0.0
    %2944 = vmatpush1.msra.mxu0 %v482
    %2945 = vmatprep.subr.mxu0 0.0
    %2946 = vmatpush1.msra.mxu0 %v483
    %2947 = vmatprep.subr.mxu0 0.0
    %2948 = vmatpush1.msra.mxu0 %v484
    %2949 = vmatprep.subr.mxu0 0.0
    %2950 = vmatpush1.msra.mxu0 %v485
    %2951 = vmatprep.subr.mxu0 0.0
    %2952 = vmatpush1.msra.mxu0 %v486
    %2953 = vmatprep.subr.mxu0 0.0
    %2954 = vmatpush1.msra.mxu0 %v487
    %2955 = vmatprep.subr.mxu0 0.0
    %2956 = vmatpush1.msra.mxu0 %v488
    %2957 = vmatprep.subr.mxu0 0.0
    %2958 = vmatpush1.msra.mxu0 %v489
    %2959 = vmatprep.subr.mxu0 0.0
    %2960 = vmatpush1.msra.mxu0 0.0
    %2961 = vmatprep.subr.mxu0 0.0
    %2962 = vmatpush1.msra.mxu0 0.0
    %2963 = vmatprep.subr.mxu0 0.0
    %2964 = vmatpush1.msra.mxu0 0.0
    %2965 = vmatprep.subr.mxu0 0.0
    %2966 = vmatpush1.msra.mxu0 0.0
    %2967 = vmatprep.subr.mxu0 0.0
    %2968 = vmatpush1.msra.mxu0 0.0
    %2969 = vmatprep.subr.mxu0 0.0
    %2970 = vmatpush1.msra.mxu0 0.0
    %2971 = vmatprep.subr.mxu0 0.0
    %2972 = vmatpush1.msra.mxu0 0.0
    %2973 = vmatprep.subr.mxu0 0.0
    %2974 = vmatpush1.msra.mxu0 0.0
    %2975 = vmatprep.subr.mxu0 0.0
    %2976 = vmatpush1.msra.mxu0 0.0
    %2977 = vmatprep.subr.mxu0 0.0
    %2978 = vmatpush1.msra.mxu0 0.0
    %2979 = vmatprep.subr.mxu0 0.0
    %2980 = vmatpush1.msra.mxu0 0.0
    %2981 = vmatprep.subr.mxu0 0.0
    %2982 = vmatpush1.msra.mxu0 0.0
    %2983 = vmatprep.subr.mxu0 0.0
    %2984 = vmatpush1.msra.mxu0 0.0
    %2985 = vmatprep.subr.mxu0 0.0
    %2986 = vmatpush1.msra.mxu0 0.0
    %2987 = vmatprep.subr.mxu0 0.0
    %2988 = vmatpush1.msra.mxu0 0.0
    %2989 = vmatprep.subr.mxu0 0.0
    %2990 = vmatpush1.msra.mxu0 0.0
    %2991 = vmatprep.subr.mxu0 0.0
    %2992 = vmatpush1.msra.mxu0 0.0
    %2993 = vmatprep.subr.mxu0 0.0
    %2994 = vmatpush1.msra.mxu0 0.0
    %2995 = vmatprep.subr.mxu0 0.0
    %2996 = vmatpush1.msra.mxu0 0.0
    %2997 = vmatprep.subr.mxu0 0.0
    %2998 = vmatpush1.msra.mxu0 0.0
    %2999 = vmatprep.mubr.f32.mxu0 0.0
    %3000 = vmatmul.mubr.f32.gmra.mrb[0].mxu0 %v2859
    %v3001 = vpop.f32.mrb[0].mxu0
    %v3002 = vadd.f32 0.0, %v3001
    %v3003 = vpop.f32.mrb[0].mxu0
    %3004 = vdwg.mxu0
    %v3006 = vrot.slane %v3002, 2
    %v3008 = vadd.f32 %v270, %v3006
    %3009 = vmatprep.subr.mxu0 0.0
    %3010 = vmatpush1.msra.mxu0 %v491
    %3011 = vmatprep.subr.mxu0 0.0
    %3012 = vmatpush1.msra.mxu0 %v492
    %3013 = vmatprep.subr.mxu0 0.0
    %3014 = vmatpush1.msra.mxu0 %v493
    %3015 = vmatprep.subr.mxu0 0.0
    %3016 = vmatpush1.msra.mxu0 %v494
    %3017 = vmatprep.subr.mxu0 0.0
    %3018 = vmatpush1.msra.mxu0 %v495
    %3019 = vmatprep.subr.mxu0 0.0
    %3020 = vmatpush1.msra.mxu0 %v496
    %3021 = vmatprep.subr.mxu0 0.0
    %3022 = vmatpush1.msra.mxu0 %v497
    %3023 = vmatprep.subr.mxu0 0.0
    %3024 = vmatpush1.msra.mxu0 %v498
    %3025 = vmatprep.subr.mxu0 0.0
    %3026 = vmatpush1.msra.mxu0 %v499
    %3027 = vmatprep.subr.mxu0 0.0
    %3028 = vmatpush1.msra.mxu0 %v500
    %3029 = vmatprep.subr.mxu0 0.0
    %3030 = vmatpush1.msra.mxu0 %v501
    %3031 = vmatprep.subr.mxu0 0.0
    %3032 = vmatpush1.msra.mxu0 %v502
    %3033 = vmatprep.subr.mxu0 0.0
    %3034 = vmatpush1.msra.mxu0 0.0
    %3035 = vmatprep.subr.mxu0 0.0
    %3036 = vmatpush1.msra.mxu0 0.0
    %3037 = vmatprep.subr.mxu0 0.0
    %3038 = vmatpush1.msra.mxu0 0.0
    %3039 = vmatprep.subr.mxu0 0.0
    %3040 = vmatpush1.msra.mxu0 0.0
    %3041 = vmatprep.subr.mxu0 0.0
    %3042 = vmatpush1.msra.mxu0 0.0
    %3043 = vmatprep.subr.mxu0 0.0
    %3044 = vmatpush1.msra.mxu0 0.0
    %3045 = vmatprep.subr.mxu0 0.0
    %3046 = vmatpush1.msra.mxu0 0.0
    %3047 = vmatprep.subr.mxu0 0.0
    %3048 = vmatpush1.msra.mxu0 0.0
    %3049 = vmatprep.subr.mxu0 0.0
    %3050 = vmatpush1.msra.mxu0 0.0
    %3051 = vmatprep.subr.mxu0 0.0
    %3052 = vmatpush1.msra.mxu0 0.0
    %3053 = vmatprep.subr.mxu0 0.0
    %3054 = vmatpush1.msra.mxu0 0.0
    %3055 = vmatprep.subr.mxu0 0.0
    %3056 = vmatpush1.msra.mxu0 0.0
    %3057 = vmatprep.subr.mxu0 0.0
    %3058 = vmatpush1.msra.mxu0 0.0
    %3059 = vmatprep.subr.mxu0 0.0
    %3060 = vmatpush1.msra.mxu0 0.0
    %3061 = vmatprep.subr.mxu0 0.0
    %3062 = vmatpush1.msra.mxu0 0.0
    %3063 = vmatprep.subr.mxu0 0.0
    %3064 = vmatpush1.msra.mxu0 0.0
    %3065 = vmatprep.subr.mxu0 0.0
    %3066 = vmatpush1.msra.mxu0 0.0
    %3067 = vmatprep.subr.mxu0 0.0
    %3068 = vmatpush1.msra.mxu0 0.0
    %3069 = vmatprep.subr.mxu0 0.0
    %3070 = vmatpush1.msra.mxu0 0.0
    %3071 = vmatprep.subr.mxu0 0.0
    %3072 = vmatpush1.msra.mxu0 0.0
    %3073 = vmatprep.mubr.f32.mxu0 0.0
    %3074 = vmatmul.mubr.f32.gmra.mrb[0].mxu0 %v2859
    %v3075 = vpop.f32.mrb[0].mxu0
    %v3076 = vadd.f32 0.0, %v3075
    %v3077 = vpop.f32.mrb[0].mxu0
    %3078 = vdwg.mxu0
    %v3080 = vrot.slane %v3076, 2
    %v3082 = vadd.f32 %v366, %v3080
    %3083 = vmatprep.subr.mxu0 0.0
    %3084 = vmatpush1.msra.mxu0 %v504
    %3085 = vmatprep.subr.mxu0 0.0
    %3086 = vmatpush1.msra.mxu0 %v505
    %3087 = vmatprep.subr.mxu0 0.0
    %3088 = vmatpush1.msra.mxu0 %v506
    %3089 = vmatprep.subr.mxu0 0.0
    %3090 = vmatpush1.msra.mxu0 %v507
    %3091 = vmatprep.subr.mxu0 0.0
    %3092 = vmatpush1.msra.mxu0 %v508
    %3093 = vmatprep.subr.mxu0 0.0
    %3094 = vmatpush1.msra.mxu0 %v509
    %3095 = vmatprep.subr.mxu0 0.0
    %3096 = vmatpush1.msra.mxu0 %v510
    %3097 = vmatprep.subr.mxu0 0.0
    %3098 = vmatpush1.msra.mxu0 %v511
    %3099 = vmatprep.subr.mxu0 0.0
    %3100 = vmatpush1.msra.mxu0 %v512
    %3101 = vmatprep.subr.mxu0 0.0
    %3102 = vmatpush1.msra.mxu0 %v513
    %3103 = vmatprep.subr.mxu0 0.0
    %3104 = vmatpush1.msra.mxu0 %v514
    %3105 = vmatprep.subr.mxu0 0.0
    %3106 = vmatpush1.msra.mxu0 %v515
    %3107 = vmatprep.subr.mxu0 0.0
    %3108 = vmatpush1.msra.mxu0 0.0
    %3109 = vmatprep.subr.mxu0 0.0
    %3110 = vmatpush1.msra.mxu0 0.0
    %3111 = vmatprep.subr.mxu0 0.0
    %3112 = vmatpush1.msra.mxu0 0.0
    %3113 = vmatprep.subr.mxu0 0.0
    %3114 = vmatpush1.msra.mxu0 0.0
    %3115 = vmatprep.subr.mxu0 0.0
    %3116 = vmatpush1.msra.mxu0 0.0
    %3117 = vmatprep.subr.mxu0 0.0
    %3118 = vmatpush1.msra.mxu0 0.0
    %3119 = vmatprep.subr.mxu0 0.0
    %3120 = vmatpush1.msra.mxu0 0.0
    %3121 = vmatprep.subr.mxu0 0.0
    %3122 = vmatpush1.msra.mxu0 0.0
    %3123 = vmatprep.subr.mxu0 0.0
    %3124 = vmatpush1.msra.mxu0 0.0
    %3125 = vmatprep.subr.mxu0 0.0
    %3126 = vmatpush1.msra.mxu0 0.0
    %3127 = vmatprep.subr.mxu0 0.0
    %3128 = vmatpush1.msra.mxu0 0.0
    %3129 = vmatprep.subr.mxu0 0.0
    %3130 = vmatpush1.msra.mxu0 0.0
    %3131 = vmatprep.subr.mxu0 0.0
    %3132 = vmatpush1.msra.mxu0 0.0
    %3133 = vmatprep.subr.mxu0 0.0
    %3134 = vmatpush1.msra.mxu0 0.0
    %3135 = vmatprep.subr.mxu0 0.0
    %3136 = vmatpush1.msra.mxu0 0.0
    %3137 = vmatprep.subr.mxu0 0.0
    %3138 = vmatpush1.msra.mxu0 0.0
    %3139 = vmatprep.subr.mxu0 0.0
    %3140 = vmatpush1.msra.mxu0 0.0
    %3141 = vmatprep.subr.mxu0 0.0
    %3142 = vmatpush1.msra.mxu0 0.0
    %3143 = vmatprep.subr.mxu0 0.0
    %3144 = vmatpush1.msra.mxu0 0.0
    %3145 = vmatprep.subr.mxu0 0.0
    %3146 = vmatpush1.msra.mxu0 0.0
    %3147 = vmatprep.mubr.f32.mxu0 0.0
    %3148 = vmatmul.mubr.f32.gmra.mrb[0].mxu0 %v2859
    %v3149 = vpop.f32.mrb[0].mxu0
    %v3150 = vadd.f32 0.0, %v3149
    %v3151 = vpop.f32.mrb[0].mxu0
    %3152 = vdwg.mxu0
    %v3154 = vrot.slane %v3150, 2
    %v3156 = vadd.f32 %v462, %v3154
    %v3157 = vxor.u32 %v2934, 2147483648
    %v3158 = vmul.f32 %v3157, 1.442695
    %v3159 = vpow.pop %v3158
    %v3160 = vadd.f32 %v3159, 1.0
    %v3161 = vrcp.pop %v3160
    %v3162 = vmul.f32 1.0, %v3161
    %v3163 = vxor.u32 %v3008, 2147483648
    %v3164 = vmul.f32 %v3163, 1.442695
    %v3165 = vpow.pop %v3164
    %v3166 = vadd.f32 %v3165, 1.0
    %v3167 = vrcp.pop %v3166
    %v3168 = vmul.f32 1.0, %v3167
    %v3169 = vtanh.pop %v3082
    %v3170 = vxor.u32 %v3156, 2147483648
    %v3171 = vmul.f32 %v3170, 1.442695
    %v3172 = vpow.pop %v3171
    %v3173 = vadd.f32 %v3172, 1.0
    %v3174 = vrcp.pop %v3173
    %v3175 = vmul.f32 1.0, %v3174
    %v3177 = vrot.slane %v2853, 2
    %v3179 = vmul.f32 %v3168, %v3177
    %v3180 = vmul.f32 %v3162, %v3169
    %v3181 = vadd.f32 %v3179, %v3180
    %v3182 = vtanh.pop %v3181
    %v3183 = vmul.f32 %v3175, %v3182
    %vm3184 = vcmp.gt.s32.totalorder %v554, 7
    %v3186 = vrot.slane %v3183, 6
    %v3188 = vsel %vm3184, %v3186, %v2857
    %v3189 = vld [vmem:[%s5] sm:$0xff]
    %v3190 = vld [vmem:[%s5 + $0x8] sm:$0xff]
    %v3191 = vld [vmem:[%s5 + $0x10] sm:$0xff]
    %v3192 = vld [vmem:[%s5 + $0x18] sm:$0xff]
    %v3193 = vld [vmem:[%s5 + $0x20] sm:$0xff]
    %v3194 = vld [vmem:[%s5 + $0x28] sm:$0xff]
    %v3195 = vld [vmem:[%s5 + $0x30] sm:$0xff]
    %v3196 = vld [vmem:[%s5 + $0x38] sm:$0xff]
    %v3197 = vld [vmem:[%s5 + $0x40] sm:$0xff]
    %v3198 = vld [vmem:[%s5 + $0x48] sm:$0xff]
    %v3199 = vld [vmem:[%s5 + $0x50] sm:$0xff]
    %v3200 = vld [vmem:[%s5 + $0x58] sm:$0xff]
    %v3201 = vld [vmem:[%s6] sm:$0x1]
    %v3203 = vlaneseq
    %v3204 = vshrl.u32 %v3203, 7
    %v3205 = vsub.s32 0, %v3204
    %v3206 = vrot.slane %v3201, %v3205
    %v3209 = vsel %vm95, %v3188, 0
    %3211 = vmatprep.subr.mxu0 0.0
    %3212 = vmatpush1.msra.mxu0 %v3189
    %3213 = vmatprep.subr.mxu0 0.0
    %3214 = vmatpush1.msra.mxu0 %v3190
    %3215 = vmatprep.subr.mxu0 0.0
    %3216 = vmatpush1.msra.mxu0 %v3191
    %3217 = vmatprep.subr.mxu0 0.0
    %3218 = vmatpush1.msra.mxu0 %v3192
    %3219 = vmatprep.subr.mxu0 0.0
    %3220 = vmatpush1.msra.mxu0 %v3193
    %3221 = vmatprep.subr.mxu0 0.0
    %3222 = vmatpush1.msra.mxu0 %v3194
    %3223 = vmatprep.subr.mxu0 0.0
    %3224 = vmatpush1.msra.mxu0 %v3195
    %3225 = vmatprep.subr.mxu0 0.0
    %3226 = vmatpush1.msra.mxu0 %v3196
    %3227 = vmatprep.subr.mxu0 0.0
    %3228 = vmatpush1.msra.mxu0 %v3197
    %3229 = vmatprep.subr.mxu0 0.0
    %3230 = vmatpush1.msra.mxu0 %v3198
    %3231 = vmatprep.subr.mxu0 0.0
    %3232 = vmatpush1.msra.mxu0 %v3199
    %3233 = vmatprep.subr.mxu0 0.0
    %3234 = vmatpush1.msra.mxu0 %v3200
    %3235 = vmatprep.subr.mxu0 0.0
    %3236 = vmatpush1.msra.mxu0 0.0
    %3237 = vmatprep.subr.mxu0 0.0
    %3238 = vmatpush1.msra.mxu0 0.0
    %3239 = vmatprep.subr.mxu0 0.0
    %3240 = vmatpush1.msra.mxu0 0.0
    %3241 = vmatprep.subr.mxu0 0.0
    %3242 = vmatpush1.msra.mxu0 0.0
    %3243 = vmatprep.subr.mxu0 0.0
    %3244 = vmatpush1.msra.mxu0 0.0
    %3245 = vmatprep.subr.mxu0 0.0
    %3246 = vmatpush1.msra.mxu0 0.0
    %3247 = vmatprep.subr.mxu0 0.0
    %3248 = vmatpush1.msra.mxu0 0.0
    %3249 = vmatprep.subr.mxu0 0.0
    %3250 = vmatpush1.msra.mxu0 0.0
    %3251 = vmatprep.subr.mxu0 0.0
    %3252 = vmatpush1.msra.mxu0 0.0
    %3253 = vmatprep.subr.mxu0 0.0
    %3254 = vmatpush1.msra.mxu0 0.0
    %3255 = vmatprep.subr.mxu0 0.0
    %3256 = vmatpush1.msra.mxu0 0.0
    %3257 = vmatprep.subr.mxu0 0.0
    %3258 = vmatpush1.msra.mxu0 0.0
    %3259 = vmatprep.subr.mxu0 0.0
    %3260 = vmatpush1.msra.mxu0 0.0
    %3261 = vmatprep.subr.mxu0 0.0
    %3262 = vmatpush1.msra.mxu0 0.0
    %3263 = vmatprep.subr.mxu0 0.0
    %3264 = vmatpush1.msra.mxu0 0.0
    %3265 = vmatprep.subr.mxu0 0.0
    %3266 = vmatpush1.msra.mxu0 0.0
    %3267 = vmatprep.subr.mxu0 0.0
    %3268 = vmatpush1.msra.mxu0 0.0
    %3269 = vmatprep.subr.mxu0 0.0
    %3270 = vmatpush1.msra.mxu0 0.0
    %3271 = vmatprep.subr.mxu0 0.0
    %3272 = vmatpush1.msra.mxu0 0.0
    %3273 = vmatprep.subr.mxu0 0.0
    %3274 = vmatpush1.msra.mxu0 0.0
    %3275 = vmatprep.mubr.f32.mxu0 0.0
    %3276 = vmatmul.mubr.f32.gmra.mrb[0].mxu0 %v3209
    %v3277 = vpop.f32.mrb[0].mxu0
    %v3278 = vadd.f32 %v3206, %v3277
    %v3279 = vpop.f32.mrb[0].mxu0
    %3280 = vdwg.mxu0
    %v3281 = vmax.f32 %v3278, 0.0
    %v3282 = vld [vmem:[%s7] sm:$0xff]
    %v3283 = vld [vmem:[%s7 + $0x8] sm:$0xff]
    %v3284 = vld [vmem:[%s7 + $0x10] sm:$0xff]
    %v3285 = vld [vmem:[%s7 + $0x18] sm:$0xff]
    %v3286 = vld [vmem:[%s8] sm:$0x1]
    %v3288 = vlaneseq
    %v3289 = vshrl.u32 %v3288, 7
    %v3290 = vsub.s32 0, %v3289
    %v3291 = vrot.slane %v3286, %v3290
    %vm3293 = vcmask 261120
    %v3295 = vsel %vm3293, %v3281, 0
    %3297 = vmatprep.subr.mxu0 0.0
    %3298 = vmatpush1.msra.mxu0 %v3282
    %3299 = vmatprep.subr.mxu0 0.0
    %3300 = vmatpush1.msra.mxu0 %v3283
    %3301 = vmatprep.subr.mxu0 0.0
    %3302 = vmatpush1.msra.mxu0 %v3284
    %3303 = vmatprep.subr.mxu0 0.0
    %3304 = vmatpush1.msra.mxu0 %v3285
    %3305 = vmatprep.subr.mxu0 0.0
    %3306 = vmatpush1.msra.mxu0 0.0
    %3307 = vmatprep.subr.mxu0 0.0
    %3308 = vmatpush1.msra.mxu0 0.0
    %3309 = vmatprep.subr.mxu0 0.0
    %3310 = vmatpush1.msra.mxu0 0.0
    %3311 = vmatprep.subr.mxu0 0.0
    %3312 = vmatpush1.msra.mxu0 0.0
    %3313 = vmatprep.subr.mxu0 0.0
    %3314 = vmatpush1.msra.mxu0 0.0
    %3315 = vmatprep.subr.mxu0 0.0
    %3316 = vmatpush1.msra.mxu0 0.0
    %3317 = vmatprep.subr.mxu0 0.0
    %3318 = vmatpush1.msra.mxu0 0.0
    %3319 = vmatprep.subr.mxu0 0.0
    %3320 = vmatpush1.msra.mxu0 0.0
    %3321 = vmatprep.subr.mxu0 0.0
    %3322 = vmatpush1.msra.mxu0 0.0
    %3323 = vmatprep.subr.mxu0 0.0
    %3324 = vmatpush1.msra.mxu0 0.0
    %3325 = vmatprep.subr.mxu0 0.0
    %3326 = vmatpush1.msra.mxu0 0.0
    %3327 = vmatprep.subr.mxu0 0.0
    %3328 = vmatpush1.msra.mxu0 0.0
    %3329 = vmatprep.subr.mxu0 0.0
    %3330 = vmatpush1.msra.mxu0 0.0
    %3331 = vmatprep.subr.mxu0 0.0
    %3332 = vmatpush1.msra.mxu0 0.0
    %3333 = vmatprep.subr.mxu0 0.0
    %3334 = vmatpush1.msra.mxu0 0.0
    %3335 = vmatprep.subr.mxu0 0.0
    %3336 = vmatpush1.msra.mxu0 0.0
    %3337 = vmatprep.subr.mxu0 0.0
    %3338 = vmatpush1.msra.mxu0 0.0
    %3339 = vmatprep.subr.mxu0 0.0
    %3340 = vmatpush1.msra.mxu0 0.0
    %3341 = vmatprep.subr.mxu0 0.0
    %3342 = vmatpush1.msra.mxu0 0.0
    %3343 = vmatprep.subr.mxu0 0.0
    %3344 = vmatpush1.msra.mxu0 0.0
    %3345 = vmatprep.subr.mxu0 0.0
    %3346 = vmatpush1.msra.mxu0 0.0
    %3347 = vmatprep.subr.mxu0 0.0
    %3348 = vmatpush1.msra.mxu0 0.0
    %3349 = vmatprep.subr.mxu0 0.0
    %3350 = vmatpush1.msra.mxu0 0.0
    %3351 = vmatprep.subr.mxu0 0.0
    %3352 = vmatpush1.msra.mxu0 0.0
    %3353 = vmatprep.subr.mxu0 0.0
    %3354 = vmatpush1.msra.mxu0 0.0
    %3355 = vmatprep.subr.mxu0 0.0
    %3356 = vmatpush1.msra.mxu0 0.0
    %3357 = vmatprep.subr.mxu0 0.0
    %3358 = vmatpush1.msra.mxu0 0.0
    %3359 = vmatprep.subr.mxu0 0.0
    %3360 = vmatpush1.msra.mxu0 0.0
    %3361 = vmatprep.mubr.f32.mxu0 0.0
    %3362 = vmatmul.mubr.f32.gmra.mrb[0].mxu0 %v3295
    %v3363 = vpop.f32.mrb[0].mxu0
    %v3364 = vadd.f32 %v3291, %v3363
    %v3365 = vpop.f32.mrb[0].mxu0
    %3366 = vdwg.mxu0
    %vm3367 = vcmask 33792
    %3368 = vst.msk [vmem:[#allocation9] sm:$0x3] %vm3367, %v3364
    // Predicated region
    $region50: #{tpu_custom_call.1} parent=1 // pred_check
      _
    $region51: #{tpu_custom_call.1} parent=1 // pred_check_branch
      %3370 = sbr.rel (0) target = $region53
    $region52: #{tpu_custom_call.1} parent=1 // pred_region
      %s3372 = ssub.s32 32, 32
      %3373 = vsyncadd [#allocation4], %s3372
      %s3375 = sshll.u32 [#allocation9], 4
      %s3376 = int_to_ptr.vmem [resolvable:$true] %s3375
      %3378 = dma.vmem_to_hbm [thread:$0]  %s3376, 32, %s9, [#allocation4]
    $region53: #{tpu_custom_call.1} parent=1 // pred_fallthru
      _
    // Predicated region
    $region54: #{tpu_custom_call.1} parent=1 // pred_check
      _
    $region55: #{tpu_custom_call.1} parent=1 // pred_check_branch
      %3380 = sbr.rel (0) target = $region57
    $region56: #{tpu_custom_call.1} parent=1 // pred_region
      %3381 = dma.done [#allocation4], 32
    $region57: #{tpu_custom_call.1} parent=1 // pred_fallthru
      _
    %3382 = vsyncpa [#allocation3], 1
    %3383 = vsyncpa [#allocation7], 1
    %3384 = vsyncpa [#allocation4], 1
    %3385 = vsyncpa [#allocation5], 1

</llo_original>
